<compile_context>
chip_gen: v7x
topology: tpu7x:2x2x1
jax: 0.10.0
libtpu: 0.0.40
codegen_flags: <defaults>
</compile_context>

<pallas_src>
import functools
import numpy as np
import jax
import jax.numpy as jnp
from jax.experimental import pallas as pl
from jax.experimental.pallas import tpu as pltpu


# ----------------------------------------------------------------------------
# Fused kernel: encoder -> n_prop_layers x (message passing + block-diagonal
#               pair attention + residual update) -> gated aggregation ->
#               asymm_norm hinge score.
# ----------------------------------------------------------------------------
def _fused_match_hinge_kernel(
    nf_ref, ef2_ref, valid_ref,
    gboth_ref, aagg_ref, amask_ref, adiff_ref,
    enw_ref, enb_ref, we_ref, be_ref,
    w1a_ref, w1b_ref, m2w_ref, m2b_ref,
    v1a_ref, v1b_ref, v1c_ref, u1b_ref, u2w_ref, u2b_ref,
    a1wg_ref, a1wv_ref, a1bg_ref, a1bv_ref, a2w_ref,
    out_ref,
    *, n_layers, n_pairs, S, D, E_pad, p, ins_cost, del_cost):
  f32 = jnp.float32
  bf16 = jnp.bfloat16
  NS = 2 * S * n_pairs

  def mm(a, b):
    return jnp.dot(a, b, preferred_element_type=f32)

  def relu(x):
    return jnp.maximum(x, 0.0)

  # hoisted: (NS,1) -> (NS,D) pad-row mask broadcast (reused n_layers+1 times)
  valid_b = jnp.broadcast_to(valid_ref[...], (NS, D))

  # ---- GraphEncoder (node). Edge encoder is folded into (we, be). ----------
  h = (mm(nf_ref[...], enw_ref[...]) + enb_ref[...]) * valid_b        # (NS, D) f32
  # loop-invariant edge contribution for the stacked [fwd ; rev] message rows
  ec2 = mm(ef2_ref[...], we_ref[...]) + be_ref[...]                   # (2E_pad, 2D) f32

  # VMEM-resident structural matrices and weights (bf16 MXU operands)
  gboth = gboth_ref[...]        # (2E_pad, NS)  [gather-from ; gather-to]
  aagg = aagg_ref[...]          # (NS, 2E_pad)  [scatter@to | scatter@from]
  amask = amask_ref[...]        # (n_pairs, 2S, 2S) 0 on partner valid keys
  w1a, w1b = w1a_ref[...], w1b_ref[...]
  m2w, m2b = m2w_ref[...], m2b_ref[...]
  v1a, v1b, v1c = v1a_ref[...], v1b_ref[...], v1c_ref[...]
  u1b = u1b_ref[...]
  u2w, u2b = u2w_ref[...], u2b_ref[...]

  for _ in range(n_layers):     # shared params across prop layers (static unroll)
    hb = h.astype(bf16)

    # -- message passing: 1 gather matmul + XLU roll builds [fwd ; rev] ------
    both = mm(gboth, hb)                                    # (2E_pad, D) [frm ; to]
    rolled = pltpu.roll(both, E_pad, axis=0)                # (2E_pad, D) [to ; frm]
    pre = mm(both.astype(bf16), w1a) + mm(rolled.astype(bf16), w1b) + ec2
    msg = mm(relu(pre).astype(bf16), m2w) + m2b             # shared msg MLP2
    agg = mm(aagg, msg.astype(bf16))                        # segment-sum on MXU

    # -- cross-graph pair attention: block-diagonal per pair (2S x 2S) -------
    h3 = hb.reshape(n_pairs, 2 * S, D)                      # tile-aligned reshape
    logits = jnp.einsum('pqd,pkd->pqk', h3, h3,
                        preferred_element_type=f32) + amask
    logits = logits - jnp.max(logits, axis=-1, keepdims=True)
    ex = jnp.exp(logits)
    inv = pl.reciprocal(jnp.sum(ex, axis=-1, keepdims=True), approx=True)
    att3 = jnp.einsum('pqk,pkd->pqd', (ex * inv).astype(bf16), h3,
                      preferred_element_type=f32)
    att = att3.reshape(NS, D)

    # -- residual node update -------------------------------------------------
    u_pre = (mm(agg.astype(bf16), v1a) + mm((h - att).astype(bf16), v1b)
             + mm(hb, v1c) + u1b)
    u = mm(relu(u_pre).astype(bf16), u2w) + u2b
    h = (h + u) * valid_b                                   # keep pad rows zero

  # ---- gated GraphAggregator + (query - corpus) + asymm_norm hinge score ----
  hb = h.astype(bf16)
  gate = jax.nn.sigmoid(mm(hb, a1wg_ref[...]) + a1bg_ref[...])
  val = mm(hb, a1wv_ref[...]) + a1bv_ref[...]
  gated = gate * val                                        # (NS, G) f32
  # x - y = (aq - ac) @ gated @ a2w ; final-linear bias cancels exactly.
  diff = mm(mm(adiff_ref[...], gated.astype(bf16)).astype(bf16), a2w_ref[...])

  d_del = relu(diff)                                        # query excess
  d_ins = relu(-diff)                                       # corpus excess
  if p == 1:
    n_del = jnp.sum(d_del, axis=-1, keepdims=True)
    n_ins = jnp.sum(d_ins, axis=-1, keepdims=True)
  elif p == 2:
    n_del = jnp.sqrt(jnp.sum(d_del * d_del, axis=-1, keepdims=True))
    n_ins = jnp.sqrt(jnp.sum(d_ins * d_ins, axis=-1, keepdims=True))
  else:
    n_del = jnp.sum(d_del ** p, axis=-1, keepdims=True) ** (1.0 / p)
    n_ins = jnp.sum(d_ins ** p, axis=-1, keepdims=True) ** (1.0 / p)
  score = del_cost * n_del + ins_cost * n_ins               # (P_pad, 1)
  # TODO(synk): edge_ins_cost/edge_del_cost terms of model_utils.asymm_norm
  # are unavailable in the reference config used here; only node costs applied.
  out_ref[...] = jnp.broadcast_to(score, out_ref.shape)     # lane-dense store


# ----------------------------------------------------------------------------
# Parameters (deterministic, synthetic) — same parameterization as before.
# ----------------------------------------------------------------------------
def _init_linear(key, fan_in, fan_out, scale=0.1):
  kw, kb = jax.random.split(key)
  w = scale * jax.random.normal(kw, (fan_in, fan_out), jnp.float32)
  b = scale * jax.random.normal(kb, (1, fan_out), jnp.float32)
  return w, b


def init_params(key, cfg):
  nf, ef = cfg["node_feature_dim"], cfg["edge_feature_dim"]
  D, De = cfg["node_state_dim"], cfg["edge_state_dim"]
  G = cfg["graph_rep_dim"]
  keys = jax.random.split(key, 8)
  p = {}
  p["enc_node"] = _init_linear(keys[0], nf, D)              # GraphEncoder node MLP
  p["enc_edge"] = _init_linear(keys[1], ef, De)             # GraphEncoder edge MLP
  p["msg1"] = _init_linear(keys[2], 2 * D + De, 2 * D)      # message net (shared fwd/rev)
  p["msg2"] = _init_linear(keys[3], 2 * D, 2 * D)
  p["upd1"] = _init_linear(keys[4], 4 * D, 2 * D)           # node-update MLP (residual)
  p["upd2"] = _init_linear(keys[5], 2 * D, D)
  p["agg1"] = _init_linear(keys[6], D, 2 * G)               # gated aggregator MLP1
  p["agg2"] = _init_linear(keys[7], G, G)                   # aggregator final linear
  return p


# ----------------------------------------------------------------------------
# Match_Hinge.forward
# ----------------------------------------------------------------------------
def match_hinge_forward(params, node_features, edge_features, from_idx, to_idx,
                        graph_sizes, cfg):
  D, G, S = cfg["node_state_dim"], cfg["graph_rep_dim"], cfg["max_set_size"]
  n_graphs = len(graph_sizes)
  assert n_graphs % 2 == 0
  n_pairs = n_graphs // 2
  NS = n_graphs * S                             # padded "slab" node rows
  N = int(node_features.shape[0])
  E = int(edge_features.shape[0])
  E_pad = E + ((-E) % 16)                       # bf16 sublane packing (16 rows/vreg)
  P_pad = n_pairs + ((-n_pairs) % 8)

  # ---- static (numpy) structural bookkeeping -> dense one-hot matrices ------
  sizes = np.asarray(graph_sizes, np.int32)
  assert int(sizes.max()) <= S
  offsets = np.concatenate([[0], np.cumsum(sizes)[:-1]]).astype(np.int32)
  graph_idx = np.repeat(np.arange(n_graphs, dtype=np.int32), sizes)     # [N]
  intra = np.arange(N, dtype=np.int32) - offsets[graph_idx]             # [N]
  slab_of = graph_idx * S + intra               # packed node -> slab row

  valid = np.zeros((NS, 1), np.float32)
  for g in range(n_graphs):
    valid[g * S:g * S + sizes[g], 0] = 1.0

  from_np = np.asarray(from_idx, np.int32)
  to_np = np.asarray(to_idx, np.int32)
  slab_from = slab_of[from_np]
  slab_to = slab_of[to_np]

  # stacked gather [from-rows ; to-rows]: one MXU gather per layer
  g_both = np.zeros((2 * E_pad, NS), np.float32)
  g_both[np.arange(E), slab_from] = 1.0
  g_both[E_pad + np.arange(E), slab_to] = 1.0

  # unsorted_segment_sum of [fwd msgs ; rev msgs]: fwd scatter@to, rev scatter@from
  # (pad-edge columns are zero, so bias-driven pad-edge messages never land)
  a_agg = np.zeros((NS, 2 * E_pad), np.float32)
  a_agg[slab_to, np.arange(E)] = 1.0
  a_agg[slab_from, E_pad + np.arange(E)] = 1.0

  # per-pair block-diagonal attention mask + (query - corpus) pooling matrix
  amask3 = np.full((n_pairs, 2 * S, 2 * S), -1e9, np.float32)
  a_diff = np.zeros((P_pad, NS), np.float32)
  for pr in range(n_pairs):
    gq, gc = 2 * pr, 2 * pr + 1                 # interleaved (query, corpus)
    amask3[pr, 0:S, S:S + sizes[gc]] = 0.0      # query rows attend to corpus valid keys
    amask3[pr, S:2 * S, 0:sizes[gq]] = 0.0      # corpus rows attend to query valid keys
    a_diff[pr, gq * S:gq * S + sizes[gq]] = 1.0
    a_diff[pr, gc * S:gc * S + sizes[gc]] = -1.0

  # ---- one-time layout conversion: packed node list -> padded slab ----------
  nf_slab = jnp.zeros((NS, node_features.shape[1]), jnp.float32)
  nf_slab = nf_slab.at[jnp.asarray(slab_of)].set(node_features.astype(jnp.float32))
  # edge features row-stacked twice -> ec2 for [fwd ; rev] in a single matmul
  ef2 = jnp.zeros((2 * E_pad, edge_features.shape[1]), jnp.float32)
  ef2 = ef2.at[:E].set(edge_features.astype(jnp.float32))
  ef2 = ef2.at[E_pad:E_pad + E].set(edge_features.astype(jnp.float32))

  # ---- one-time host-side weight folds / splits -----------------------------
  enw, enb = params["enc_node"]
  eew, eeb = params["enc_edge"]
  m1w, m1b = params["msg1"]
  m2w, m2b = params["msg2"]
  u1w, u1b = params["upd1"]
  u2w, u2b = params["upd2"]
  a1w, a1b = params["agg1"]
  a2w = params["agg2"][0]                       # bias cancels in (x - y)

  w1a, w1b, w1c = m1w[:D], m1w[D:2 * D], m1w[2 * D:]       # msg_in = [from|to|e]
  we = eew @ w1c                                            # fold edge encoder
  be = eeb @ w1c + m1b
  v1a, v1b, v1c = u1w[:2 * D], u1w[2 * D:3 * D], u1w[3 * D:]  # upd_in = [agg|h-att|h]
  a1wg, a1wv = a1w[:, :G], a1w[:, G:]                       # gate / value halves
  a1bg, a1bv = a1b[:, :G], a1b[:, G:]

  bf = lambda x: jnp.asarray(x, jnp.bfloat16)   # MXU operands (one-hots exact)
  fp = lambda x: jnp.asarray(x, jnp.float32)    # biases / masks stay f32

  inputs = [
      bf(nf_slab), bf(ef2), fp(valid),
      bf(g_both), bf(a_agg), fp(amask3), bf(a_diff),
      bf(enw), fp(enb), bf(we), fp(be),
      bf(w1a), bf(w1b), bf(m2w), fp(m2b),
      bf(v1a), bf(v1b), bf(v1c), fp(u1b), bf(u2w), fp(u2b),
      bf(a1wg), bf(a1wv), fp(a1bg), fp(a1bv), bf(a2w),
  ]

  def full_spec(arr):
    shape = arr.shape
    return pl.BlockSpec(shape, lambda i: (0,) * len(shape))

  kernel = functools.partial(
      _fused_match_hinge_kernel,
      n_layers=cfg["n_prop_layers"], n_pairs=n_pairs, S=S, D=D, E_pad=E_pad,
      p=cfg["p"],
      ins_cost=float(cfg["node_ins_cost"]),
      del_cost=float(cfg["node_del_cost"]))

  out = pl.pallas_call(
      kernel,
      out_shape=jax.ShapeDtypeStruct((P_pad, 128), jnp.float32),
      grid=(1,),
      in_specs=[full_spec(a) for a in inputs],
      out_specs=pl.BlockSpec((P_pad, 128), lambda i: (0, 0)),
      compiler_params=pltpu.CompilerParams(
          dimension_semantics=("arbitrary",),
          vmem_limit_bytes=32 * 1024 * 1024),
  )(*inputs)
  return out[:n_pairs, 0]


# ----------------------------------------------------------------------------
if __name__ == "__main__":
  cfg = dict(
      node_feature_dim=8, edge_feature_dim=4,
      node_state_dim=32, edge_state_dim=16, graph_rep_dim=64,
      n_prop_layers=2, max_set_size=8,
      p=2,                          # int(output_mode[-1])
      node_ins_cost=1.0, node_del_cost=1.0,
      edge_ins_cost=0.5, edge_del_cost=0.5,
  )
  key = jax.random.PRNGKey(0)
  kp, kn, ke = jax.random.split(key, 3)
  params = init_params(kp, cfg)

  # batch of 2 graph pairs, interleaved (query, corpus, query, corpus)
  graph_sizes = [5, 7, 6, 8]
  n_nodes = sum(graph_sizes)

  # deterministic ring edges per graph (indices into the packed node array)
  from_list, to_list = [], []
  off = 0
  for n in graph_sizes:
    for i in range(n):
      from_list.append(off + i)
      to_list.append(off + (i + 1) % n)
    off += n
  from_idx = np.asarray(from_list, np.int32)
  to_idx = np.asarray(to_list, np.int32)

  node_features = jax.random.normal(kn, (n_nodes, cfg["node_feature_dim"]),
                                    jnp.float32)
  edge_features = jax.random.normal(ke, (len(from_list), cfg["edge_feature_dim"]),
                                    jnp.float32)

  score = match_hinge_forward(params, node_features, edge_features,
                              from_idx, to_idx, graph_sizes, cfg)
  score = jax.block_until_ready(score)
  assert score.shape == (len(graph_sizes) // 2,)
  assert bool(jnp.all(jnp.isfinite(score)))
  print("KERNEL_OK")
</pallas_src>

<mosaic_0001>
module attributes {stable_mosaic.version = 11 : i64} {
  func.func @_fused_match_hinge_kernel(%arg0: i32, %arg1: memref<32x8xbf16, #tpu.memory_space<vmem>>, %arg2: memref<64x4xbf16, #tpu.memory_space<vmem>>, %arg3: memref<32x1xf32, #tpu.memory_space<vmem>>, %arg4: memref<64x32xbf16, #tpu.memory_space<vmem>>, %arg5: memref<32x64xbf16, #tpu.memory_space<vmem>>, %arg6: memref<2x16x16xf32, #tpu.memory_space<vmem>>, %arg7: memref<8x32xbf16, #tpu.memory_space<vmem>>, %arg8: memref<8x32xbf16, #tpu.memory_space<vmem>>, %arg9: memref<1x32xf32, #tpu.memory_space<vmem>>, %arg10: memref<4x64xbf16, #tpu.memory_space<vmem>>, %arg11: memref<1x64xf32, #tpu.memory_space<vmem>>, %arg12: memref<32x64xbf16, #tpu.memory_space<vmem>>, %arg13: memref<32x64xbf16, #tpu.memory_space<vmem>>, %arg14: memref<64x64xbf16, #tpu.memory_space<vmem>>, %arg15: memref<1x64xf32, #tpu.memory_space<vmem>>, %arg16: memref<64x64xbf16, #tpu.memory_space<vmem>>, %arg17: memref<32x64xbf16, #tpu.memory_space<vmem>>, %arg18: memref<32x64xbf16, #tpu.memory_space<vmem>>, %arg19: memref<1x64xf32, #tpu.memory_space<vmem>>, %arg20: memref<64x32xbf16, #tpu.memory_space<vmem>>, %arg21: memref<1x32xf32, #tpu.memory_space<vmem>>, %arg22: memref<32x64xbf16, #tpu.memory_space<vmem>>, %arg23: memref<32x64xbf16, #tpu.memory_space<vmem>>, %arg24: memref<1x64xf32, #tpu.memory_space<vmem>>, %arg25: memref<1x64xf32, #tpu.memory_space<vmem>>, %arg26: memref<64x64xbf16, #tpu.memory_space<vmem>>, %arg27: memref<8x128xf32, #tpu.memory_space<vmem>>) attributes {dimension_semantics = [#tpu.dimension_semantics<arbitrary>], iteration_bounds = array<i64: 1>, scalar_prefetch = 0 : i64, scratch_operands = 0 : i64, tpu.core_type = #tpu.core_type<tc>, window_params = [{pipeline_mode = #tpu.pipeline_mode<synchronous>, transform_indices = @transform_0, window_bounds = array<i64: 32, 8>}, {pipeline_mode = #tpu.pipeline_mode<synchronous>, transform_indices = @transform_1, window_bounds = array<i64: 64, 4>}, {pipeline_mode = #tpu.pipeline_mode<synchronous>, transform_indices = @transform_2, window_bounds = array<i64: 32, 1>}, {pipeline_mode = #tpu.pipeline_mode<synchronous>, transform_indices = @transform_3, window_bounds = array<i64: 64, 32>}, {pipeline_mode = #tpu.pipeline_mode<synchronous>, transform_indices = @transform_4, window_bounds = array<i64: 32, 64>}, {pipeline_mode = #tpu.pipeline_mode<synchronous>, transform_indices = @transform_5, window_bounds = array<i64: 2, 16, 16>}, {pipeline_mode = #tpu.pipeline_mode<synchronous>, transform_indices = @transform_6, window_bounds = array<i64: 8, 32>}, {pipeline_mode = #tpu.pipeline_mode<synchronous>, transform_indices = @transform_7, window_bounds = array<i64: 8, 32>}, {pipeline_mode = #tpu.pipeline_mode<synchronous>, transform_indices = @transform_8, window_bounds = array<i64: 1, 32>}, {pipeline_mode = #tpu.pipeline_mode<synchronous>, transform_indices = @transform_9, window_bounds = array<i64: 4, 64>}, {pipeline_mode = #tpu.pipeline_mode<synchronous>, transform_indices = @transform_10, window_bounds = array<i64: 1, 64>}, {pipeline_mode = #tpu.pipeline_mode<synchronous>, transform_indices = @transform_11, window_bounds = array<i64: 32, 64>}, {pipeline_mode = #tpu.pipeline_mode<synchronous>, transform_indices = @transform_12, window_bounds = array<i64: 32, 64>}, {pipeline_mode = #tpu.pipeline_mode<synchronous>, transform_indices = @transform_13, window_bounds = array<i64: 64, 64>}, {pipeline_mode = #tpu.pipeline_mode<synchronous>, transform_indices = @transform_14, window_bounds = array<i64: 1, 64>}, {pipeline_mode = #tpu.pipeline_mode<synchronous>, transform_indices = @transform_15, window_bounds = array<i64: 64, 64>}, {pipeline_mode = #tpu.pipeline_mode<synchronous>, transform_indices = @transform_16, window_bounds = array<i64: 32, 64>}, {pipeline_mode = #tpu.pipeline_mode<synchronous>, transform_indices = @transform_17, window_bounds = array<i64: 32, 64>}, {pipeline_mode = #tpu.pipeline_mode<synchronous>, transform_indices = @transform_18, window_bounds = array<i64: 1, 64>}, {pipeline_mode = #tpu.pipeline_mode<synchronous>, transform_indices = @transform_19, window_bounds = array<i64: 64, 32>}, {pipeline_mode = #tpu.pipeline_mode<synchronous>, transform_indices = @transform_20, window_bounds = array<i64: 1, 32>}, {pipeline_mode = #tpu.pipeline_mode<synchronous>, transform_indices = @transform_21, window_bounds = array<i64: 32, 64>}, {pipeline_mode = #tpu.pipeline_mode<synchronous>, transform_indices = @transform_22, window_bounds = array<i64: 32, 64>}, {pipeline_mode = #tpu.pipeline_mode<synchronous>, transform_indices = @transform_23, window_bounds = array<i64: 1, 64>}, {pipeline_mode = #tpu.pipeline_mode<synchronous>, transform_indices = @transform_24, window_bounds = array<i64: 1, 64>}, {pipeline_mode = #tpu.pipeline_mode<synchronous>, transform_indices = @transform_25, window_bounds = array<i64: 64, 64>}, {pipeline_mode = #tpu.pipeline_mode<synchronous>, transform_indices = @transform_26, window_bounds = array<i64: 8, 128>}]} {
    %c0 = arith.constant 0 : index
    %c0_0 = arith.constant 0 : index
    %0 = vector.load %arg3[%c0, %c0_0] : memref<32x1xf32, #tpu.memory_space<vmem>>, vector<32x1xf32>
    %1 = vector.shape_cast %0 : vector<32x1xf32> to vector<32x1xf32>
    %2 = vector.broadcast %1 : vector<32x1xf32> to vector<32x32xf32>
    %c0_1 = arith.constant 0 : index
    %c0_2 = arith.constant 0 : index
    %3 = vector.load %arg1[%c0_1, %c0_2] : memref<32x8xbf16, #tpu.memory_space<vmem>>, vector<32x8xbf16>
    %c0_3 = arith.constant 0 : index
    %c0_4 = arith.constant 0 : index
    %4 = vector.load %arg8[%c0_3, %c0_4] : memref<8x32xbf16, #tpu.memory_space<vmem>>, vector<8x32xbf16>
    %cst = arith.constant dense<0.000000e+00> : vector<32x32xf32>
    %5 = tpu.matmul %3, %4, %cst {dimension_numbers = #tpu.dot_dimension_numbers<[1], [0], [0], [1], [0, 0, 1, 1], [], []>} : vector<32x8xbf16>, vector<8x32xbf16>, vector<32x32xf32> -> vector<32x32xf32>
    %c0_5 = arith.constant 0 : index
    %c0_6 = arith.constant 0 : index
    %6 = vector.load %arg9[%c0_5, %c0_6] : memref<1x32xf32, #tpu.memory_space<vmem>>, vector<1x32xf32>
    %7 = vector.broadcast %6 : vector<1x32xf32> to vector<32x32xf32>
    %8 = arith.addf %5, %7 : vector<32x32xf32>
    %9 = arith.mulf %8, %2 : vector<32x32xf32>
    %c0_7 = arith.constant 0 : index
    %c0_8 = arith.constant 0 : index
    %10 = vector.load %arg2[%c0_7, %c0_8] : memref<64x4xbf16, #tpu.memory_space<vmem>>, vector<64x4xbf16>
    %c0_9 = arith.constant 0 : index
    %c0_10 = arith.constant 0 : index
    %11 = vector.load %arg10[%c0_9, %c0_10] : memref<4x64xbf16, #tpu.memory_space<vmem>>, vector<4x64xbf16>
    %cst_11 = arith.constant dense<0.000000e+00> : vector<64x64xf32>
    %12 = tpu.matmul %10, %11, %cst_11 {dimension_numbers = #tpu.dot_dimension_numbers<[1], [0], [0], [1], [0, 0, 1, 1], [], []>} : vector<64x4xbf16>, vector<4x64xbf16>, vector<64x64xf32> -> vector<64x64xf32>
    %c0_12 = arith.constant 0 : index
    %c0_13 = arith.constant 0 : index
    %13 = vector.load %arg11[%c0_12, %c0_13] : memref<1x64xf32, #tpu.memory_space<vmem>>, vector<1x64xf32>
    %14 = vector.broadcast %13 : vector<1x64xf32> to vector<64x64xf32>
    %15 = arith.addf %12, %14 : vector<64x64xf32>
    %c0_14 = arith.constant 0 : index
    %c0_15 = arith.constant 0 : index
    %16 = vector.load %arg4[%c0_14, %c0_15] : memref<64x32xbf16, #tpu.memory_space<vmem>>, vector<64x32xbf16>
    %c0_16 = arith.constant 0 : index
    %c0_17 = arith.constant 0 : index
    %17 = vector.load %arg5[%c0_16, %c0_17] : memref<32x64xbf16, #tpu.memory_space<vmem>>, vector<32x64xbf16>
    %c0_18 = arith.constant 0 : index
    %c0_19 = arith.constant 0 : index
    %c0_20 = arith.constant 0 : index
    %18 = vector.load %arg6[%c0_18, %c0_19, %c0_20] : memref<2x16x16xf32, #tpu.memory_space<vmem>>, vector<2x16x16xf32>
    %c0_21 = arith.constant 0 : index
    %c0_22 = arith.constant 0 : index
    %19 = vector.load %arg12[%c0_21, %c0_22] : memref<32x64xbf16, #tpu.memory_space<vmem>>, vector<32x64xbf16>
    %c0_23 = arith.constant 0 : index
    %c0_24 = arith.constant 0 : index
    %20 = vector.load %arg13[%c0_23, %c0_24] : memref<32x64xbf16, #tpu.memory_space<vmem>>, vector<32x64xbf16>
    %c0_25 = arith.constant 0 : index
    %c0_26 = arith.constant 0 : index
    %21 = vector.load %arg14[%c0_25, %c0_26] : memref<64x64xbf16, #tpu.memory_space<vmem>>, vector<64x64xbf16>
    %c0_27 = arith.constant 0 : index
    %c0_28 = arith.constant 0 : index
    %22 = vector.load %arg15[%c0_27, %c0_28] : memref<1x64xf32, #tpu.memory_space<vmem>>, vector<1x64xf32>
    %c0_29 = arith.constant 0 : index
    %c0_30 = arith.constant 0 : index
    %23 = vector.load %arg16[%c0_29, %c0_30] : memref<64x64xbf16, #tpu.memory_space<vmem>>, vector<64x64xbf16>
    %c0_31 = arith.constant 0 : index
    %c0_32 = arith.constant 0 : index
    %24 = vector.load %arg17[%c0_31, %c0_32] : memref<32x64xbf16, #tpu.memory_space<vmem>>, vector<32x64xbf16>
    %c0_33 = arith.constant 0 : index
    %c0_34 = arith.constant 0 : index
    %25 = vector.load %arg18[%c0_33, %c0_34] : memref<32x64xbf16, #tpu.memory_space<vmem>>, vector<32x64xbf16>
    %c0_35 = arith.constant 0 : index
    %c0_36 = arith.constant 0 : index
    %26 = vector.load %arg19[%c0_35, %c0_36] : memref<1x64xf32, #tpu.memory_space<vmem>>, vector<1x64xf32>
    %c0_37 = arith.constant 0 : index
    %c0_38 = arith.constant 0 : index
    %27 = vector.load %arg20[%c0_37, %c0_38] : memref<64x32xbf16, #tpu.memory_space<vmem>>, vector<64x32xbf16>
    %c0_39 = arith.constant 0 : index
    %c0_40 = arith.constant 0 : index
    %28 = vector.load %arg21[%c0_39, %c0_40] : memref<1x32xf32, #tpu.memory_space<vmem>>, vector<1x32xf32>
    %29 = arith.truncf %9 : vector<32x32xf32> to vector<32x32xbf16>
    %cst_41 = arith.constant dense<0.000000e+00> : vector<64x32xf32>
    %30 = tpu.matmul %16, %29, %cst_41 {dimension_numbers = #tpu.dot_dimension_numbers<[1], [0], [0], [1], [0, 0, 1, 1], [], []>} : vector<64x32xbf16>, vector<32x32xbf16>, vector<64x32xf32> -> vector<64x32xf32>
    %c32_i32 = arith.constant 32 : i32
    %31 = tpu.dynamic_rotate %30 by %c32_i32 dim 0 : vector<64x32xf32>, i32 -> vector<64x32xf32>
    %32 = arith.truncf %30 : vector<64x32xf32> to vector<64x32xbf16>
    %cst_42 = arith.constant dense<0.000000e+00> : vector<64x64xf32>
    %33 = tpu.matmul %32, %19, %cst_42 {dimension_numbers = #tpu.dot_dimension_numbers<[1], [0], [0], [1], [0, 0, 1, 1], [], []>} : vector<64x32xbf16>, vector<32x64xbf16>, vector<64x64xf32> -> vector<64x64xf32>
    %34 = arith.truncf %31 : vector<64x32xf32> to vector<64x32xbf16>
    %cst_43 = arith.constant dense<0.000000e+00> : vector<64x64xf32>
    %35 = tpu.matmul %34, %20, %cst_43 {dimension_numbers = #tpu.dot_dimension_numbers<[1], [0], [0], [1], [0, 0, 1, 1], [], []>} : vector<64x32xbf16>, vector<32x64xbf16>, vector<64x64xf32> -> vector<64x64xf32>
    %36 = arith.addf %33, %35 : vector<64x64xf32>
    %37 = arith.addf %36, %15 : vector<64x64xf32>
    %cst_44 = arith.constant 0.000000e+00 : f32
    %38 = vector.broadcast %cst_44 : f32 to vector<64x64xf32>
    %39 = arith.maximumf %37, %38 : vector<64x64xf32>
    %40 = arith.truncf %39 : vector<64x64xf32> to vector<64x64xbf16>
    %cst_45 = arith.constant dense<0.000000e+00> : vector<64x64xf32>
    %41 = tpu.matmul %40, %21, %cst_45 {dimension_numbers = #tpu.dot_dimension_numbers<[1], [0], [0], [1], [0, 0, 1, 1], [], []>} : vector<64x64xbf16>, vector<64x64xbf16>, vector<64x64xf32> -> vector<64x64xf32>
    %42 = vector.broadcast %22 : vector<1x64xf32> to vector<64x64xf32>
    %43 = arith.addf %41, %42 : vector<64x64xf32>
    %44 = arith.truncf %43 : vector<64x64xf32> to vector<64x64xbf16>
    %cst_46 = arith.constant dense<0.000000e+00> : vector<32x64xf32>
    %45 = tpu.matmul %17, %44, %cst_46 {dimension_numbers = #tpu.dot_dimension_numbers<[1], [0], [0], [1], [0, 0, 1, 1], [], []>} : vector<32x64xbf16>, vector<64x64xbf16>, vector<32x64xf32> -> vector<32x64xf32>
    %46 = vector.shape_cast %29 : vector<32x32xbf16> to vector<2x16x32xbf16>
    "tpu.trace_start"() <{level = 10 : i32, message = "pqd,pkd->pqk"}> : () -> ()
    %cst_47 = arith.constant dense<0.000000e+00> : vector<2x16x16xf32>
    %47 = tpu.matmul %46, %46, %cst_47 {dimension_numbers = #tpu.dot_dimension_numbers<[2], [2], [1], [1], [0, 0, 0, 1, 1, 1], [0], [0]>} : vector<2x16x32xbf16>, vector<2x16x32xbf16>, vector<2x16x16xf32> -> vector<2x16x16xf32>
    "tpu.trace_stop"() : () -> ()
    %48 = arith.addf %47, %18 : vector<2x16x16xf32>
    %cst_48 = arith.constant dense<0xFF800000> : vector<2x16xf32>
    %49 = vector.multi_reduction <maximumf>, %48, %cst_48 [2] : vector<2x16x16xf32> to vector<2x16xf32>
    %50 = vector.shape_cast %49 : vector<2x16xf32> to vector<2x16x1xf32>
    %51 = vector.broadcast %50 : vector<2x16x1xf32> to vector<2x16x16xf32>
    %52 = arith.subf %48, %51 : vector<2x16x16xf32>
    %53 = math.exp %52 : vector<2x16x16xf32>
    %cst_49 = arith.constant dense<0.000000e+00> : vector<2x16xf32>
    %54 = vector.multi_reduction <add>, %53, %cst_49 [2] : vector<2x16x16xf32> to vector<2x16xf32>
    %55 = vector.shape_cast %54 : vector<2x16xf32> to vector<2x16x1xf32>
    %56 = tpu.reciprocal %55 {approx = true} : vector<2x16x1xf32> -> vector<2x16x1xf32>
    %57 = vector.broadcast %56 : vector<2x16x1xf32> to vector<2x16x16xf32>
    %58 = arith.mulf %53, %57 : vector<2x16x16xf32>
    %59 = arith.truncf %58 : vector<2x16x16xf32> to vector<2x16x16xbf16>
    "tpu.trace_start"() <{level = 10 : i32, message = "pqk,pkd->pqd"}> : () -> ()
    %cst_50 = arith.constant dense<0.000000e+00> : vector<2x16x32xf32>
    %60 = tpu.matmul %59, %46, %cst_50 {dimension_numbers = #tpu.dot_dimension_numbers<[2], [1], [1], [2], [0, 0, 0, 1, 1, 2], [0], [0]>} : vector<2x16x16xbf16>, vector<2x16x32xbf16>, vector<2x16x32xf32> -> vector<2x16x32xf32>
    "tpu.trace_stop"() : () -> ()
    %61 = vector.shape_cast %60 : vector<2x16x32xf32> to vector<32x32xf32>
    %62 = arith.truncf %45 : vector<32x64xf32> to vector<32x64xbf16>
    %cst_51 = arith.constant dense<0.000000e+00> : vector<32x64xf32>
    %63 = tpu.matmul %62, %23, %cst_51 {dimension_numbers = #tpu.dot_dimension_numbers<[1], [0], [0], [1], [0, 0, 1, 1], [], []>} : vector<32x64xbf16>, vector<64x64xbf16>, vector<32x64xf32> -> vector<32x64xf32>
    %64 = arith.subf %9, %61 : vector<32x32xf32>
    %65 = arith.truncf %64 : vector<32x32xf32> to vector<32x32xbf16>
    %cst_52 = arith.constant dense<0.000000e+00> : vector<32x64xf32>
    %66 = tpu.matmul %65, %24, %cst_52 {dimension_numbers = #tpu.dot_dimension_numbers<[1], [0], [0], [1], [0, 0, 1, 1], [], []>} : vector<32x32xbf16>, vector<32x64xbf16>, vector<32x64xf32> -> vector<32x64xf32>
    %67 = arith.addf %63, %66 : vector<32x64xf32>
    %cst_53 = arith.constant dense<0.000000e+00> : vector<32x64xf32>
    %68 = tpu.matmul %29, %25, %cst_53 {dimension_numbers = #tpu.dot_dimension_numbers<[1], [0], [0], [1], [0, 0, 1, 1], [], []>} : vector<32x32xbf16>, vector<32x64xbf16>, vector<32x64xf32> -> vector<32x64xf32>
    %69 = arith.addf %67, %68 : vector<32x64xf32>
    %70 = vector.broadcast %26 : vector<1x64xf32> to vector<32x64xf32>
    %71 = arith.addf %69, %70 : vector<32x64xf32>
    %cst_54 = arith.constant 0.000000e+00 : f32
    %72 = vector.broadcast %cst_54 : f32 to vector<32x64xf32>
    %73 = arith.maximumf %71, %72 : vector<32x64xf32>
    %74 = arith.truncf %73 : vector<32x64xf32> to vector<32x64xbf16>
    %cst_55 = arith.constant dense<0.000000e+00> : vector<32x32xf32>
    %75 = tpu.matmul %74, %27, %cst_55 {dimension_numbers = #tpu.dot_dimension_numbers<[1], [0], [0], [1], [0, 0, 1, 1], [], []>} : vector<32x64xbf16>, vector<64x32xbf16>, vector<32x32xf32> -> vector<32x32xf32>
    %76 = vector.broadcast %28 : vector<1x32xf32> to vector<32x32xf32>
    %77 = arith.addf %75, %76 : vector<32x32xf32>
    %78 = arith.addf %9, %77 : vector<32x32xf32>
    %79 = arith.mulf %78, %2 : vector<32x32xf32>
    %80 = arith.truncf %79 : vector<32x32xf32> to vector<32x32xbf16>
    %cst_56 = arith.constant dense<0.000000e+00> : vector<64x32xf32>
    %81 = tpu.matmul %16, %80, %cst_56 {dimension_numbers = #tpu.dot_dimension_numbers<[1], [0], [0], [1], [0, 0, 1, 1], [], []>} : vector<64x32xbf16>, vector<32x32xbf16>, vector<64x32xf32> -> vector<64x32xf32>
    %c32_i32_57 = arith.constant 32 : i32
    %82 = tpu.dynamic_rotate %81 by %c32_i32_57 dim 0 : vector<64x32xf32>, i32 -> vector<64x32xf32>
    %83 = arith.truncf %81 : vector<64x32xf32> to vector<64x32xbf16>
    %cst_58 = arith.constant dense<0.000000e+00> : vector<64x64xf32>
    %84 = tpu.matmul %83, %19, %cst_58 {dimension_numbers = #tpu.dot_dimension_numbers<[1], [0], [0], [1], [0, 0, 1, 1], [], []>} : vector<64x32xbf16>, vector<32x64xbf16>, vector<64x64xf32> -> vector<64x64xf32>
    %85 = arith.truncf %82 : vector<64x32xf32> to vector<64x32xbf16>
    %cst_59 = arith.constant dense<0.000000e+00> : vector<64x64xf32>
    %86 = tpu.matmul %85, %20, %cst_59 {dimension_numbers = #tpu.dot_dimension_numbers<[1], [0], [0], [1], [0, 0, 1, 1], [], []>} : vector<64x32xbf16>, vector<32x64xbf16>, vector<64x64xf32> -> vector<64x64xf32>
    %87 = arith.addf %84, %86 : vector<64x64xf32>
    %88 = arith.addf %87, %15 : vector<64x64xf32>
    %cst_60 = arith.constant 0.000000e+00 : f32
    %89 = vector.broadcast %cst_60 : f32 to vector<64x64xf32>
    %90 = arith.maximumf %88, %89 : vector<64x64xf32>
    %91 = arith.truncf %90 : vector<64x64xf32> to vector<64x64xbf16>
    %cst_61 = arith.constant dense<0.000000e+00> : vector<64x64xf32>
    %92 = tpu.matmul %91, %21, %cst_61 {dimension_numbers = #tpu.dot_dimension_numbers<[1], [0], [0], [1], [0, 0, 1, 1], [], []>} : vector<64x64xbf16>, vector<64x64xbf16>, vector<64x64xf32> -> vector<64x64xf32>
    %93 = vector.broadcast %22 : vector<1x64xf32> to vector<64x64xf32>
    %94 = arith.addf %92, %93 : vector<64x64xf32>
    %95 = arith.truncf %94 : vector<64x64xf32> to vector<64x64xbf16>
    %cst_62 = arith.constant dense<0.000000e+00> : vector<32x64xf32>
    %96 = tpu.matmul %17, %95, %cst_62 {dimension_numbers = #tpu.dot_dimension_numbers<[1], [0], [0], [1], [0, 0, 1, 1], [], []>} : vector<32x64xbf16>, vector<64x64xbf16>, vector<32x64xf32> -> vector<32x64xf32>
    %97 = vector.shape_cast %80 : vector<32x32xbf16> to vector<2x16x32xbf16>
    "tpu.trace_start"() <{level = 10 : i32, message = "pqd,pkd->pqk"}> : () -> ()
    %cst_63 = arith.constant dense<0.000000e+00> : vector<2x16x16xf32>
    %98 = tpu.matmul %97, %97, %cst_63 {dimension_numbers = #tpu.dot_dimension_numbers<[2], [2], [1], [1], [0, 0, 0, 1, 1, 1], [0], [0]>} : vector<2x16x32xbf16>, vector<2x16x32xbf16>, vector<2x16x16xf32> -> vector<2x16x16xf32>
    "tpu.trace_stop"() : () -> ()
    %99 = arith.addf %98, %18 : vector<2x16x16xf32>
    %cst_64 = arith.constant dense<0xFF800000> : vector<2x16xf32>
    %100 = vector.multi_reduction <maximumf>, %99, %cst_64 [2] : vector<2x16x16xf32> to vector<2x16xf32>
    %101 = vector.shape_cast %100 : vector<2x16xf32> to vector<2x16x1xf32>
    %102 = vector.broadcast %101 : vector<2x16x1xf32> to vector<2x16x16xf32>
    %103 = arith.subf %99, %102 : vector<2x16x16xf32>
    %104 = math.exp %103 : vector<2x16x16xf32>
    %cst_65 = arith.constant dense<0.000000e+00> : vector<2x16xf32>
    %105 = vector.multi_reduction <add>, %104, %cst_65 [2] : vector<2x16x16xf32> to vector<2x16xf32>
    %106 = vector.shape_cast %105 : vector<2x16xf32> to vector<2x16x1xf32>
    %107 = tpu.reciprocal %106 {approx = true} : vector<2x16x1xf32> -> vector<2x16x1xf32>
    %108 = vector.broadcast %107 : vector<2x16x1xf32> to vector<2x16x16xf32>
    %109 = arith.mulf %104, %108 : vector<2x16x16xf32>
    %110 = arith.truncf %109 : vector<2x16x16xf32> to vector<2x16x16xbf16>
    "tpu.trace_start"() <{level = 10 : i32, message = "pqk,pkd->pqd"}> : () -> ()
    %cst_66 = arith.constant dense<0.000000e+00> : vector<2x16x32xf32>
    %111 = tpu.matmul %110, %97, %cst_66 {dimension_numbers = #tpu.dot_dimension_numbers<[2], [1], [1], [2], [0, 0, 0, 1, 1, 2], [0], [0]>} : vector<2x16x16xbf16>, vector<2x16x32xbf16>, vector<2x16x32xf32> -> vector<2x16x32xf32>
    "tpu.trace_stop"() : () -> ()
    %112 = vector.shape_cast %111 : vector<2x16x32xf32> to vector<32x32xf32>
    %113 = arith.truncf %96 : vector<32x64xf32> to vector<32x64xbf16>
    %cst_67 = arith.constant dense<0.000000e+00> : vector<32x64xf32>
    %114 = tpu.matmul %113, %23, %cst_67 {dimension_numbers = #tpu.dot_dimension_numbers<[1], [0], [0], [1], [0, 0, 1, 1], [], []>} : vector<32x64xbf16>, vector<64x64xbf16>, vector<32x64xf32> -> vector<32x64xf32>
    %115 = arith.subf %79, %112 : vector<32x32xf32>
    %116 = arith.truncf %115 : vector<32x32xf32> to vector<32x32xbf16>
    %cst_68 = arith.constant dense<0.000000e+00> : vector<32x64xf32>
    %117 = tpu.matmul %116, %24, %cst_68 {dimension_numbers = #tpu.dot_dimension_numbers<[1], [0], [0], [1], [0, 0, 1, 1], [], []>} : vector<32x32xbf16>, vector<32x64xbf16>, vector<32x64xf32> -> vector<32x64xf32>
    %118 = arith.addf %114, %117 : vector<32x64xf32>
    %cst_69 = arith.constant dense<0.000000e+00> : vector<32x64xf32>
    %119 = tpu.matmul %80, %25, %cst_69 {dimension_numbers = #tpu.dot_dimension_numbers<[1], [0], [0], [1], [0, 0, 1, 1], [], []>} : vector<32x32xbf16>, vector<32x64xbf16>, vector<32x64xf32> -> vector<32x64xf32>
    %120 = arith.addf %118, %119 : vector<32x64xf32>
    %121 = vector.broadcast %26 : vector<1x64xf32> to vector<32x64xf32>
    %122 = arith.addf %120, %121 : vector<32x64xf32>
    %cst_70 = arith.constant 0.000000e+00 : f32
    %123 = vector.broadcast %cst_70 : f32 to vector<32x64xf32>
    %124 = arith.maximumf %122, %123 : vector<32x64xf32>
    %125 = arith.truncf %124 : vector<32x64xf32> to vector<32x64xbf16>
    %cst_71 = arith.constant dense<0.000000e+00> : vector<32x32xf32>
    %126 = tpu.matmul %125, %27, %cst_71 {dimension_numbers = #tpu.dot_dimension_numbers<[1], [0], [0], [1], [0, 0, 1, 1], [], []>} : vector<32x64xbf16>, vector<64x32xbf16>, vector<32x32xf32> -> vector<32x32xf32>
    %127 = vector.broadcast %28 : vector<1x32xf32> to vector<32x32xf32>
    %128 = arith.addf %126, %127 : vector<32x32xf32>
    %129 = arith.addf %79, %128 : vector<32x32xf32>
    %130 = arith.mulf %129, %2 : vector<32x32xf32>
    %131 = arith.truncf %130 : vector<32x32xf32> to vector<32x32xbf16>
    %c0_72 = arith.constant 0 : index
    %c0_73 = arith.constant 0 : index
    %132 = vector.load %arg22[%c0_72, %c0_73] : memref<32x64xbf16, #tpu.memory_space<vmem>>, vector<32x64xbf16>
    %cst_74 = arith.constant dense<0.000000e+00> : vector<32x64xf32>
    %133 = tpu.matmul %131, %132, %cst_74 {dimension_numbers = #tpu.dot_dimension_numbers<[1], [0], [0], [1], [0, 0, 1, 1], [], []>} : vector<32x32xbf16>, vector<32x64xbf16>, vector<32x64xf32> -> vector<32x64xf32>
    %c0_75 = arith.constant 0 : index
    %c0_76 = arith.constant 0 : index
    %134 = vector.load %arg24[%c0_75, %c0_76] : memref<1x64xf32, #tpu.memory_space<vmem>>, vector<1x64xf32>
    %135 = vector.broadcast %134 : vector<1x64xf32> to vector<32x64xf32>
    %136 = arith.addf %133, %135 : vector<32x64xf32>
    %137 = arith.negf %136 : vector<32x64xf32>
    %138 = math.exp %137 : vector<32x64xf32>
    %cst_77 = arith.constant 1.000000e+00 : f32
    %139 = vector.broadcast %cst_77 : f32 to vector<32x64xf32>
    %140 = arith.addf %139, %138 : vector<32x64xf32>
    %141 = arith.divf %139, %140 : vector<32x64xf32>
    %c0_78 = arith.constant 0 : index
    %c0_79 = arith.constant 0 : index
    %142 = vector.load %arg23[%c0_78, %c0_79] : memref<32x64xbf16, #tpu.memory_space<vmem>>, vector<32x64xbf16>
    %cst_80 = arith.constant dense<0.000000e+00> : vector<32x64xf32>
    %143 = tpu.matmul %131, %142, %cst_80 {dimension_numbers = #tpu.dot_dimension_numbers<[1], [0], [0], [1], [0, 0, 1, 1], [], []>} : vector<32x32xbf16>, vector<32x64xbf16>, vector<32x64xf32> -> vector<32x64xf32>
    %c0_81 = arith.constant 0 : index
    %c0_82 = arith.constant 0 : index
    %144 = vector.load %arg25[%c0_81, %c0_82] : memref<1x64xf32, #tpu.memory_space<vmem>>, vector<1x64xf32>
    %145 = vector.broadcast %144 : vector<1x64xf32> to vector<32x64xf32>
    %146 = arith.addf %143, %145 : vector<32x64xf32>
    %147 = arith.mulf %141, %146 : vector<32x64xf32>
    %c0_83 = arith.constant 0 : index
    %c0_84 = arith.constant 0 : index
    %148 = vector.load %arg7[%c0_83, %c0_84] : memref<8x32xbf16, #tpu.memory_space<vmem>>, vector<8x32xbf16>
    %149 = arith.truncf %147 : vector<32x64xf32> to vector<32x64xbf16>
    %cst_85 = arith.constant dense<0.000000e+00> : vector<8x64xf32>
    %150 = tpu.matmul %148, %149, %cst_85 {dimension_numbers = #tpu.dot_dimension_numbers<[1], [0], [0], [1], [0, 0, 1, 1], [], []>} : vector<8x32xbf16>, vector<32x64xbf16>, vector<8x64xf32> -> vector<8x64xf32>
    %151 = arith.truncf %150 : vector<8x64xf32> to vector<8x64xbf16>
    %c0_86 = arith.constant 0 : index
    %c0_87 = arith.constant 0 : index
    %152 = vector.load %arg26[%c0_86, %c0_87] : memref<64x64xbf16, #tpu.memory_space<vmem>>, vector<64x64xbf16>
    %cst_88 = arith.constant dense<0.000000e+00> : vector<8x64xf32>
    %153 = tpu.matmul %151, %152, %cst_88 {dimension_numbers = #tpu.dot_dimension_numbers<[1], [0], [0], [1], [0, 0, 1, 1], [], []>} : vector<8x64xbf16>, vector<64x64xbf16>, vector<8x64xf32> -> vector<8x64xf32>
    %cst_89 = arith.constant 0.000000e+00 : f32
    %154 = vector.broadcast %cst_89 : f32 to vector<8x64xf32>
    %155 = arith.maximumf %153, %154 : vector<8x64xf32>
    %cst_90 = arith.constant 0.000000e+00 : f32
    %156 = vector.broadcast %cst_90 : f32 to vector<8x64xf32>
    %157 = arith.subf %156, %153 : vector<8x64xf32>
    %cst_91 = arith.constant 0.000000e+00 : f32
    %158 = vector.broadcast %cst_91 : f32 to vector<8x64xf32>
    %159 = arith.maximumf %157, %158 : vector<8x64xf32>
    %160 = arith.mulf %155, %155 : vector<8x64xf32>
    %cst_92 = arith.constant dense<0.000000e+00> : vector<8xf32>
    %161 = vector.multi_reduction <add>, %160, %cst_92 [1] : vector<8x64xf32> to vector<8xf32>
    %162 = vector.shape_cast %161 : vector<8xf32> to vector<8x1xf32>
    %163 = math.sqrt %162 : vector<8x1xf32>
    %164 = arith.mulf %159, %159 : vector<8x64xf32>
    %cst_93 = arith.constant dense<0.000000e+00> : vector<8xf32>
    %165 = vector.multi_reduction <add>, %164, %cst_93 [1] : vector<8x64xf32> to vector<8xf32>
    %166 = vector.shape_cast %165 : vector<8xf32> to vector<8x1xf32>
    %167 = math.sqrt %166 : vector<8x1xf32>
    %cst_94 = arith.constant 1.000000e+00 : f32
    %168 = vector.broadcast %cst_94 : f32 to vector<8x1xf32>
    %169 = arith.mulf %168, %163 : vector<8x1xf32>
    %cst_95 = arith.constant 1.000000e+00 : f32
    %170 = vector.broadcast %cst_95 : f32 to vector<8x1xf32>
    %171 = arith.mulf %170, %167 : vector<8x1xf32>
    %172 = arith.addf %169, %171 : vector<8x1xf32>
    %173 = vector.shape_cast %172 : vector<8x1xf32> to vector<8x1xf32>
    %174 = vector.broadcast %173 : vector<8x1xf32> to vector<8x128xf32>
    %c0_96 = arith.constant 0 : index
    %c0_97 = arith.constant 0 : index
    %175 = vector.load %arg27[%c0_96, %c0_97] : memref<8x128xf32, #tpu.memory_space<vmem>>, vector<8x128xf32>
    tpu.vector_store %arg27[%c0_96, %c0_97], %174 {strides = array<i32>} : memref<8x128xf32, #tpu.memory_space<vmem>>, vector<8x128xf32>,
    return
  }
  func.func @transform_0(%arg0: i32) -> (i32, i32) {
    %c0_i32 = arith.constant 0 : i32
    %c0_i32_0 = arith.constant 0 : i32
    %c0_i32_1 = arith.constant 0 : i32
    return %c0_i32, %c0_i32_0 : i32, i32
  }
  func.func @transform_1(%arg0: i32) -> (i32, i32) {
    %c0_i32 = arith.constant 0 : i32
    %c0_i32_0 = arith.constant 0 : i32
    %c0_i32_1 = arith.constant 0 : i32
    return %c0_i32, %c0_i32_0 : i32, i32
  }
  func.func @transform_2(%arg0: i32) -> (i32, i32) {
    %c0_i32 = arith.constant 0 : i32
    %c0_i32_0 = arith.constant 0 : i32
    %c0_i32_1 = arith.constant 0 : i32
    return %c0_i32, %c0_i32_0 : i32, i32
  }
  func.func @transform_3(%arg0: i32) -> (i32, i32) {
    %c0_i32 = arith.constant 0 : i32
    %c0_i32_0 = arith.constant 0 : i32
    %c0_i32_1 = arith.constant 0 : i32
    return %c0_i32, %c0_i32_0 : i32, i32
  }
  func.func @transform_4(%arg0: i32) -> (i32, i32) {
    %c0_i32 = arith.constant 0 : i32
    %c0_i32_0 = arith.constant 0 : i32
    %c0_i32_1 = arith.constant 0 : i32
    return %c0_i32, %c0_i32_0 : i32, i32
  }
  func.func @transform_5(%arg0: i32) -> (i32, i32, i32) {
    %c0_i32 = arith.constant 0 : i32
    %c0_i32_0 = arith.constant 0 : i32
    %c0_i32_1 = arith.constant 0 : i32
    %c0_i32_2 = arith.constant 0 : i32
    return %c0_i32, %c0_i32_0, %c0_i32_1 : i32, i32, i32
  }
  func.func @transform_6(%arg0: i32) -> (i32, i32) {
    %c0_i32 = arith.constant 0 : i32
    %c0_i32_0 = arith.constant 0 : i32
    %c0_i32_1 = arith.constant 0 : i32
    return %c0_i32, %c0_i32_0 : i32, i32
  }
  func.func @transform_7(%arg0: i32) -> (i32, i32) {
    %c0_i32 = arith.constant 0 : i32
    %c0_i32_0 = arith.constant 0 : i32
    %c0_i32_1 = arith.constant 0 : i32
    return %c0_i32, %c0_i32_0 : i32, i32
  }
  func.func @transform_8(%arg0: i32) -> (i32, i32) {
    %c0_i32 = arith.constant 0 : i32
    %c0_i32_0 = arith.constant 0 : i32
    %c0_i32_1 = arith.constant 0 : i32
    return %c0_i32, %c0_i32_0 : i32, i32
  }
  func.func @transform_9(%arg0: i32) -> (i32, i32) {
    %c0_i32 = arith.constant 0 : i32
    %c0_i32_0 = arith.constant 0 : i32
    %c0_i32_1 = arith.constant 0 : i32
    return %c0_i32, %c0_i32_0 : i32, i32
  }
  func.func @transform_10(%arg0: i32) -> (i32, i32) {
    %c0_i32 = arith.constant 0 : i32
    %c0_i32_0 = arith.constant 0 : i32
    %c0_i32_1 = arith.constant 0 : i32
    return %c0_i32, %c0_i32_0 : i32, i32
  }
  func.func @transform_11(%arg0: i32) -> (i32, i32) {
    %c0_i32 = arith.constant 0 : i32
    %c0_i32_0 = arith.constant 0 : i32
    %c0_i32_1 = arith.constant 0 : i32
    return %c0_i32, %c0_i32_0 : i32, i32
  }
  func.func @transform_12(%arg0: i32) -> (i32, i32) {
    %c0_i32 = arith.constant 0 : i32
    %c0_i32_0 = arith.constant 0 : i32
    %c0_i32_1 = arith.constant 0 : i32
    return %c0_i32, %c0_i32_0 : i32, i32
  }
  func.func @transform_13(%arg0: i32) -> (i32, i32) {
    %c0_i32 = arith.constant 0 : i32
    %c0_i32_0 = arith.constant 0 : i32
    %c0_i32_1 = arith.constant 0 : i32
    return %c0_i32, %c0_i32_0 : i32, i32
  }
  func.func @transform_14(%arg0: i32) -> (i32, i32) {
    %c0_i32 = arith.constant 0 : i32
    %c0_i32_0 = arith.constant 0 : i32
    %c0_i32_1 = arith.constant 0 : i32
    return %c0_i32, %c0_i32_0 : i32, i32
  }
  func.func @transform_15(%arg0: i32) -> (i32, i32) {
    %c0_i32 = arith.constant 0 : i32
    %c0_i32_0 = arith.constant 0 : i32
    %c0_i32_1 = arith.constant 0 : i32
    return %c0_i32, %c0_i32_0 : i32, i32
  }
  func.func @transform_16(%arg0: i32) -> (i32, i32) {
    %c0_i32 = arith.constant 0 : i32
    %c0_i32_0 = arith.constant 0 : i32
    %c0_i32_1 = arith.constant 0 : i32
    return %c0_i32, %c0_i32_0 : i32, i32
  }
  func.func @transform_17(%arg0: i32) -> (i32, i32) {
    %c0_i32 = arith.constant 0 : i32
    %c0_i32_0 = arith.constant 0 : i32
    %c0_i32_1 = arith.constant 0 : i32
    return %c0_i32, %c0_i32_0 : i32, i32
  }
  func.func @transform_18(%arg0: i32) -> (i32, i32) {
    %c0_i32 = arith.constant 0 : i32
    %c0_i32_0 = arith.constant 0 : i32
    %c0_i32_1 = arith.constant 0 : i32
    return %c0_i32, %c0_i32_0 : i32, i32
  }
  func.func @transform_19(%arg0: i32) -> (i32, i32) {
    %c0_i32 = arith.constant 0 : i32
    %c0_i32_0 = arith.constant 0 : i32
    %c0_i32_1 = arith.constant 0 : i32
    return %c0_i32, %c0_i32_0 : i32, i32
  }
  func.func @transform_20(%arg0: i32) -> (i32, i32) {
    %c0_i32 = arith.constant 0 : i32
    %c0_i32_0 = arith.constant 0 : i32
    %c0_i32_1 = arith.constant 0 : i32
    return %c0_i32, %c0_i32_0 : i32, i32
  }
  func.func @transform_21(%arg0: i32) -> (i32, i32) {
    %c0_i32 = arith.constant 0 : i32
    %c0_i32_0 = arith.constant 0 : i32
    %c0_i32_1 = arith.constant 0 : i32
    return %c0_i32, %c0_i32_0 : i32, i32
  }
  func.func @transform_22(%arg0: i32) -> (i32, i32) {
    %c0_i32 = arith.constant 0 : i32
    %c0_i32_0 = arith.constant 0 : i32
    %c0_i32_1 = arith.constant 0 : i32
    return %c0_i32, %c0_i32_0 : i32, i32
  }
  func.func @transform_23(%arg0: i32) -> (i32, i32) {
    %c0_i32 = arith.constant 0 : i32
    %c0_i32_0 = arith.constant 0 : i32
    %c0_i32_1 = arith.constant 0 : i32
    return %c0_i32, %c0_i32_0 : i32, i32
  }
  func.func @transform_24(%arg0: i32) -> (i32, i32) {
    %c0_i32 = arith.constant 0 : i32
    %c0_i32_0 = arith.constant 0 : i32
    %c0_i32_1 = arith.constant 0 : i32
    return %c0_i32, %c0_i32_0 : i32, i32
  }
  func.func @transform_25(%arg0: i32) -> (i32, i32) {
    %c0_i32 = arith.constant 0 : i32
    %c0_i32_0 = arith.constant 0 : i32
    %c0_i32_1 = arith.constant 0 : i32
    return %c0_i32, %c0_i32_0 : i32, i32
  }
  func.func @transform_26(%arg0: i32) -> (i32, i32) {
    %c0_i32 = arith.constant 0 : i32
    %c0_i32_0 = arith.constant 0 : i32
    %c0_i32_1 = arith.constant 0 : i32
    return %c0_i32, %c0_i32_0 : i32, i32
  }
}

</mosaic_0001>

<llo_original>
// kernel: tpu_custom_call.1
$region0: #{tpu_custom_call.1}
  #allocation0 [shape = 'u32[]', space=smem, size = 0x4, offset = 0x4, fixed_abs, tag = 'smem constant byte address 0x4 - core index']
  #allocation1 [shape = 'u32[144,128]{1,0:T(1,128)}', space=vmem, size = 0x12000, scoped, tag = 'internal scratch']
  %s0 = inlined_call_operand.vmem [shape: bf16[32,8], index: 0, kind: input, shape index: {}]
  %s1 = inlined_call_operand.vmem [shape: bf16[64,4], index: 1, kind: input, shape index: {}]
  %s2 = inlined_call_operand.vmem [shape: f32[32,1], index: 2, kind: input, shape index: {}]
  %s3 = inlined_call_operand.vmem [shape: bf16[64,32], index: 3, kind: input, shape index: {}]
  %s4 = inlined_call_operand.vmem [shape: bf16[32,64], index: 4, kind: input, shape index: {}]
  %s5 = inlined_call_operand.vmem [shape: f32[2,16,16], index: 5, kind: input, shape index: {}]
  %s6 = inlined_call_operand.hbm [shape: bf16[8,32], index: 6, kind: input, shape index: {}]
  %s7 = inlined_call_operand.hbm [shape: bf16[8,32], index: 7, kind: input, shape index: {}]
  %s8 = inlined_call_operand.hbm [shape: f32[1,32], index: 8, kind: input, shape index: {}]
  %s9 = inlined_call_operand.hbm [shape: bf16[4,64], index: 9, kind: input, shape index: {}]
  %s10 = inlined_call_operand.hbm [shape: f32[1,64], index: 10, kind: input, shape index: {}]
  %s11 = inlined_call_operand.vmem [shape: bf16[32,64], index: 11, kind: input, shape index: {}]
  %s12 = inlined_call_operand.vmem [shape: bf16[32,64], index: 12, kind: input, shape index: {}]
  %s13 = inlined_call_operand.vmem [shape: bf16[64,64], index: 13, kind: input, shape index: {}]
  %s14 = inlined_call_operand.vmem [shape: f32[1,64], index: 14, kind: input, shape index: {}]
  %s15 = inlined_call_operand.vmem [shape: bf16[64,64], index: 15, kind: input, shape index: {}]
  %s16 = inlined_call_operand.vmem [shape: bf16[32,64], index: 16, kind: input, shape index: {}]
  %s17 = inlined_call_operand.vmem [shape: bf16[32,64], index: 17, kind: input, shape index: {}]
  %s18 = inlined_call_operand.vmem [shape: f32[1,64], index: 18, kind: input, shape index: {}]
  %s19 = inlined_call_operand.vmem [shape: bf16[64,32], index: 19, kind: input, shape index: {}]
  %s20 = inlined_call_operand.hbm [shape: f32[1,32], index: 20, kind: input, shape index: {}]
  %s21 = inlined_call_operand.vmem [shape: bf16[32,64], index: 21, kind: input, shape index: {}]
  %s22 = inlined_call_operand.hbm [shape: bf16[32,64], index: 22, kind: input, shape index: {}]
  %s23 = inlined_call_operand.vmem [shape: f32[1,64], index: 23, kind: input, shape index: {}]
  %s24 = inlined_call_operand.vmem [shape: f32[1,64], index: 24, kind: input, shape index: {}]
  %s25 = inlined_call_operand.vmem [shape: bf16[64,64], index: 25, kind: input, shape index: {}]
  %s26 = inlined_call_operand.hbm [shape: f32[8,128], index: 26, kind: output, shape index: {}]
  %s27 = sld [smem:[#allocation0]]
  $region142: #{tpu_custom_call.1} parent=0
    _
  %s29 = ssub.s32 1, %s27
  %s30 = scalar_select 0, %s29, %s27
  $region1: #{tpu_custom_call.1} parent=0
    #allocation2 [shape = 'u8[2048]{0}', space=vmem, size = 0x800, scoped, tag = 'input window, operand 6, single buffered']
    #allocation3 [shape = 's32[1]{0}', space=sflag, size = 0x4, scoped, tag = 'scoped memory for tpu_custom_call.1']
    #allocation4 [shape = 's32[1]{0}', space=sflag, size = 0x4, scoped, tag = 'scoped memory for tpu_custom_call.1']
    #allocation5 [shape = 'u8[2048]{0}', space=vmem, size = 0x800, scoped, tag = 'input window, operand 7, single buffered']
    #allocation6 [shape = 's32[1]{0}', space=sflag, size = 0x4, scoped, tag = 'scoped memory for tpu_custom_call.1']
    #allocation7 [shape = 'u8[512]{0}', space=vmem, size = 0x400, scoped, tag = 'input window, operand 8, single buffered']
    #allocation8 [shape = 'u8[1024]{0}', space=vmem, size = 0x400, scoped, tag = 'input window, operand 9, single buffered']
    #allocation9 [shape = 's32[1]{0}', space=sflag, size = 0x4, scoped, tag = 'scoped memory for tpu_custom_call.1']
    #allocation10 [shape = 'u8[512]{0}', space=vmem, size = 0x400, scoped, tag = 'input window, operand 10, single buffered']
    #allocation11 [shape = 'u8[512]{0}', space=vmem, size = 0x400, scoped, tag = 'input window, operand 20, single buffered']
    #allocation12 [shape = 's32[1]{0}', space=sflag, size = 0x4, scoped, tag = 'scoped memory for tpu_custom_call.1']
    #allocation13 [shape = 'u8[8192]{0}', space=vmem, size = 0x2000, scoped, tag = 'input window, operand 22, single buffered']
    #allocation14 [shape = 'u8[4096]{0}', space=vmem, size = 0x1000, scoped, tag = 'output window, operand 0, single buffered']
    %31 = vsyncpa [#allocation3], 0
    %32 = vsyncpa [#allocation6], 0
    %33 = vsyncpa [#allocation9], 0
    %34 = vsyncpa [#allocation12], 0
    %35 = vsyncpa [#allocation4], 0
    // Predicated region
    $region2: #{tpu_custom_call.1} parent=1 // pred_check
      _
    $region3: #{tpu_custom_call.1} parent=1 // pred_check_branch
      %37 = sbr.rel (0) target = $region5
    $region4: #{tpu_custom_call.1} parent=1 // pred_region
      _
    $region5: #{tpu_custom_call.1} parent=1 // pred_fallthru
      _
    // Predicated region
    $region6: #{tpu_custom_call.1} parent=1 // pred_check
      _
    $region7: #{tpu_custom_call.1} parent=1 // pred_check_branch
      %39 = sbr.rel (0) target = $region9
    $region8: #{tpu_custom_call.1} parent=1 // pred_region
      _
    $region9: #{tpu_custom_call.1} parent=1 // pred_fallthru
      _
    // Predicated region
    $region10: #{tpu_custom_call.1} parent=1 // pred_check
      _
    $region11: #{tpu_custom_call.1} parent=1 // pred_check_branch
      %41 = sbr.rel (0) target = $region13
    $region12: #{tpu_custom_call.1} parent=1 // pred_region
      _
    $region13: #{tpu_custom_call.1} parent=1 // pred_fallthru
      _
    // Predicated region
    $region14: #{tpu_custom_call.1} parent=1 // pred_check
      _
    $region15: #{tpu_custom_call.1} parent=1 // pred_check_branch
      %43 = sbr.rel (0) target = $region17
    $region16: #{tpu_custom_call.1} parent=1 // pred_region
      _
    $region17: #{tpu_custom_call.1} parent=1 // pred_fallthru
      _
    // Predicated region
    $region18: #{tpu_custom_call.1} parent=1 // pred_check
      _
    $region19: #{tpu_custom_call.1} parent=1 // pred_check_branch
      %45 = sbr.rel (0) target = $region21
    $region20: #{tpu_custom_call.1} parent=1 // pred_region
      _
    $region21: #{tpu_custom_call.1} parent=1 // pred_fallthru
      _
    // Predicated region
    $region22: #{tpu_custom_call.1} parent=1 // pred_check
      _
    $region23: #{tpu_custom_call.1} parent=1 // pred_check_branch
      %47 = sbr.rel (0) target = $region25
    $region24: #{tpu_custom_call.1} parent=1 // pred_region
      _
    $region25: #{tpu_custom_call.1} parent=1 // pred_fallthru
      _
    // Predicated region
    $region26: #{tpu_custom_call.1} parent=1 // pred_check
      _
    $region27: #{tpu_custom_call.1} parent=1 // pred_check_branch
      %49 = sbr.rel (0) target = $region29
    $region28: #{tpu_custom_call.1} parent=1 // pred_region
      %s51 = ssub.s32 64, 64
      %52 = vsyncadd [#allocation3], %s51
      %s54 = sshll.u32 [#allocation2], 4
      %s55 = int_to_ptr.vmem [resolvable:$true] %s54
      %57 = dma.hbm_to_vmem [thread:$0]  %s6, 64, %s55, [#allocation3]
    $region29: #{tpu_custom_call.1} parent=1 // pred_fallthru
      _
    // Predicated region
    $region30: #{tpu_custom_call.1} parent=1 // pred_check
      _
    $region31: #{tpu_custom_call.1} parent=1 // pred_check_branch
      %59 = sbr.rel (0) target = $region33
    $region32: #{tpu_custom_call.1} parent=1 // pred_region
      %s61 = ssub.s32 64, 64
      %62 = vsyncadd [#allocation6], %s61
      %s64 = sshll.u32 [#allocation5], 4
      %s65 = int_to_ptr.vmem [resolvable:$true] %s64
      %67 = dma.hbm_to_vmem [thread:$0]  %s7, 64, %s65, [#allocation6]
    $region33: #{tpu_custom_call.1} parent=1 // pred_fallthru
      _
    // Predicated region
    $region34: #{tpu_custom_call.1} parent=1 // pred_check
      _
    $region35: #{tpu_custom_call.1} parent=1 // pred_check_branch
      %69 = sbr.rel (0) target = $region37
    $region36: #{tpu_custom_call.1} parent=1 // pred_region
      %s71 = ssub.s32 16, 16
      %72 = vsyncadd [#allocation6], %s71
      %s74 = sshll.u32 [#allocation7], 4
      %s75 = int_to_ptr.vmem [resolvable:$true] %s74
      %77 = dma.hbm_to_vmem [thread:$0]  %s8, 16, %s75, [#allocation6]
    $region37: #{tpu_custom_call.1} parent=1 // pred_fallthru
      _
    // Predicated region
    $region38: #{tpu_custom_call.1} parent=1 // pred_check
      _
    $region39: #{tpu_custom_call.1} parent=1 // pred_check_branch
      %79 = sbr.rel (0) target = $region41
    $region40: #{tpu_custom_call.1} parent=1 // pred_region
      %s81 = ssub.s32 32, 32
      %82 = vsyncadd [#allocation9], %s81
      %s84 = sshll.u32 [#allocation8], 4
      %s85 = int_to_ptr.vmem [resolvable:$true] %s84
      %87 = dma.hbm_to_vmem [thread:$0]  %s9, 32, %s85, [#allocation9]
    $region41: #{tpu_custom_call.1} parent=1 // pred_fallthru
      _
    // Predicated region
    $region42: #{tpu_custom_call.1} parent=1 // pred_check
      _
    $region43: #{tpu_custom_call.1} parent=1 // pred_check_branch
      %89 = sbr.rel (0) target = $region45
    $region44: #{tpu_custom_call.1} parent=1 // pred_region
      %s91 = ssub.s32 16, 16
      %92 = vsyncadd [#allocation9], %s91
      %s94 = sshll.u32 [#allocation10], 4
      %s95 = int_to_ptr.vmem [resolvable:$true] %s94
      %97 = dma.hbm_to_vmem [thread:$0]  %s10, 16, %s95, [#allocation9]
    $region45: #{tpu_custom_call.1} parent=1 // pred_fallthru
      _
    // Predicated region
    $region46: #{tpu_custom_call.1} parent=1 // pred_check
      _
    $region47: #{tpu_custom_call.1} parent=1 // pred_check_branch
      %99 = sbr.rel (0) target = $region49
    $region48: #{tpu_custom_call.1} parent=1 // pred_region
      _
    $region49: #{tpu_custom_call.1} parent=1 // pred_fallthru
      _
    // Predicated region
    $region50: #{tpu_custom_call.1} parent=1 // pred_check
      _
    $region51: #{tpu_custom_call.1} parent=1 // pred_check_branch
      %101 = sbr.rel (0) target = $region53
    $region52: #{tpu_custom_call.1} parent=1 // pred_region
      _
    $region53: #{tpu_custom_call.1} parent=1 // pred_fallthru
      _
    // Predicated region
    $region54: #{tpu_custom_call.1} parent=1 // pred_check
      _
    $region55: #{tpu_custom_call.1} parent=1 // pred_check_branch
      %103 = sbr.rel (0) target = $region57
    $region56: #{tpu_custom_call.1} parent=1 // pred_region
      _
    $region57: #{tpu_custom_call.1} parent=1 // pred_fallthru
      _
    // Predicated region
    $region58: #{tpu_custom_call.1} parent=1 // pred_check
      _
    $region59: #{tpu_custom_call.1} parent=1 // pred_check_branch
      %105 = sbr.rel (0) target = $region61
    $region60: #{tpu_custom_call.1} parent=1 // pred_region
      _
    $region61: #{tpu_custom_call.1} parent=1 // pred_fallthru
      _
    // Predicated region
    $region62: #{tpu_custom_call.1} parent=1 // pred_check
      _
    $region63: #{tpu_custom_call.1} parent=1 // pred_check_branch
      %107 = sbr.rel (0) target = $region65
    $region64: #{tpu_custom_call.1} parent=1 // pred_region
      _
    $region65: #{tpu_custom_call.1} parent=1 // pred_fallthru
      _
    // Predicated region
    $region66: #{tpu_custom_call.1} parent=1 // pred_check
      _
    $region67: #{tpu_custom_call.1} parent=1 // pred_check_branch
      %109 = sbr.rel (0) target = $region69
    $region68: #{tpu_custom_call.1} parent=1 // pred_region
      _
    $region69: #{tpu_custom_call.1} parent=1 // pred_fallthru
      _
    // Predicated region
    $region70: #{tpu_custom_call.1} parent=1 // pred_check
      _
    $region71: #{tpu_custom_call.1} parent=1 // pred_check_branch
      %111 = sbr.rel (0) target = $region73
    $region72: #{tpu_custom_call.1} parent=1 // pred_region
      _
    $region73: #{tpu_custom_call.1} parent=1 // pred_fallthru
      _
    // Predicated region
    $region74: #{tpu_custom_call.1} parent=1 // pred_check
      _
    $region75: #{tpu_custom_call.1} parent=1 // pred_check_branch
      %113 = sbr.rel (0) target = $region77
    $region76: #{tpu_custom_call.1} parent=1 // pred_region
      _
    $region77: #{tpu_custom_call.1} parent=1 // pred_fallthru
      _
    // Predicated region
    $region78: #{tpu_custom_call.1} parent=1 // pred_check
      _
    $region79: #{tpu_custom_call.1} parent=1 // pred_check_branch
      %115 = sbr.rel (0) target = $region81
    $region80: #{tpu_custom_call.1} parent=1 // pred_region
      _
    $region81: #{tpu_custom_call.1} parent=1 // pred_fallthru
      _
    // Predicated region
    $region82: #{tpu_custom_call.1} parent=1 // pred_check
      _
    $region83: #{tpu_custom_call.1} parent=1 // pred_check_branch
      %117 = sbr.rel (0) target = $region85
    $region84: #{tpu_custom_call.1} parent=1 // pred_region
      %s119 = ssub.s32 16, 16
      %120 = vsyncadd [#allocation12], %s119
      %s122 = sshll.u32 [#allocation11], 4
      %s123 = int_to_ptr.vmem [resolvable:$true] %s122
      %125 = dma.hbm_to_vmem [thread:$0]  %s20, 16, %s123, [#allocation12]
    $region85: #{tpu_custom_call.1} parent=1 // pred_fallthru
      _
    // Predicated region
    $region86: #{tpu_custom_call.1} parent=1 // pred_check
      _
    $region87: #{tpu_custom_call.1} parent=1 // pred_check_branch
      %127 = sbr.rel (0) target = $region89
    $region88: #{tpu_custom_call.1} parent=1 // pred_region
      _
    $region89: #{tpu_custom_call.1} parent=1 // pred_fallthru
      _
    // Predicated region
    $region90: #{tpu_custom_call.1} parent=1 // pred_check
      _
    $region91: #{tpu_custom_call.1} parent=1 // pred_check_branch
      %129 = sbr.rel (0) target = $region93
    $region92: #{tpu_custom_call.1} parent=1 // pred_region
      %s131 = ssub.s32 256, 256
      %132 = vsyncadd [#allocation12], %s131
      %s133 = sshll.u32 [#allocation13], 4
      %s134 = int_to_ptr.vmem [resolvable:$true] %s133
      %139 = dma.hbm_to_vmem [thread:$0]  %s22, 256, %s134, [#allocation12], 64, 64, 4
    $region93: #{tpu_custom_call.1} parent=1 // pred_fallthru
      _
    // Predicated region
    $region94: #{tpu_custom_call.1} parent=1 // pred_check
      _
    $region95: #{tpu_custom_call.1} parent=1 // pred_check_branch
      %141 = sbr.rel (0) target = $region97
    $region96: #{tpu_custom_call.1} parent=1 // pred_region
      _
    $region97: #{tpu_custom_call.1} parent=1 // pred_fallthru
      _
    // Predicated region
    $region98: #{tpu_custom_call.1} parent=1 // pred_check
      _
    $region99: #{tpu_custom_call.1} parent=1 // pred_check_branch
      %143 = sbr.rel (0) target = $region101
    $region100: #{tpu_custom_call.1} parent=1 // pred_region
      _
    $region101: #{tpu_custom_call.1} parent=1 // pred_fallthru
      _
    // Predicated region
    $region102: #{tpu_custom_call.1} parent=1 // pred_check
      _
    $region103: #{tpu_custom_call.1} parent=1 // pred_check_branch
      %145 = sbr.rel (0) target = $region105
    $region104: #{tpu_custom_call.1} parent=1 // pred_region
      _
    $region105: #{tpu_custom_call.1} parent=1 // pred_fallthru
      _
    // Predicated region
    $region106: #{tpu_custom_call.1} parent=1 // pred_check
      _
    $region107: #{tpu_custom_call.1} parent=1 // pred_check_branch
      %147 = sbr.rel (0) target = $region109
    $region108: #{tpu_custom_call.1} parent=1 // pred_region
      %148 = dma.done [#allocation3], 64
    $region109: #{tpu_custom_call.1} parent=1 // pred_fallthru
      _
    // Predicated region
    $region110: #{tpu_custom_call.1} parent=1 // pred_check
      _
    $region111: #{tpu_custom_call.1} parent=1 // pred_check_branch
      %150 = sbr.rel (0) target = $region113
    $region112: #{tpu_custom_call.1} parent=1 // pred_region
      %151 = dma.done [#allocation6], 64
    $region113: #{tpu_custom_call.1} parent=1 // pred_fallthru
      _
    // Predicated region
    $region114: #{tpu_custom_call.1} parent=1 // pred_check
      _
    $region115: #{tpu_custom_call.1} parent=1 // pred_check_branch
      %153 = sbr.rel (0) target = $region117
    $region116: #{tpu_custom_call.1} parent=1 // pred_region
      %154 = dma.done [#allocation6], 16
    $region117: #{tpu_custom_call.1} parent=1 // pred_fallthru
      _
    // Predicated region
    $region118: #{tpu_custom_call.1} parent=1 // pred_check
      _
    $region119: #{tpu_custom_call.1} parent=1 // pred_check_branch
      %156 = sbr.rel (0) target = $region121
    $region120: #{tpu_custom_call.1} parent=1 // pred_region
      %157 = dma.done [#allocation9], 32
    $region121: #{tpu_custom_call.1} parent=1 // pred_fallthru
      _
    // Predicated region
    $region122: #{tpu_custom_call.1} parent=1 // pred_check
      _
    $region123: #{tpu_custom_call.1} parent=1 // pred_check_branch
      %159 = sbr.rel (0) target = $region125
    $region124: #{tpu_custom_call.1} parent=1 // pred_region
      %160 = dma.done [#allocation9], 16
    $region125: #{tpu_custom_call.1} parent=1 // pred_fallthru
      _
    // Predicated region
    $region126: #{tpu_custom_call.1} parent=1 // pred_check
      _
    $region127: #{tpu_custom_call.1} parent=1 // pred_check_branch
      %162 = sbr.rel (0) target = $region129
    $region128: #{tpu_custom_call.1} parent=1 // pred_region
      %163 = dma.done [#allocation12], 16
    $region129: #{tpu_custom_call.1} parent=1 // pred_fallthru
      _
    // Predicated region
    $region130: #{tpu_custom_call.1} parent=1 // pred_check
      _
    $region131: #{tpu_custom_call.1} parent=1 // pred_check_branch
      %165 = sbr.rel (0) target = $region133
    $region132: #{tpu_custom_call.1} parent=1 // pred_region
      %166 = dma.done [#allocation12], 256
    $region133: #{tpu_custom_call.1} parent=1 // pred_fallthru
      _
    %v168 = vld [vmem:[%s2] sm:$0xff]
    %v169 = vld [vmem:[%s2 + $0x8] sm:$0xff]
    %v170 = vld [vmem:[%s2 + $0x10] sm:$0xff]
    %v171 = vld [vmem:[%s2 + $0x18] sm:$0xff]
    %173 = vset.pattern.permute.xlu0 0
    %174 = vperm.xlu0 %173, %v168
    %v175 = vpop.permute.xlu0 %174
    %178 = vset.pattern.permute.xlu0 0
    %179 = vperm.xlu0 %178, %v169
    %v180 = vpop.permute.xlu0 %179
    %183 = vset.pattern.permute.xlu0 0
    %184 = vperm.xlu0 %183, %v170
    %v185 = vpop.permute.xlu0 %184
    %188 = vset.pattern.permute.xlu0 0
    %189 = vperm.xlu0 %188, %v171
    %v190 = vpop.permute.xlu0 %189
    %v192 = vld [vmem:[%s0] sm:$0xf]
    %v193 = vld [vmem:[%s0 + $0x4] sm:$0xf]
    %v194 = vld [vmem:[%s0 + $0x8] sm:$0xf]
    %v195 = vld [vmem:[%s0 + $0xc] sm:$0xf]
    %v196 = vld [vmem:[#allocation5] sm:$0xf]
    %v197 = vld [vmem:[#allocation7] sm:$0x1]
    %v199 = vlaneseq
    %v200 = vshrl.u32 %v199, 7
    %v201 = vsub.s32 0, %v200
    %v202 = vrot.slane %v197, %v201
    %v208 = vunpack.c.l.b16 %v192
    %v209 = vunpack.c.l.b16 %v193
    %v210 = vunpack.c.l.b16 %v194
    %v211 = vunpack.c.l.b16 %v195
    %v212 = vpack.c.b16 %v209, %v208
    %v213 = vpack.c.b16 %v211, %v210
    %vm214 = vcmask 64512
    %v216 = vsel %vm214, %v212, 0
    %v219 = vsel %vm214, %v213, 0
    %vm221 = vcmask 1043456
    %v223 = vsel %vm221, %v196, 0
    %225 = vmatprep.subr.bf16.mxu0 0
    %226 = vmatpush1.bf16.msra.mxu0 %v223
    %227 = vmatprep.subr.bf16.mxu0 0
    %228 = vmatpush1.bf16.msra.mxu0 0
    %229 = vmatprep.subr.bf16.mxu0 0
    %230 = vmatpush1.bf16.msra.mxu0 0
    %231 = vmatprep.subr.bf16.mxu0 0
    %232 = vmatpush1.bf16.msra.mxu0 0
    %233 = vmatprep.subr.bf16.mxu0 0
    %234 = vmatpush1.bf16.msra.mxu0 0
    %235 = vmatprep.subr.bf16.mxu0 0
    %236 = vmatpush1.bf16.msra.mxu0 0
    %237 = vmatprep.subr.bf16.mxu0 0
    %238 = vmatpush1.bf16.msra.mxu0 0
    %239 = vmatprep.subr.bf16.mxu0 0
    %240 = vmatpush1.bf16.msra.mxu0 0
    %241 = vmatprep.subr.bf16.mxu0 0
    %242 = vmatpush1.bf16.msra.mxu0 0
    %243 = vmatprep.subr.bf16.mxu0 0
    %244 = vmatpush1.bf16.msra.mxu0 0
    %245 = vmatprep.subr.bf16.mxu0 0
    %246 = vmatpush1.bf16.msra.mxu0 0
    %247 = vmatprep.subr.bf16.mxu0 0
    %248 = vmatpush1.bf16.msra.mxu0 0
    %249 = vmatprep.subr.bf16.mxu0 0
    %250 = vmatpush1.bf16.msra.mxu0 0
    %251 = vmatprep.subr.bf16.mxu0 0
    %252 = vmatpush1.bf16.msra.mxu0 0
    %253 = vmatprep.subr.bf16.mxu0 0
    %254 = vmatpush1.bf16.msra.mxu0 0
    %255 = vmatprep.subr.bf16.mxu0 0
    %256 = vmatpush1.bf16.msra.mxu0 0
    %257 = vmatprep.mubr.bf16.mxu0 0
    %258 = vmatmul.mubr.bf16.gmra.mrb[0].mxu0 %v216
    %v259 = vpop.f32.mrb[0].mxu0
    %v260 = vadd.f32 %v202, %v259
    %v261 = vpop.f32.mrb[0].mxu0
    %v262 = vpop.f32.mrb[0].mxu0
    %v263 = vadd.f32 %v202, %v262
    %v264 = vpop.f32.mrb[0].mxu0
    %265 = vmatprep.mubr.bf16.mxu0 0
    %266 = vmatmul.mubr.bf16.gmra.mrb[0].mxu0 %v219
    %v267 = vpop.f32.mrb[0].mxu0
    %v268 = vadd.f32 %v202, %v267
    %v269 = vpop.f32.mrb[0].mxu0
    %v270 = vpop.f32.mrb[0].mxu0
    %v271 = vadd.f32 %v202, %v270
    %v272 = vpop.f32.mrb[0].mxu0
    %273 = vdwg.mxu0
    %v274 = vmul.f32 %v260, %v175
    %v275 = vmul.f32 %v263, %v180
    %v276 = vmul.f32 %v268, %v185
    %v277 = vmul.f32 %v271, %v190
    %v278 = vld [vmem:[%s1] sm:$0xf]
    %v279 = vld [vmem:[%s1 + $0x4] sm:$0xf]
    %v280 = vld [vmem:[%s1 + $0x8] sm:$0xf]
    %v281 = vld [vmem:[%s1 + $0xc] sm:$0xf]
    %v282 = vld [vmem:[%s1 + $0x10] sm:$0xf]
    %v283 = vld [vmem:[%s1 + $0x14] sm:$0xf]
    %v284 = vld [vmem:[%s1 + $0x18] sm:$0xf]
    %v285 = vld [vmem:[%s1 + $0x1c] sm:$0xf]
    %v286 = vld [vmem:[#allocation8] sm:$0x3]
    %v287 = vld [vmem:[#allocation10] sm:$0x1]
    %v289 = vlaneseq
    %v290 = vshrl.u32 %v289, 7
    %v291 = vsub.s32 0, %v290
    %v292 = vrot.slane %v287, %v291
    %v302 = vunpack.c.l.b16 %v278
    %v303 = vunpack.c.l.b16 %v279
    %v304 = vunpack.c.l.b16 %v280
    %v305 = vunpack.c.l.b16 %v281
    %v306 = vunpack.c.l.b16 %v282
    %v307 = vunpack.c.l.b16 %v283
    %v308 = vunpack.c.l.b16 %v284
    %v309 = vunpack.c.l.b16 %v285
    %v310 = vpack.c.b16 %v303, %v302
    %v311 = vpack.c.b16 %v305, %v304
    %v312 = vpack.c.b16 %v307, %v306
    %v313 = vpack.c.b16 %v309, %v308
    %vm314 = vcmask 31744
    %v316 = vsel %vm314, %v310, 0
    %v319 = vsel %vm314, %v311, 0
    %v322 = vsel %vm314, %v312, 0
    %v325 = vsel %vm314, %v313, 0
    %vm327 = vcmask 1041408
    %v329 = vsel %vm327, %v286, 0
    %331 = vmatprep.subr.bf16.mxu0 0
    %332 = vmatpush1.bf16.msra.mxu0 %v329
    %333 = vmatprep.subr.bf16.mxu0 0
    %334 = vmatpush1.bf16.msra.mxu0 0
    %335 = vmatprep.subr.bf16.mxu0 0
    %336 = vmatpush1.bf16.msra.mxu0 0
    %337 = vmatprep.subr.bf16.mxu0 0
    %338 = vmatpush1.bf16.msra.mxu0 0
    %339 = vmatprep.subr.bf16.mxu0 0
    %340 = vmatpush1.bf16.msra.mxu0 0
    %341 = vmatprep.subr.bf16.mxu0 0
    %342 = vmatpush1.bf16.msra.mxu0 0
    %343 = vmatprep.subr.bf16.mxu0 0
    %344 = vmatpush1.bf16.msra.mxu0 0
    %345 = vmatprep.subr.bf16.mxu0 0
    %346 = vmatpush1.bf16.msra.mxu0 0
    %347 = vmatprep.subr.bf16.mxu0 0
    %348 = vmatpush1.bf16.msra.mxu0 0
    %349 = vmatprep.subr.bf16.mxu0 0
    %350 = vmatpush1.bf16.msra.mxu0 0
    %351 = vmatprep.subr.bf16.mxu0 0
    %352 = vmatpush1.bf16.msra.mxu0 0
    %353 = vmatprep.subr.bf16.mxu0 0
    %354 = vmatpush1.bf16.msra.mxu0 0
    %355 = vmatprep.subr.bf16.mxu0 0
    %356 = vmatpush1.bf16.msra.mxu0 0
    %357 = vmatprep.subr.bf16.mxu0 0
    %358 = vmatpush1.bf16.msra.mxu0 0
    %359 = vmatprep.subr.bf16.mxu0 0
    %360 = vmatpush1.bf16.msra.mxu0 0
    %361 = vmatprep.subr.bf16.mxu0 0
    %362 = vmatpush1.bf16.msra.mxu0 0
    %363 = vmatprep.mubr.bf16.mxu0 0
    %364 = vmatmul.mubr.bf16.gmra.mrb[0].mxu0 %v316
    %v365 = vpop.f32.mrb[0].mxu0
    %v366 = vadd.f32 %v292, %v365
    %v367 = vpop.f32.mrb[0].mxu0
    %v368 = vpop.f32.mrb[0].mxu0
    %v369 = vadd.f32 %v292, %v368
    %v370 = vpop.f32.mrb[0].mxu0
    %371 = vmatprep.mubr.bf16.mxu0 0
    %372 = vmatmul.mubr.bf16.gmra.mrb[0].mxu0 %v319
    %v373 = vpop.f32.mrb[0].mxu0
    %v374 = vadd.f32 %v292, %v373
    %v375 = vpop.f32.mrb[0].mxu0
    %v376 = vpop.f32.mrb[0].mxu0
    %v377 = vadd.f32 %v292, %v376
    %v378 = vpop.f32.mrb[0].mxu0
    %379 = vmatprep.mubr.bf16.mxu0 0
    %380 = vmatmul.mubr.bf16.gmra.mrb[0].mxu0 %v322
    %v381 = vpop.f32.mrb[0].mxu0
    %v382 = vadd.f32 %v292, %v381
    %v383 = vpop.f32.mrb[0].mxu0
    %v384 = vpop.f32.mrb[0].mxu0
    %v385 = vadd.f32 %v292, %v384
    %v386 = vpop.f32.mrb[0].mxu0
    %387 = vmatprep.mubr.bf16.mxu0 0
    %388 = vmatmul.mubr.bf16.gmra.mrb[0].mxu0 %v325
    %v389 = vpop.f32.mrb[0].mxu0
    %v390 = vadd.f32 %v292, %v389
    %v391 = vpop.f32.mrb[0].mxu0
    %v392 = vpop.f32.mrb[0].mxu0
    %v393 = vadd.f32 %v292, %v392
    %v394 = vpop.f32.mrb[0].mxu0
    %395 = vdwg.mxu0
    %v396 = vld [vmem:[%s3] sm:$0xf]
    %v397 = vld [vmem:[%s3 + $0x4] sm:$0xf]
    %v398 = vld [vmem:[%s3 + $0x8] sm:$0xf]
    %v399 = vld [vmem:[%s3 + $0xc] sm:$0xf]
    %v400 = vld [vmem:[%s3 + $0x10] sm:$0xf]
    %v401 = vld [vmem:[%s3 + $0x14] sm:$0xf]
    %v402 = vld [vmem:[%s3 + $0x18] sm:$0xf]
    %v403 = vld [vmem:[%s3 + $0x1c] sm:$0xf]
    %v404 = vld [vmem:[%s4] sm:$0xf]
    %v405 = vld [vmem:[%s4 + $0x4] sm:$0xf]
    %v406 = vld [vmem:[%s4 + $0x8] sm:$0xf]
    %v407 = vld [vmem:[%s4 + $0xc] sm:$0xf]
    %v408 = vld [vmem:[%s5] sm:$0xff]
    %v409 = vld [vmem:[%s5 + $0x8] sm:$0xff]
    %v410 = vld [vmem:[%s5 + $0x10] sm:$0xff]
    %v411 = vld [vmem:[%s5 + $0x18] sm:$0xff]
    %v412 = vld [vmem:[%s11] sm:$0xf]
    %v413 = vld [vmem:[%s11 + $0x4] sm:$0xf]
    %v414 = vld [vmem:[%s11 + $0x8] sm:$0xf]
    %v415 = vld [vmem:[%s11 + $0xc] sm:$0xf]
    %v416 = vld [vmem:[%s12] sm:$0xf]
    %v417 = vld [vmem:[%s12 + $0x4] sm:$0xf]
    %v418 = vld [vmem:[%s12 + $0x8] sm:$0xf]
    %v419 = vld [vmem:[%s12 + $0xc] sm:$0xf]
    %v420 = vld [vmem:[%s13] sm:$0xf]
    %v421 = vld [vmem:[%s13 + $0x4] sm:$0xf]
    %v422 = vld [vmem:[%s13 + $0x8] sm:$0xf]
    %v423 = vld [vmem:[%s13 + $0xc] sm:$0xf]
    %v424 = vld [vmem:[%s13 + $0x10] sm:$0xf]
    %v425 = vld [vmem:[%s13 + $0x14] sm:$0xf]
    %v426 = vld [vmem:[%s13 + $0x18] sm:$0xf]
    %v427 = vld [vmem:[%s13 + $0x1c] sm:$0xf]
    %v428 = vld [vmem:[%s14] sm:$0x1]
    %v429 = vld [vmem:[%s15] sm:$0xf]
    %v430 = vld [vmem:[%s15 + $0x4] sm:$0xf]
    %v431 = vld [vmem:[%s15 + $0x8] sm:$0xf]
    %v432 = vld [vmem:[%s15 + $0xc] sm:$0xf]
    %v433 = vld [vmem:[%s15 + $0x10] sm:$0xf]
    %v434 = vld [vmem:[%s15 + $0x14] sm:$0xf]
    %v435 = vld [vmem:[%s15 + $0x18] sm:$0xf]
    %v436 = vld [vmem:[%s15 + $0x1c] sm:$0xf]
    %v437 = vld [vmem:[%s16] sm:$0xf]
    %v438 = vld [vmem:[%s16 + $0x4] sm:$0xf]
    %v439 = vld [vmem:[%s16 + $0x8] sm:$0xf]
    %v440 = vld [vmem:[%s16 + $0xc] sm:$0xf]
    %v441 = vld [vmem:[%s17] sm:$0xf]
    %v442 = vld [vmem:[%s17 + $0x4] sm:$0xf]
    %v443 = vld [vmem:[%s17 + $0x8] sm:$0xf]
    %v444 = vld [vmem:[%s17 + $0xc] sm:$0xf]
    %v445 = vld [vmem:[%s18] sm:$0x1]
    %v446 = vld [vmem:[%s19] sm:$0xf]
    %v447 = vld [vmem:[%s19 + $0x4] sm:$0xf]
    %v448 = vld [vmem:[%s19 + $0x8] sm:$0xf]
    %v449 = vld [vmem:[%s19 + $0xc] sm:$0xf]
    %v450 = vld [vmem:[%s19 + $0x10] sm:$0xf]
    %v451 = vld [vmem:[%s19 + $0x14] sm:$0xf]
    %v452 = vld [vmem:[%s19 + $0x18] sm:$0xf]
    %v453 = vld [vmem:[%s19 + $0x1c] sm:$0xf]
    %v454 = vld [vmem:[#allocation11] sm:$0x1]
    %v455 = vpack.c.bf16 %v275, %v274
    %v456 = vpack.c.bf16 %v277, %v276
    %v465 = vunpack.c.l.b16 %v396
    %v466 = vunpack.c.l.b16 %v397
    %v467 = vunpack.c.l.b16 %v398
    %v468 = vunpack.c.l.b16 %v399
    %v469 = vunpack.c.l.b16 %v400
    %v470 = vunpack.c.l.b16 %v401
    %v471 = vunpack.c.l.b16 %v402
    %v472 = vunpack.c.l.b16 %v403
    %v473 = vpack.c.b16 %v466, %v465
    %v474 = vpack.c.b16 %v468, %v467
    %v475 = vpack.c.b16 %v470, %v469
    %v476 = vpack.c.b16 %v472, %v471
    %vm477 = vcmask 261120
    %v479 = vsel %vm477, %v473, 0
    %v482 = vsel %vm477, %v474, 0
    %v485 = vsel %vm477, %v475, 0
    %v488 = vsel %vm477, %v476, 0
    %490 = vmatprep.subr.bf16.mxu0 0
    %491 = vmatpush1.bf16.msra.mxu0 %v455
    %492 = vmatprep.subr.bf16.mxu0 0
    %493 = vmatpush1.bf16.msra.mxu0 %v456
    %494 = vmatprep.subr.bf16.mxu0 0
    %495 = vmatpush1.bf16.msra.mxu0 0
    %496 = vmatprep.subr.bf16.mxu0 0
    %497 = vmatpush1.bf16.msra.mxu0 0
    %498 = vmatprep.subr.bf16.mxu0 0
    %499 = vmatpush1.bf16.msra.mxu0 0
    %500 = vmatprep.subr.bf16.mxu0 0
    %501 = vmatpush1.bf16.msra.mxu0 0
    %502 = vmatprep.subr.bf16.mxu0 0
    %503 = vmatpush1.bf16.msra.mxu0 0
    %504 = vmatprep.subr.bf16.mxu0 0
    %505 = vmatpush1.bf16.msra.mxu0 0
    %506 = vmatprep.subr.bf16.mxu0 0
    %507 = vmatpush1.bf16.msra.mxu0 0
    %508 = vmatprep.subr.bf16.mxu0 0
    %509 = vmatpush1.bf16.msra.mxu0 0
    %510 = vmatprep.subr.bf16.mxu0 0
    %511 = vmatpush1.bf16.msra.mxu0 0
    %512 = vmatprep.subr.bf16.mxu0 0
    %513 = vmatpush1.bf16.msra.mxu0 0
    %514 = vmatprep.subr.bf16.mxu0 0
    %515 = vmatpush1.bf16.msra.mxu0 0
    %516 = vmatprep.subr.bf16.mxu0 0
    %517 = vmatpush1.bf16.msra.mxu0 0
    %518 = vmatprep.subr.bf16.mxu0 0
    %519 = vmatpush1.bf16.msra.mxu0 0
    %520 = vmatprep.subr.bf16.mxu0 0
    %521 = vmatpush1.bf16.msra.mxu0 0
    %522 = vmatprep.mubr.bf16.mxu0 0
    %523 = vmatmul.mubr.bf16.gmra.mrb[0].mxu0 %v479
    %v524 = vpop.f32.mrb[0].mxu0
    %v525 = vadd.f32 0.0, %v524
    %v526 = vpop.f32.mrb[0].mxu0
    %v527 = vpop.f32.mrb[0].mxu0
    %v528 = vadd.f32 0.0, %v527
    %v529 = vpop.f32.mrb[0].mxu0
    %530 = vmatprep.mubr.bf16.mxu0 0
    %531 = vmatmul.mubr.bf16.gmra.mrb[0].mxu0 %v482
    %v532 = vpop.f32.mrb[0].mxu0
    %v533 = vadd.f32 0.0, %v532
    %v534 = vpop.f32.mrb[0].mxu0
    %v535 = vpop.f32.mrb[0].mxu0
    %v536 = vadd.f32 0.0, %v535
    %v537 = vpop.f32.mrb[0].mxu0
    %538 = vmatprep.mubr.bf16.mxu0 0
    %539 = vmatmul.mubr.bf16.gmra.mrb[0].mxu0 %v485
    %v540 = vpop.f32.mrb[0].mxu0
    %v541 = vadd.f32 0.0, %v540
    %v542 = vpop.f32.mrb[0].mxu0
    %v543 = vpop.f32.mrb[0].mxu0
    %v544 = vadd.f32 0.0, %v543
    %v545 = vpop.f32.mrb[0].mxu0
    %546 = vmatprep.mubr.bf16.mxu0 0
    %547 = vmatmul.mubr.bf16.gmra.mrb[0].mxu0 %v488
    %v548 = vpop.f32.mrb[0].mxu0
    %v549 = vadd.f32 0.0, %v548
    %v550 = vpop.f32.mrb[0].mxu0
    %v551 = vpop.f32.mrb[0].mxu0
    %v552 = vadd.f32 0.0, %v551
    %v553 = vpop.f32.mrb[0].mxu0
    %554 = vdwg.mxu0
    %v555 = vpack.c.bf16 %v528, %v525
    %v556 = vpack.c.bf16 %v536, %v533
    %v557 = vpack.c.bf16 %v544, %v541
    %v558 = vpack.c.bf16 %v552, %v549
    %v563 = vunpack.c.l.b16 %v416
    %v564 = vunpack.c.l.b16 %v417
    %v565 = vunpack.c.l.b16 %v418
    %v566 = vunpack.c.l.b16 %v419
    %v567 = vpack.c.b16 %v564, %v563
    %v568 = vpack.c.b16 %v566, %v565
    %v572 = vsel %vm477, %v557, 0
    %v575 = vsel %vm477, %v558, 0
    %v578 = vsel %vm477, %v555, 0
    %v581 = vsel %vm477, %v556, 0
    %583 = vmatprep.subr.bf16.mxu0 0
    %584 = vmatpush1.bf16.msra.mxu0 %v567
    %585 = vmatprep.subr.bf16.mxu0 0
    %586 = vmatpush1.bf16.msra.mxu0 %v568
    %587 = vmatprep.subr.bf16.mxu0 0
    %588 = vmatpush1.bf16.msra.mxu0 0
    %589 = vmatprep.subr.bf16.mxu0 0
    %590 = vmatpush1.bf16.msra.mxu0 0
    %591 = vmatprep.subr.bf16.mxu0 0
    %592 = vmatpush1.bf16.msra.mxu0 0
    %593 = vmatprep.subr.bf16.mxu0 0
    %594 = vmatpush1.bf16.msra.mxu0 0
    %595 = vmatprep.subr.bf16.mxu0 0
    %596 = vmatpush1.bf16.msra.mxu0 0
    %597 = vmatprep.subr.bf16.mxu0 0
    %598 = vmatpush1.bf16.msra.mxu0 0
    %599 = vmatprep.subr.bf16.mxu0 0
    %600 = vmatpush1.bf16.msra.mxu0 0
    %601 = vmatprep.subr.bf16.mxu0 0
    %602 = vmatpush1.bf16.msra.mxu0 0
    %603 = vmatprep.subr.bf16.mxu0 0
    %604 = vmatpush1.bf16.msra.mxu0 0
    %605 = vmatprep.subr.bf16.mxu0 0
    %606 = vmatpush1.bf16.msra.mxu0 0
    %607 = vmatprep.subr.bf16.mxu0 0
    %608 = vmatpush1.bf16.msra.mxu0 0
    %609 = vmatprep.subr.bf16.mxu0 0
    %610 = vmatpush1.bf16.msra.mxu0 0
    %611 = vmatprep.subr.bf16.mxu0 0
    %612 = vmatpush1.bf16.msra.mxu0 0
    %613 = vmatprep.subr.bf16.mxu0 0
    %614 = vmatpush1.bf16.msra.mxu0 0
    %615 = vmatprep.mubr.bf16.mxu0 0
    %616 = vmatmul.mubr.bf16.gmra.mrb[0].mxu0 %v572
    %v617 = vpop.f32.mrb[0].mxu0
    %v618 = vadd.f32 0.0, %v617
    %v619 = vpop.f32.mrb[0].mxu0
    %v620 = vpop.f32.mrb[0].mxu0
    %v621 = vadd.f32 0.0, %v620
    %v622 = vpop.f32.mrb[0].mxu0
    %623 = vmatprep.mubr.bf16.mxu0 0
    %624 = vmatmul.mubr.bf16.gmra.mrb[0].mxu0 %v575
    %v625 = vpop.f32.mrb[0].mxu0
    %v626 = vadd.f32 0.0, %v625
    %v627 = vpop.f32.mrb[0].mxu0
    %v628 = vpop.f32.mrb[0].mxu0
    %v629 = vadd.f32 0.0, %v628
    %v630 = vpop.f32.mrb[0].mxu0
    %631 = vmatprep.mubr.bf16.mxu0 0
    %632 = vmatmul.mubr.bf16.gmra.mrb[0].mxu0 %v578
    %v633 = vpop.f32.mrb[0].mxu0
    %v634 = vadd.f32 0.0, %v633
    %v635 = vpop.f32.mrb[0].mxu0
    %v636 = vpop.f32.mrb[0].mxu0
    %v637 = vadd.f32 0.0, %v636
    %v638 = vpop.f32.mrb[0].mxu0
    %639 = vmatprep.mubr.bf16.mxu0 0
    %640 = vmatmul.mubr.bf16.gmra.mrb[0].mxu0 %v581
    %v641 = vpop.f32.mrb[0].mxu0
    %v642 = vadd.f32 0.0, %v641
    %v643 = vpop.f32.mrb[0].mxu0
    %v644 = vpop.f32.mrb[0].mxu0
    %v645 = vadd.f32 0.0, %v644
    %v646 = vpop.f32.mrb[0].mxu0
    %647 = vdwg.mxu0
    %v652 = vunpack.c.l.b16 %v412
    %v653 = vunpack.c.l.b16 %v413
    %v654 = vunpack.c.l.b16 %v414
    %v655 = vunpack.c.l.b16 %v415
    %v656 = vpack.c.b16 %v653, %v652
    %v657 = vpack.c.b16 %v655, %v654
    %660 = vmatprep.subr.bf16.mxu0 0
    %661 = vmatpush1.bf16.msra.mxu0 %v656
    %662 = vmatprep.subr.bf16.mxu0 0
    %663 = vmatpush1.bf16.msra.mxu0 %v657
    %664 = vmatprep.subr.bf16.mxu0 0
    %665 = vmatpush1.bf16.msra.mxu0 0
    %666 = vmatprep.subr.bf16.mxu0 0
    %667 = vmatpush1.bf16.msra.mxu0 0
    %668 = vmatprep.subr.bf16.mxu0 0
    %669 = vmatpush1.bf16.msra.mxu0 0
    %670 = vmatprep.subr.bf16.mxu0 0
    %671 = vmatpush1.bf16.msra.mxu0 0
    %672 = vmatprep.subr.bf16.mxu0 0
    %673 = vmatpush1.bf16.msra.mxu0 0
    %674 = vmatprep.subr.bf16.mxu0 0
    %675 = vmatpush1.bf16.msra.mxu0 0
    %676 = vmatprep.subr.bf16.mxu0 0
    %677 = vmatpush1.bf16.msra.mxu0 0
    %678 = vmatprep.subr.bf16.mxu0 0
    %679 = vmatpush1.bf16.msra.mxu0 0
    %680 = vmatprep.subr.bf16.mxu0 0
    %681 = vmatpush1.bf16.msra.mxu0 0
    %682 = vmatprep.subr.bf16.mxu0 0
    %683 = vmatpush1.bf16.msra.mxu0 0
    %684 = vmatprep.subr.bf16.mxu0 0
    %685 = vmatpush1.bf16.msra.mxu0 0
    %686 = vmatprep.subr.bf16.mxu0 0
    %687 = vmatpush1.bf16.msra.mxu0 0
    %688 = vmatprep.subr.bf16.mxu0 0
    %689 = vmatpush1.bf16.msra.mxu0 0
    %690 = vmatprep.subr.bf16.mxu0 0
    %691 = vmatpush1.bf16.msra.mxu0 0
    %692 = vmatprep.mubr.bf16.mxu0 0
    %693 = vmatmul.mubr.bf16.gmra.mrb[0].mxu0 %v578
    %v694 = vpop.f32.mrb[0].mxu0
    %v695 = vadd.f32 %v618, %v694
    %v696 = vpop.f32.mrb[0].mxu0
    %v697 = vpop.f32.mrb[0].mxu0
    %v698 = vadd.f32 %v621, %v697
    %v699 = vpop.f32.mrb[0].mxu0
    %700 = vmatprep.mubr.bf16.mxu0 0
    %701 = vmatmul.mubr.bf16.gmra.mrb[0].mxu0 %v581
    %v702 = vpop.f32.mrb[0].mxu0
    %v703 = vadd.f32 %v626, %v702
    %v704 = vpop.f32.mrb[0].mxu0
    %v705 = vpop.f32.mrb[0].mxu0
    %v706 = vadd.f32 %v629, %v705
    %v707 = vpop.f32.mrb[0].mxu0
    %708 = vmatprep.mubr.bf16.mxu0 0
    %709 = vmatmul.mubr.bf16.gmra.mrb[0].mxu0 %v572
    %v710 = vpop.f32.mrb[0].mxu0
    %v711 = vadd.f32 %v634, %v710
    %v712 = vpop.f32.mrb[0].mxu0
    %v713 = vpop.f32.mrb[0].mxu0
    %v714 = vadd.f32 %v637, %v713
    %v715 = vpop.f32.mrb[0].mxu0
    %716 = vmatprep.mubr.bf16.mxu0 0
    %717 = vmatmul.mubr.bf16.gmra.mrb[0].mxu0 %v575
    %v718 = vpop.f32.mrb[0].mxu0
    %v719 = vadd.f32 %v642, %v718
    %v720 = vpop.f32.mrb[0].mxu0
    %v721 = vpop.f32.mrb[0].mxu0
    %v722 = vadd.f32 %v645, %v721
    %v723 = vpop.f32.mrb[0].mxu0
    %724 = vdwg.mxu0
    %v725 = vadd.f32 %v695, %v366
    %v726 = vadd.f32 %v698, %v369
    %v727 = vadd.f32 %v703, %v374
    %v728 = vadd.f32 %v706, %v377
    %v729 = vadd.f32 %v711, %v382
    %v730 = vadd.f32 %v714, %v385
    %v731 = vadd.f32 %v719, %v390
    %v732 = vadd.f32 %v722, %v393
    %v733 = vmax.f32 %v725, 0.0
    %v734 = vmax.f32 %v726, 0.0
    %v735 = vmax.f32 %v727, 0.0
    %v736 = vmax.f32 %v728, 0.0
    %v737 = vmax.f32 %v729, 0.0
    %v738 = vmax.f32 %v730, 0.0
    %v739 = vmax.f32 %v731, 0.0
    %v740 = vmax.f32 %v732, 0.0
    %v741 = vpack.c.bf16 %v734, %v733
    %v742 = vpack.c.bf16 %v736, %v735
    %v743 = vpack.c.bf16 %v738, %v737
    %v744 = vpack.c.bf16 %v740, %v739
    %v746 = vlaneseq
    %v747 = vshrl.u32 %v746, 7
    %v748 = vsub.s32 0, %v747
    %v749 = vrot.slane %v428, %v748
    %v759 = vunpack.c.l.b16 %v420
    %v760 = vunpack.c.l.b16 %v421
    %v761 = vunpack.c.l.b16 %v422
    %v762 = vunpack.c.l.b16 %v423
    %v763 = vunpack.c.l.b16 %v424
    %v764 = vunpack.c.l.b16 %v425
    %v765 = vunpack.c.l.b16 %v426
    %v766 = vunpack.c.l.b16 %v427
    %v767 = vpack.c.b16 %v760, %v759
    %v768 = vpack.c.b16 %v762, %v761
    %v769 = vpack.c.b16 %v764, %v763
    %v770 = vpack.c.b16 %v766, %v765
    %vm775 = vcmask 523264
    %v777 = vsel %vm775, %v741, 0
    %v780 = vsel %vm775, %v742, 0
    %v783 = vsel %vm775, %v743, 0
    %v786 = vsel %vm775, %v744, 0
    %788 = vmatprep.subr.bf16.mxu0 0
    %789 = vmatpush1.bf16.msra.mxu0 %v767
    %790 = vmatprep.subr.bf16.mxu0 0
    %791 = vmatpush1.bf16.msra.mxu0 %v768
    %792 = vmatprep.subr.bf16.mxu0 0
    %793 = vmatpush1.bf16.msra.mxu0 %v769
    %794 = vmatprep.subr.bf16.mxu0 0
    %795 = vmatpush1.bf16.msra.mxu0 %v770
    %796 = vmatprep.subr.bf16.mxu0 0
    %797 = vmatpush1.bf16.msra.mxu0 0
    %798 = vmatprep.subr.bf16.mxu0 0
    %799 = vmatpush1.bf16.msra.mxu0 0
    %800 = vmatprep.subr.bf16.mxu0 0
    %801 = vmatpush1.bf16.msra.mxu0 0
    %802 = vmatprep.subr.bf16.mxu0 0
    %803 = vmatpush1.bf16.msra.mxu0 0
    %804 = vmatprep.subr.bf16.mxu0 0
    %805 = vmatpush1.bf16.msra.mxu0 0
    %806 = vmatprep.subr.bf16.mxu0 0
    %807 = vmatpush1.bf16.msra.mxu0 0
    %808 = vmatprep.subr.bf16.mxu0 0
    %809 = vmatpush1.bf16.msra.mxu0 0
    %810 = vmatprep.subr.bf16.mxu0 0
    %811 = vmatpush1.bf16.msra.mxu0 0
    %812 = vmatprep.subr.bf16.mxu0 0
    %813 = vmatpush1.bf16.msra.mxu0 0
    %814 = vmatprep.subr.bf16.mxu0 0
    %815 = vmatpush1.bf16.msra.mxu0 0
    %816 = vmatprep.subr.bf16.mxu0 0
    %817 = vmatpush1.bf16.msra.mxu0 0
    %818 = vmatprep.subr.bf16.mxu0 0
    %819 = vmatpush1.bf16.msra.mxu0 0
    %820 = vmatprep.mubr.bf16.mxu0 0
    %821 = vmatmul.mubr.bf16.gmra.mrb[0].mxu0 %v777
    %v822 = vpop.f32.mrb[0].mxu0
    %v823 = vadd.f32 %v749, %v822
    %v824 = vpop.f32.mrb[0].mxu0
    %v825 = vpop.f32.mrb[0].mxu0
    %v826 = vadd.f32 %v749, %v825
    %v827 = vpop.f32.mrb[0].mxu0
    %828 = vmatprep.mubr.bf16.mxu0 0
    %829 = vmatmul.mubr.bf16.gmra.mrb[0].mxu0 %v780
    %v830 = vpop.f32.mrb[0].mxu0
    %v831 = vadd.f32 %v749, %v830
    %v832 = vpop.f32.mrb[0].mxu0
    %v833 = vpop.f32.mrb[0].mxu0
    %v834 = vadd.f32 %v749, %v833
    %v835 = vpop.f32.mrb[0].mxu0
    %836 = vmatprep.mubr.bf16.mxu0 0
    %837 = vmatmul.mubr.bf16.gmra.mrb[0].mxu0 %v783
    %v838 = vpop.f32.mrb[0].mxu0
    %v839 = vadd.f32 %v749, %v838
    %v840 = vpop.f32.mrb[0].mxu0
    %v841 = vpop.f32.mrb[0].mxu0
    %v842 = vadd.f32 %v749, %v841
    %v843 = vpop.f32.mrb[0].mxu0
    %844 = vmatprep.mubr.bf16.mxu0 0
    %845 = vmatmul.mubr.bf16.gmra.mrb[0].mxu0 %v786
    %v846 = vpop.f32.mrb[0].mxu0
    %v847 = vadd.f32 %v749, %v846
    %v848 = vpop.f32.mrb[0].mxu0
    %v849 = vpop.f32.mrb[0].mxu0
    %v850 = vadd.f32 %v749, %v849
    %v851 = vpop.f32.mrb[0].mxu0
    %852 = vdwg.mxu0
    %v853 = vpack.c.bf16 %v826, %v823
    %v854 = vpack.c.bf16 %v834, %v831
    %v855 = vpack.c.bf16 %v842, %v839
    %v856 = vpack.c.bf16 %v850, %v847
    %v861 = vunpack.c.l.b16 %v404
    %v862 = vunpack.c.l.b16 %v405
    %v863 = vunpack.c.l.b16 %v406
    %v864 = vunpack.c.l.b16 %v407
    %v865 = vpack.c.b16 %v862, %v861
    %v866 = vpack.c.b16 %v864, %v863
    %v868 = vsel %vm775, %v865, 0
    %v871 = vsel %vm775, %v866, 0
    %873 = vmatprep.subr.bf16.mxu0 0
    %874 = vmatpush1.bf16.msra.mxu0 %v853
    %875 = vmatprep.subr.bf16.mxu0 0
    %876 = vmatpush1.bf16.msra.mxu0 %v854
    %877 = vmatprep.subr.bf16.mxu0 0
    %878 = vmatpush1.bf16.msra.mxu0 %v855
    %879 = vmatprep.subr.bf16.mxu0 0
    %880 = vmatpush1.bf16.msra.mxu0 %v856
    %881 = vmatprep.subr.bf16.mxu0 0
    %882 = vmatpush1.bf16.msra.mxu0 0
    %883 = vmatprep.subr.bf16.mxu0 0
    %884 = vmatpush1.bf16.msra.mxu0 0
    %885 = vmatprep.subr.bf16.mxu0 0
    %886 = vmatpush1.bf16.msra.mxu0 0
    %887 = vmatprep.subr.bf16.mxu0 0
    %888 = vmatpush1.bf16.msra.mxu0 0
    %889 = vmatprep.subr.bf16.mxu0 0
    %890 = vmatpush1.bf16.msra.mxu0 0
    %891 = vmatprep.subr.bf16.mxu0 0
    %892 = vmatpush1.bf16.msra.mxu0 0
    %893 = vmatprep.subr.bf16.mxu0 0
    %894 = vmatpush1.bf16.msra.mxu0 0
    %895 = vmatprep.subr.bf16.mxu0 0
    %896 = vmatpush1.bf16.msra.mxu0 0
    %897 = vmatprep.subr.bf16.mxu0 0
    %898 = vmatpush1.bf16.msra.mxu0 0
    %899 = vmatprep.subr.bf16.mxu0 0
    %900 = vmatpush1.bf16.msra.mxu0 0
    %901 = vmatprep.subr.bf16.mxu0 0
    %902 = vmatpush1.bf16.msra.mxu0 0
    %903 = vmatprep.subr.bf16.mxu0 0
    %904 = vmatpush1.bf16.msra.mxu0 0
    %905 = vmatprep.mubr.bf16.mxu0 0
    %906 = vmatmul.mubr.bf16.gmra.mrb[0].mxu0 %v868
    %v907 = vpop.f32.mrb[0].mxu0
    %v908 = vadd.f32 0.0, %v907
    %v909 = vpop.f32.mrb[0].mxu0
    %v910 = vpop.f32.mrb[0].mxu0
    %v911 = vadd.f32 0.0, %v910
    %v912 = vpop.f32.mrb[0].mxu0
    %913 = vmatprep.mubr.bf16.mxu0 0
    %914 = vmatmul.mubr.bf16.gmra.mrb[0].mxu0 %v871
    %v915 = vpop.f32.mrb[0].mxu0
    %v916 = vadd.f32 0.0, %v915
    %v917 = vpop.f32.mrb[0].mxu0
    %v918 = vpop.f32.mrb[0].mxu0
    %v919 = vadd.f32 0.0, %v918
    %v920 = vpop.f32.mrb[0].mxu0
    %921 = vdwg.mxu0
    %v923 = vsel %vm477, %v455, 0
    %925 = vmatprep.subr.bf16.mxu0 0
    %926 = vmatpush1.bf16.xpose.msra.mxu0 %v923
    %927 = vmatprep.subr.bf16.mxu0 0
    %928 = vmatpush1.bf16.xpose.msra.mxu0 0
    %929 = vmatprep.subr.bf16.mxu0 0
    %930 = vmatpush1.bf16.xpose.msra.mxu0 0
    %931 = vmatprep.subr.bf16.mxu0 0
    %932 = vmatpush1.bf16.xpose.msra.mxu0 0
    %933 = vmatprep.subr.bf16.mxu0 0
    %934 = vmatpush1.bf16.xpose.msra.mxu0 0
    %935 = vmatprep.subr.bf16.mxu0 0
    %936 = vmatpush1.bf16.xpose.msra.mxu0 0
    %937 = vmatprep.subr.bf16.mxu0 0
    %938 = vmatpush1.bf16.xpose.msra.mxu0 0
    %939 = vmatprep.subr.bf16.mxu0 0
    %940 = vmatpush1.bf16.xpose.msra.mxu0 0
    %941 = vmatprep.subr.bf16.mxu0 0
    %942 = vmatpush1.bf16.xpose.msra.mxu0 0
    %943 = vmatprep.subr.bf16.mxu0 0
    %944 = vmatpush1.bf16.xpose.msra.mxu0 0
    %945 = vmatprep.subr.bf16.mxu0 0
    %946 = vmatpush1.bf16.xpose.msra.mxu0 0
    %947 = vmatprep.subr.bf16.mxu0 0
    %948 = vmatpush1.bf16.xpose.msra.mxu0 0
    %949 = vmatprep.subr.bf16.mxu0 0
    %950 = vmatpush1.bf16.xpose.msra.mxu0 0
    %951 = vmatprep.subr.bf16.mxu0 0
    %952 = vmatpush1.bf16.xpose.msra.mxu0 0
    %953 = vmatprep.subr.bf16.mxu0 0
    %954 = vmatpush1.bf16.xpose.msra.mxu0 0
    %955 = vmatprep.subr.bf16.mxu0 0
    %956 = vmatpush1.bf16.xpose.msra.mxu0 0
    %957 = vmatprep.mubr.bf16.mxu0 0
    %958 = vmatmul.mubr.bf16.gmra.mrb[0].mxu0 %v923
    %v959 = vpop.f32.mrb[0].mxu0
    %v960 = vadd.f32 %v408, %v959
    %v961 = vpop.f32.mrb[0].mxu0
    %v962 = vpop.f32.mrb[0].mxu0
    %v963 = vadd.f32 %v409, %v962
    %v964 = vpop.f32.mrb[0].mxu0
    %965 = vdwg.mxu0
    %v967 = vsel %vm477, %v456, 0
    %969 = vmatprep.subr.bf16.mxu0 0
    %970 = vmatpush1.bf16.xpose.msra.mxu0 %v967
    %971 = vmatprep.subr.bf16.mxu0 0
    %972 = vmatpush1.bf16.xpose.msra.mxu0 0
    %973 = vmatprep.subr.bf16.mxu0 0
    %974 = vmatpush1.bf16.xpose.msra.mxu0 0
    %975 = vmatprep.subr.bf16.mxu0 0
    %976 = vmatpush1.bf16.xpose.msra.mxu0 0
    %977 = vmatprep.subr.bf16.mxu0 0
    %978 = vmatpush1.bf16.xpose.msra.mxu0 0
    %979 = vmatprep.subr.bf16.mxu0 0
    %980 = vmatpush1.bf16.xpose.msra.mxu0 0
    %981 = vmatprep.subr.bf16.mxu0 0
    %982 = vmatpush1.bf16.xpose.msra.mxu0 0
    %983 = vmatprep.subr.bf16.mxu0 0
    %984 = vmatpush1.bf16.xpose.msra.mxu0 0
    %985 = vmatprep.subr.bf16.mxu0 0
    %986 = vmatpush1.bf16.xpose.msra.mxu0 0
    %987 = vmatprep.subr.bf16.mxu0 0
    %988 = vmatpush1.bf16.xpose.msra.mxu0 0
    %989 = vmatprep.subr.bf16.mxu0 0
    %990 = vmatpush1.bf16.xpose.msra.mxu0 0
    %991 = vmatprep.subr.bf16.mxu0 0
    %992 = vmatpush1.bf16.xpose.msra.mxu0 0
    %993 = vmatprep.subr.bf16.mxu0 0
    %994 = vmatpush1.bf16.xpose.msra.mxu0 0
    %995 = vmatprep.subr.bf16.mxu0 0
    %996 = vmatpush1.bf16.xpose.msra.mxu0 0
    %997 = vmatprep.subr.bf16.mxu0 0
    %998 = vmatpush1.bf16.xpose.msra.mxu0 0
    %999 = vmatprep.subr.bf16.mxu0 0
    %1000 = vmatpush1.bf16.xpose.msra.mxu0 0
    %1001 = vmatprep.mubr.bf16.mxu0 0
    %1002 = vmatmul.mubr.bf16.gmra.mrb[0].mxu0 %v967
    %v1003 = vpop.f32.mrb[0].mxu0
    %v1004 = vadd.f32 %v410, %v1003
    %v1005 = vpop.f32.mrb[0].mxu0
    %v1006 = vpop.f32.mrb[0].mxu0
    %v1007 = vadd.f32 %v411, %v1006
    %v1008 = vpop.f32.mrb[0].mxu0
    %1009 = vdwg.mxu0
    %vm1010 = vcmask 130048
    %v1011 = vsel %vm1010, %v960, -inf
    %1012 = vmax.xlane.f32.xlu0 %v1011
    %v1013 = vpop.xlane.xlu0 %1012
    %v1014 = vsel %vm1010, %v963, -inf
    %1015 = vmax.xlane.f32.xlu0 %v1014
    %v1016 = vpop.xlane.xlu0 %1015
    %v1017 = vsel %vm1010, %v1004, -inf
    %1018 = vmax.xlane.f32.xlu0 %v1017
    %v1019 = vpop.xlane.xlu0 %1018
    %v1020 = vsel %vm1010, %v1007, -inf
    %1021 = vmax.xlane.f32.xlu0 %v1020
    %v1022 = vpop.xlane.xlu0 %1021
    %v1023 = vsub.f32 %v960, %v1013
    %v1024 = vsub.f32 %v963, %v1016
    %v1025 = vsub.f32 %v1004, %v1019
    %v1026 = vsub.f32 %v1007, %v1022
    %v1027 = vmul.f32 %v1023, 1.442695
    %v1028 = vpow.pop %v1027
    %v1029 = vmul.f32 %v1024, 1.442695
    %v1030 = vpow.pop %v1029
    %v1031 = vmul.f32 %v1025, 1.442695
    %v1032 = vpow.pop %v1031
    %v1033 = vmul.f32 %v1026, 1.442695
    %v1034 = vpow.pop %v1033
    %v1035 = vsel %vm1010, %v1028, 0.0
    %1036 = vadd.xlane.f32.xlu0 %v1035
    %v1037 = vpop.xlane.xlu0 %1036
    %v1038 = vsel %vm1010, %v1030, 0.0
    %1039 = vadd.xlane.f32.xlu0 %v1038
    %v1040 = vpop.xlane.xlu0 %1039
    %v1041 = vsel %vm1010, %v1032, 0.0
    %1042 = vadd.xlane.f32.xlu0 %v1041
    %v1043 = vpop.xlane.xlu0 %1042
    %v1044 = vsel %vm1010, %v1034, 0.0
    %1045 = vadd.xlane.f32.xlu0 %v1044
    %v1046 = vpop.xlane.xlu0 %1045
    %v1047 = vrcp.pop %v1037
    %v1048 = vrcp.pop %v1040
    %v1049 = vrcp.pop %v1043
    %v1050 = vrcp.pop %v1046
    %v1051 = vmul.f32 %v1028, %v1047
    %v1052 = vmul.f32 %v1030, %v1048
    %v1053 = vmul.f32 %v1032, %v1049
    %v1054 = vmul.f32 %v1034, %v1050
    %v1055 = vpack.c.bf16 %v1052, %v1051
    %v1056 = vpack.c.bf16 %v1054, %v1053
    %v1058 = vsel %vm1010, %v1055, 0
    %1060 = vmatprep.subr.bf16.mxu0 0
    %1061 = vmatpush1.bf16.msra.mxu0 %v455
    %1062 = vmatprep.subr.bf16.mxu0 0
    %1063 = vmatpush1.bf16.msra.mxu0 0
    %1064 = vmatprep.subr.bf16.mxu0 0
    %1065 = vmatpush1.bf16.msra.mxu0 0
    %1066 = vmatprep.subr.bf16.mxu0 0
    %1067 = vmatpush1.bf16.msra.mxu0 0
    %1068 = vmatprep.subr.bf16.mxu0 0
    %1069 = vmatpush1.bf16.msra.mxu0 0
    %1070 = vmatprep.subr.bf16.mxu0 0
    %1071 = vmatpush1.bf16.msra.mxu0 0
    %1072 = vmatprep.subr.bf16.mxu0 0
    %1073 = vmatpush1.bf16.msra.mxu0 0
    %1074 = vmatprep.subr.bf16.mxu0 0
    %1075 = vmatpush1.bf16.msra.mxu0 0
    %1076 = vmatprep.subr.bf16.mxu0 0
    %1077 = vmatpush1.bf16.msra.mxu0 0
    %1078 = vmatprep.subr.bf16.mxu0 0
    %1079 = vmatpush1.bf16.msra.mxu0 0
    %1080 = vmatprep.subr.bf16.mxu0 0
    %1081 = vmatpush1.bf16.msra.mxu0 0
    %1082 = vmatprep.subr.bf16.mxu0 0
    %1083 = vmatpush1.bf16.msra.mxu0 0
    %1084 = vmatprep.subr.bf16.mxu0 0
    %1085 = vmatpush1.bf16.msra.mxu0 0
    %1086 = vmatprep.subr.bf16.mxu0 0
    %1087 = vmatpush1.bf16.msra.mxu0 0
    %1088 = vmatprep.subr.bf16.mxu0 0
    %1089 = vmatpush1.bf16.msra.mxu0 0
    %1090 = vmatprep.subr.bf16.mxu0 0
    %1091 = vmatpush1.bf16.msra.mxu0 0
    %1092 = vmatprep.mubr.bf16.mxu0 0
    %1093 = vmatmul.mubr.bf16.gmra.mrb[0].mxu0 %v1058
    %v1094 = vpop.f32.mrb[0].mxu0
    %v1095 = vadd.f32 0.0, %v1094
    %v1096 = vpop.f32.mrb[0].mxu0
    %v1097 = vpop.f32.mrb[0].mxu0
    %v1098 = vadd.f32 0.0, %v1097
    %v1099 = vpop.f32.mrb[0].mxu0
    %1100 = vdwg.mxu0
    %v1102 = vsel %vm1010, %v1056, 0
    %1104 = vmatprep.subr.bf16.mxu0 0
    %1105 = vmatpush1.bf16.msra.mxu0 %v456
    %1106 = vmatprep.subr.bf16.mxu0 0
    %1107 = vmatpush1.bf16.msra.mxu0 0
    %1108 = vmatprep.subr.bf16.mxu0 0
    %1109 = vmatpush1.bf16.msra.mxu0 0
    %1110 = vmatprep.subr.bf16.mxu0 0
    %1111 = vmatpush1.bf16.msra.mxu0 0
    %1112 = vmatprep.subr.bf16.mxu0 0
    %1113 = vmatpush1.bf16.msra.mxu0 0
    %1114 = vmatprep.subr.bf16.mxu0 0
    %1115 = vmatpush1.bf16.msra.mxu0 0
    %1116 = vmatprep.subr.bf16.mxu0 0
    %1117 = vmatpush1.bf16.msra.mxu0 0
    %1118 = vmatprep.subr.bf16.mxu0 0
    %1119 = vmatpush1.bf16.msra.mxu0 0
    %1120 = vmatprep.subr.bf16.mxu0 0
    %1121 = vmatpush1.bf16.msra.mxu0 0
    %1122 = vmatprep.subr.bf16.mxu0 0
    %1123 = vmatpush1.bf16.msra.mxu0 0
    %1124 = vmatprep.subr.bf16.mxu0 0
    %1125 = vmatpush1.bf16.msra.mxu0 0
    %1126 = vmatprep.subr.bf16.mxu0 0
    %1127 = vmatpush1.bf16.msra.mxu0 0
    %1128 = vmatprep.subr.bf16.mxu0 0
    %1129 = vmatpush1.bf16.msra.mxu0 0
    %1130 = vmatprep.subr.bf16.mxu0 0
    %1131 = vmatpush1.bf16.msra.mxu0 0
    %1132 = vmatprep.subr.bf16.mxu0 0
    %1133 = vmatpush1.bf16.msra.mxu0 0
    %1134 = vmatprep.subr.bf16.mxu0 0
    %1135 = vmatpush1.bf16.msra.mxu0 0
    %1136 = vmatprep.mubr.bf16.mxu0 0
    %1137 = vmatmul.mubr.bf16.gmra.mrb[0].mxu0 %v1102
    %v1138 = vpop.f32.mrb[0].mxu0
    %v1139 = vadd.f32 0.0, %v1138
    %v1140 = vpop.f32.mrb[0].mxu0
    %v1141 = vpop.f32.mrb[0].mxu0
    %v1142 = vadd.f32 0.0, %v1141
    %v1143 = vpop.f32.mrb[0].mxu0
    %1144 = vdwg.mxu0
    %v1145 = vpack.c.bf16 %v911, %v908
    %v1146 = vpack.c.bf16 %v919, %v916
    %v1147 = vsub.f32 %v274, %v1095
    %v1148 = vsub.f32 %v275, %v1098
    %v1149 = vsub.f32 %v276, %v1139
    %v1150 = vsub.f32 %v277, %v1142
    %v1151 = vpack.c.bf16 %v1148, %v1147
    %v1152 = vpack.c.bf16 %v1150, %v1149
    %v1157 = vunpack.c.l.b16 %v437
    %v1158 = vunpack.c.l.b16 %v438
    %v1159 = vunpack.c.l.b16 %v439
    %v1160 = vunpack.c.l.b16 %v440
    %v1161 = vpack.c.b16 %v1158, %v1157
    %v1162 = vpack.c.b16 %v1160, %v1159
    %v1166 = vsel %vm477, %v1151, 0
    %v1169 = vsel %vm477, %v1152, 0
    %1171 = vmatprep.subr.bf16.mxu0 0
    %1172 = vmatpush1.bf16.msra.mxu0 %v1161
    %1173 = vmatprep.subr.bf16.mxu0 0
    %1174 = vmatpush1.bf16.msra.mxu0 %v1162
    %1175 = vmatprep.subr.bf16.mxu0 0
    %1176 = vmatpush1.bf16.msra.mxu0 0
    %1177 = vmatprep.subr.bf16.mxu0 0
    %1178 = vmatpush1.bf16.msra.mxu0 0
    %1179 = vmatprep.subr.bf16.mxu0 0
    %1180 = vmatpush1.bf16.msra.mxu0 0
    %1181 = vmatprep.subr.bf16.mxu0 0
    %1182 = vmatpush1.bf16.msra.mxu0 0
    %1183 = vmatprep.subr.bf16.mxu0 0
    %1184 = vmatpush1.bf16.msra.mxu0 0
    %1185 = vmatprep.subr.bf16.mxu0 0
    %1186 = vmatpush1.bf16.msra.mxu0 0
    %1187 = vmatprep.subr.bf16.mxu0 0
    %1188 = vmatpush1.bf16.msra.mxu0 0
    %1189 = vmatprep.subr.bf16.mxu0 0
    %1190 = vmatpush1.bf16.msra.mxu0 0
    %1191 = vmatprep.subr.bf16.mxu0 0
    %1192 = vmatpush1.bf16.msra.mxu0 0
    %1193 = vmatprep.subr.bf16.mxu0 0
    %1194 = vmatpush1.bf16.msra.mxu0 0
    %1195 = vmatprep.subr.bf16.mxu0 0
    %1196 = vmatpush1.bf16.msra.mxu0 0
    %1197 = vmatprep.subr.bf16.mxu0 0
    %1198 = vmatpush1.bf16.msra.mxu0 0
    %1199 = vmatprep.subr.bf16.mxu0 0
    %1200 = vmatpush1.bf16.msra.mxu0 0
    %1201 = vmatprep.subr.bf16.mxu0 0
    %1202 = vmatpush1.bf16.msra.mxu0 0
    %1203 = vmatprep.mubr.bf16.mxu0 0
    %1204 = vmatmul.mubr.bf16.gmra.mrb[0].mxu0 %v1166
    %v1205 = vpop.f32.mrb[0].mxu0
    %v1206 = vadd.f32 0.0, %v1205
    %v1207 = vpop.f32.mrb[0].mxu0
    %v1208 = vpop.f32.mrb[0].mxu0
    %v1209 = vadd.f32 0.0, %v1208
    %v1210 = vpop.f32.mrb[0].mxu0
    %1211 = vmatprep.mubr.bf16.mxu0 0
    %1212 = vmatmul.mubr.bf16.gmra.mrb[0].mxu0 %v1169
    %v1213 = vpop.f32.mrb[0].mxu0
    %v1214 = vadd.f32 0.0, %v1213
    %v1215 = vpop.f32.mrb[0].mxu0
    %v1216 = vpop.f32.mrb[0].mxu0
    %v1217 = vadd.f32 0.0, %v1216
    %v1218 = vpop.f32.mrb[0].mxu0
    %1219 = vdwg.mxu0
    %v1228 = vunpack.c.l.b16 %v429
    %v1229 = vunpack.c.l.b16 %v430
    %v1230 = vunpack.c.l.b16 %v431
    %v1231 = vunpack.c.l.b16 %v432
    %v1232 = vunpack.c.l.b16 %v433
    %v1233 = vunpack.c.l.b16 %v434
    %v1234 = vunpack.c.l.b16 %v435
    %v1235 = vunpack.c.l.b16 %v436
    %v1236 = vpack.c.b16 %v1229, %v1228
    %v1237 = vpack.c.b16 %v1231, %v1230
    %v1238 = vpack.c.b16 %v1233, %v1232
    %v1239 = vpack.c.b16 %v1235, %v1234
    %v1245 = vsel %vm775, %v1145, 0
    %v1248 = vsel %vm775, %v1146, 0
    %1250 = vmatprep.subr.bf16.mxu0 0
    %1251 = vmatpush1.bf16.msra.mxu0 %v1236
    %1252 = vmatprep.subr.bf16.mxu0 0
    %1253 = vmatpush1.bf16.msra.mxu0 %v1237
    %1254 = vmatprep.subr.bf16.mxu0 0
    %1255 = vmatpush1.bf16.msra.mxu0 %v1238
    %1256 = vmatprep.subr.bf16.mxu0 0
    %1257 = vmatpush1.bf16.msra.mxu0 %v1239
    %1258 = vmatprep.subr.bf16.mxu0 0
    %1259 = vmatpush1.bf16.msra.mxu0 0
    %1260 = vmatprep.subr.bf16.mxu0 0
    %1261 = vmatpush1.bf16.msra.mxu0 0
    %1262 = vmatprep.subr.bf16.mxu0 0
    %1263 = vmatpush1.bf16.msra.mxu0 0
    %1264 = vmatprep.subr.bf16.mxu0 0
    %1265 = vmatpush1.bf16.msra.mxu0 0
    %1266 = vmatprep.subr.bf16.mxu0 0
    %1267 = vmatpush1.bf16.msra.mxu0 0
    %1268 = vmatprep.subr.bf16.mxu0 0
    %1269 = vmatpush1.bf16.msra.mxu0 0
    %1270 = vmatprep.subr.bf16.mxu0 0
    %1271 = vmatpush1.bf16.msra.mxu0 0
    %1272 = vmatprep.subr.bf16.mxu0 0
    %1273 = vmatpush1.bf16.msra.mxu0 0
    %1274 = vmatprep.subr.bf16.mxu0 0
    %1275 = vmatpush1.bf16.msra.mxu0 0
    %1276 = vmatprep.subr.bf16.mxu0 0
    %1277 = vmatpush1.bf16.msra.mxu0 0
    %1278 = vmatprep.subr.bf16.mxu0 0
    %1279 = vmatpush1.bf16.msra.mxu0 0
    %1280 = vmatprep.subr.bf16.mxu0 0
    %1281 = vmatpush1.bf16.msra.mxu0 0
    %1282 = vmatprep.mubr.bf16.mxu0 0
    %1283 = vmatmul.mubr.bf16.gmra.mrb[0].mxu0 %v1245
    %v1284 = vpop.f32.mrb[0].mxu0
    %v1285 = vadd.f32 %v1206, %v1284
    %v1286 = vpop.f32.mrb[0].mxu0
    %v1287 = vpop.f32.mrb[0].mxu0
    %v1288 = vadd.f32 %v1209, %v1287
    %v1289 = vpop.f32.mrb[0].mxu0
    %1290 = vmatprep.mubr.bf16.mxu0 0
    %1291 = vmatmul.mubr.bf16.gmra.mrb[0].mxu0 %v1248
    %v1292 = vpop.f32.mrb[0].mxu0
    %v1293 = vadd.f32 %v1214, %v1292
    %v1294 = vpop.f32.mrb[0].mxu0
    %v1295 = vpop.f32.mrb[0].mxu0
    %v1296 = vadd.f32 %v1217, %v1295
    %v1297 = vpop.f32.mrb[0].mxu0
    %1298 = vdwg.mxu0
    %v1303 = vunpack.c.l.b16 %v441
    %v1304 = vunpack.c.l.b16 %v442
    %v1305 = vunpack.c.l.b16 %v443
    %v1306 = vunpack.c.l.b16 %v444
    %v1307 = vpack.c.b16 %v1304, %v1303
    %v1308 = vpack.c.b16 %v1306, %v1305
    %1311 = vmatprep.subr.bf16.mxu0 0
    %1312 = vmatpush1.bf16.msra.mxu0 %v1307
    %1313 = vmatprep.subr.bf16.mxu0 0
    %1314 = vmatpush1.bf16.msra.mxu0 %v1308
    %1315 = vmatprep.subr.bf16.mxu0 0
    %1316 = vmatpush1.bf16.msra.mxu0 0
    %1317 = vmatprep.subr.bf16.mxu0 0
    %1318 = vmatpush1.bf16.msra.mxu0 0
    %1319 = vmatprep.subr.bf16.mxu0 0
    %1320 = vmatpush1.bf16.msra.mxu0 0
    %1321 = vmatprep.subr.bf16.mxu0 0
    %1322 = vmatpush1.bf16.msra.mxu0 0
    %1323 = vmatprep.subr.bf16.mxu0 0
    %1324 = vmatpush1.bf16.msra.mxu0 0
    %1325 = vmatprep.subr.bf16.mxu0 0
    %1326 = vmatpush1.bf16.msra.mxu0 0
    %1327 = vmatprep.subr.bf16.mxu0 0
    %1328 = vmatpush1.bf16.msra.mxu0 0
    %1329 = vmatprep.subr.bf16.mxu0 0
    %1330 = vmatpush1.bf16.msra.mxu0 0
    %1331 = vmatprep.subr.bf16.mxu0 0
    %1332 = vmatpush1.bf16.msra.mxu0 0
    %1333 = vmatprep.subr.bf16.mxu0 0
    %1334 = vmatpush1.bf16.msra.mxu0 0
    %1335 = vmatprep.subr.bf16.mxu0 0
    %1336 = vmatpush1.bf16.msra.mxu0 0
    %1337 = vmatprep.subr.bf16.mxu0 0
    %1338 = vmatpush1.bf16.msra.mxu0 0
    %1339 = vmatprep.subr.bf16.mxu0 0
    %1340 = vmatpush1.bf16.msra.mxu0 0
    %1341 = vmatprep.subr.bf16.mxu0 0
    %1342 = vmatpush1.bf16.msra.mxu0 0
    %1343 = vmatprep.mubr.bf16.mxu0 0
    %1344 = vmatmul.mubr.bf16.gmra.mrb[0].mxu0 %v923
    %v1345 = vpop.f32.mrb[0].mxu0
    %v1346 = vadd.f32 0.0, %v1345
    %v1347 = vpop.f32.mrb[0].mxu0
    %v1348 = vpop.f32.mrb[0].mxu0
    %v1349 = vadd.f32 0.0, %v1348
    %v1350 = vpop.f32.mrb[0].mxu0
    %1351 = vmatprep.mubr.bf16.mxu0 0
    %1352 = vmatmul.mubr.bf16.gmra.mrb[0].mxu0 %v967
    %v1353 = vpop.f32.mrb[0].mxu0
    %v1354 = vadd.f32 0.0, %v1353
    %v1355 = vpop.f32.mrb[0].mxu0
    %v1356 = vpop.f32.mrb[0].mxu0
    %v1357 = vadd.f32 0.0, %v1356
    %v1358 = vpop.f32.mrb[0].mxu0
    %1359 = vdwg.mxu0
    %v1360 = vadd.f32 %v1285, %v1346
    %v1361 = vadd.f32 %v1288, %v1349
    %v1362 = vadd.f32 %v1293, %v1354
    %v1363 = vadd.f32 %v1296, %v1357
    %v1365 = vlaneseq
    %v1366 = vshrl.u32 %v1365, 7
    %v1367 = vsub.s32 0, %v1366
    %v1368 = vrot.slane %v445, %v1367
    %v1370 = vadd.f32 %v1360, %v1368
    %v1371 = vadd.f32 %v1361, %v1368
    %v1372 = vadd.f32 %v1362, %v1368
    %v1373 = vadd.f32 %v1363, %v1368
    %v1374 = vmax.f32 %v1370, 0.0
    %v1375 = vmax.f32 %v1371, 0.0
    %v1376 = vmax.f32 %v1372, 0.0
    %v1377 = vmax.f32 %v1373, 0.0
    %v1378 = vpack.c.bf16 %v1375, %v1374
    %v1379 = vpack.c.bf16 %v1377, %v1376
    %v1381 = vlaneseq
    %v1382 = vshrl.u32 %v1381, 7
    %v1383 = vsub.s32 0, %v1382
    %v1384 = vrot.slane %v454, %v1383
    %v1394 = vunpack.c.l.b16 %v446
    %v1395 = vunpack.c.l.b16 %v447
    %v1396 = vunpack.c.l.b16 %v448
    %v1397 = vunpack.c.l.b16 %v449
    %v1398 = vunpack.c.l.b16 %v450
    %v1399 = vunpack.c.l.b16 %v451
    %v1400 = vunpack.c.l.b16 %v452
    %v1401 = vunpack.c.l.b16 %v453
    %v1402 = vpack.c.b16 %v1395, %v1394
    %v1403 = vpack.c.b16 %v1397, %v1396
    %v1404 = vpack.c.b16 %v1399, %v1398
    %v1405 = vpack.c.b16 %v1401, %v1400
    %v1411 = vsel %vm775, %v1378, 0
    %v1414 = vsel %vm775, %v1379, 0
    %1416 = vmatprep.subr.bf16.mxu0 0
    %1417 = vmatpush1.bf16.msra.mxu0 %v1402
    %1418 = vmatprep.subr.bf16.mxu0 0
    %1419 = vmatpush1.bf16.msra.mxu0 %v1403
    %1420 = vmatprep.subr.bf16.mxu0 0
    %1421 = vmatpush1.bf16.msra.mxu0 %v1404
    %1422 = vmatprep.subr.bf16.mxu0 0
    %1423 = vmatpush1.bf16.msra.mxu0 %v1405
    %1424 = vmatprep.subr.bf16.mxu0 0
    %1425 = vmatpush1.bf16.msra.mxu0 0
    %1426 = vmatprep.subr.bf16.mxu0 0
    %1427 = vmatpush1.bf16.msra.mxu0 0
    %1428 = vmatprep.subr.bf16.mxu0 0
    %1429 = vmatpush1.bf16.msra.mxu0 0
    %1430 = vmatprep.subr.bf16.mxu0 0
    %1431 = vmatpush1.bf16.msra.mxu0 0
    %1432 = vmatprep.subr.bf16.mxu0 0
    %1433 = vmatpush1.bf16.msra.mxu0 0
    %1434 = vmatprep.subr.bf16.mxu0 0
    %1435 = vmatpush1.bf16.msra.mxu0 0
    %1436 = vmatprep.subr.bf16.mxu0 0
    %1437 = vmatpush1.bf16.msra.mxu0 0
    %1438 = vmatprep.subr.bf16.mxu0 0
    %1439 = vmatpush1.bf16.msra.mxu0 0
    %1440 = vmatprep.subr.bf16.mxu0 0
    %1441 = vmatpush1.bf16.msra.mxu0 0
    %1442 = vmatprep.subr.bf16.mxu0 0
    %1443 = vmatpush1.bf16.msra.mxu0 0
    %1444 = vmatprep.subr.bf16.mxu0 0
    %1445 = vmatpush1.bf16.msra.mxu0 0
    %1446 = vmatprep.subr.bf16.mxu0 0
    %1447 = vmatpush1.bf16.msra.mxu0 0
    %1448 = vmatprep.mubr.bf16.mxu0 0
    %1449 = vmatmul.mubr.bf16.gmra.mrb[0].mxu0 %v1411
    %v1450 = vpop.f32.mrb[0].mxu0
    %v1451 = vadd.f32 %v1384, %v1450
    %v1452 = vpop.f32.mrb[0].mxu0
    %v1453 = vpop.f32.mrb[0].mxu0
    %v1454 = vadd.f32 %v1384, %v1453
    %v1455 = vpop.f32.mrb[0].mxu0
    %1456 = vmatprep.mubr.bf16.mxu0 0
    %1457 = vmatmul.mubr.bf16.gmra.mrb[0].mxu0 %v1414
    %v1458 = vpop.f32.mrb[0].mxu0
    %v1459 = vadd.f32 %v1384, %v1458
    %v1460 = vpop.f32.mrb[0].mxu0
    %v1461 = vpop.f32.mrb[0].mxu0
    %v1462 = vadd.f32 %v1384, %v1461
    %v1463 = vpop.f32.mrb[0].mxu0
    %1464 = vdwg.mxu0
    %v1465 = vadd.f32 %v274, %v1451
    %v1466 = vadd.f32 %v275, %v1454
    %v1467 = vadd.f32 %v276, %v1459
    %v1468 = vadd.f32 %v277, %v1462
    %v1469 = vmul.f32 %v1465, %v175
    %v1470 = vmul.f32 %v1466, %v180
    %v1471 = vmul.f32 %v1467, %v185
    %v1472 = vmul.f32 %v1468, %v190
    %v1473 = vpack.c.bf16 %v1470, %v1469
    %v1474 = vpack.c.bf16 %v1472, %v1471
    %1475 = vmatprep.subr.bf16.mxu0 0
    %1476 = vmatpush1.bf16.msra.mxu0 %v1473
    %1477 = vmatprep.subr.bf16.mxu0 0
    %1478 = vmatpush1.bf16.msra.mxu0 %v1474
    %1479 = vmatprep.subr.bf16.mxu0 0
    %1480 = vmatpush1.bf16.msra.mxu0 0
    %1481 = vmatprep.subr.bf16.mxu0 0
    %1482 = vmatpush1.bf16.msra.mxu0 0
    %1483 = vmatprep.subr.bf16.mxu0 0
    %1484 = vmatpush1.bf16.msra.mxu0 0
    %1485 = vmatprep.subr.bf16.mxu0 0
    %1486 = vmatpush1.bf16.msra.mxu0 0
    %1487 = vmatprep.subr.bf16.mxu0 0
    %1488 = vmatpush1.bf16.msra.mxu0 0
    %1489 = vmatprep.subr.bf16.mxu0 0
    %1490 = vmatpush1.bf16.msra.mxu0 0
    %1491 = vmatprep.subr.bf16.mxu0 0
    %1492 = vmatpush1.bf16.msra.mxu0 0
    %1493 = vmatprep.subr.bf16.mxu0 0
    %1494 = vmatpush1.bf16.msra.mxu0 0
    %1495 = vmatprep.subr.bf16.mxu0 0
    %1496 = vmatpush1.bf16.msra.mxu0 0
    %1497 = vmatprep.subr.bf16.mxu0 0
    %1498 = vmatpush1.bf16.msra.mxu0 0
    %1499 = vmatprep.subr.bf16.mxu0 0
    %1500 = vmatpush1.bf16.msra.mxu0 0
    %1501 = vmatprep.subr.bf16.mxu0 0
    %1502 = vmatpush1.bf16.msra.mxu0 0
    %1503 = vmatprep.subr.bf16.mxu0 0
    %1504 = vmatpush1.bf16.msra.mxu0 0
    %1505 = vmatprep.subr.bf16.mxu0 0
    %1506 = vmatpush1.bf16.msra.mxu0 0
    %1507 = vmatprep.mubr.bf16.mxu0 0
    %1508 = vmatmul.mubr.bf16.gmra.mrb[0].mxu0 %v479
    %v1509 = vpop.f32.mrb[0].mxu0
    %v1510 = vadd.f32 0.0, %v1509
    %v1511 = vpop.f32.mrb[0].mxu0
    %v1512 = vpop.f32.mrb[0].mxu0
    %v1513 = vadd.f32 0.0, %v1512
    %v1514 = vpop.f32.mrb[0].mxu0
    %1515 = vmatprep.mubr.bf16.mxu0 0
    %1516 = vmatmul.mubr.bf16.gmra.mrb[0].mxu0 %v482
    %v1517 = vpop.f32.mrb[0].mxu0
    %v1518 = vadd.f32 0.0, %v1517
    %v1519 = vpop.f32.mrb[0].mxu0
    %v1520 = vpop.f32.mrb[0].mxu0
    %v1521 = vadd.f32 0.0, %v1520
    %v1522 = vpop.f32.mrb[0].mxu0
    %1523 = vmatprep.mubr.bf16.mxu0 0
    %1524 = vmatmul.mubr.bf16.gmra.mrb[0].mxu0 %v485
    %v1525 = vpop.f32.mrb[0].mxu0
    %v1526 = vadd.f32 0.0, %v1525
    %v1527 = vpop.f32.mrb[0].mxu0
    %v1528 = vpop.f32.mrb[0].mxu0
    %v1529 = vadd.f32 0.0, %v1528
    %v1530 = vpop.f32.mrb[0].mxu0
    %1531 = vmatprep.mubr.bf16.mxu0 0
    %1532 = vmatmul.mubr.bf16.gmra.mrb[0].mxu0 %v488
    %v1533 = vpop.f32.mrb[0].mxu0
    %v1534 = vadd.f32 0.0, %v1533
    %v1535 = vpop.f32.mrb[0].mxu0
    %v1536 = vpop.f32.mrb[0].mxu0
    %v1537 = vadd.f32 0.0, %v1536
    %v1538 = vpop.f32.mrb[0].mxu0
    %1539 = vdwg.mxu0
    %v1540 = vpack.c.bf16 %v1513, %v1510
    %v1541 = vpack.c.bf16 %v1521, %v1518
    %v1542 = vpack.c.bf16 %v1529, %v1526
    %v1543 = vpack.c.bf16 %v1537, %v1534
    %v1545 = vsel %vm477, %v1542, 0
    %v1548 = vsel %vm477, %v1543, 0
    %v1551 = vsel %vm477, %v1540, 0
    %v1554 = vsel %vm477, %v1541, 0
    %1556 = vmatprep.subr.bf16.mxu0 0
    %1557 = vmatpush1.bf16.msra.mxu0 %v567
    %1558 = vmatprep.subr.bf16.mxu0 0
    %1559 = vmatpush1.bf16.msra.mxu0 %v568
    %1560 = vmatprep.subr.bf16.mxu0 0
    %1561 = vmatpush1.bf16.msra.mxu0 0
    %1562 = vmatprep.subr.bf16.mxu0 0
    %1563 = vmatpush1.bf16.msra.mxu0 0
    %1564 = vmatprep.subr.bf16.mxu0 0
    %1565 = vmatpush1.bf16.msra.mxu0 0
    %1566 = vmatprep.subr.bf16.mxu0 0
    %1567 = vmatpush1.bf16.msra.mxu0 0
    %1568 = vmatprep.subr.bf16.mxu0 0
    %1569 = vmatpush1.bf16.msra.mxu0 0
    %1570 = vmatprep.subr.bf16.mxu0 0
    %1571 = vmatpush1.bf16.msra.mxu0 0
    %1572 = vmatprep.subr.bf16.mxu0 0
    %1573 = vmatpush1.bf16.msra.mxu0 0
    %1574 = vmatprep.subr.bf16.mxu0 0
    %1575 = vmatpush1.bf16.msra.mxu0 0
    %1576 = vmatprep.subr.bf16.mxu0 0
    %1577 = vmatpush1.bf16.msra.mxu0 0
    %1578 = vmatprep.subr.bf16.mxu0 0
    %1579 = vmatpush1.bf16.msra.mxu0 0
    %1580 = vmatprep.subr.bf16.mxu0 0
    %1581 = vmatpush1.bf16.msra.mxu0 0
    %1582 = vmatprep.subr.bf16.mxu0 0
    %1583 = vmatpush1.bf16.msra.mxu0 0
    %1584 = vmatprep.subr.bf16.mxu0 0
    %1585 = vmatpush1.bf16.msra.mxu0 0
    %1586 = vmatprep.subr.bf16.mxu0 0
    %1587 = vmatpush1.bf16.msra.mxu0 0
    %1588 = vmatprep.mubr.bf16.mxu0 0
    %1589 = vmatmul.mubr.bf16.gmra.mrb[0].mxu0 %v1545
    %v1590 = vpop.f32.mrb[0].mxu0
    %v1591 = vadd.f32 0.0, %v1590
    %v1592 = vpop.f32.mrb[0].mxu0
    %v1593 = vpop.f32.mrb[0].mxu0
    %v1594 = vadd.f32 0.0, %v1593
    %v1595 = vpop.f32.mrb[0].mxu0
    %1596 = vmatprep.mubr.bf16.mxu0 0
    %1597 = vmatmul.mubr.bf16.gmra.mrb[0].mxu0 %v1548
    %v1598 = vpop.f32.mrb[0].mxu0
    %v1599 = vadd.f32 0.0, %v1598
    %v1600 = vpop.f32.mrb[0].mxu0
    %v1601 = vpop.f32.mrb[0].mxu0
    %v1602 = vadd.f32 0.0, %v1601
    %v1603 = vpop.f32.mrb[0].mxu0
    %1604 = vmatprep.mubr.bf16.mxu0 0
    %1605 = vmatmul.mubr.bf16.gmra.mrb[0].mxu0 %v1551
    %v1606 = vpop.f32.mrb[0].mxu0
    %v1607 = vadd.f32 0.0, %v1606
    %v1608 = vpop.f32.mrb[0].mxu0
    %v1609 = vpop.f32.mrb[0].mxu0
    %v1610 = vadd.f32 0.0, %v1609
    %v1611 = vpop.f32.mrb[0].mxu0
    %1612 = vmatprep.mubr.bf16.mxu0 0
    %1613 = vmatmul.mubr.bf16.gmra.mrb[0].mxu0 %v1554
    %v1614 = vpop.f32.mrb[0].mxu0
    %v1615 = vadd.f32 0.0, %v1614
    %v1616 = vpop.f32.mrb[0].mxu0
    %v1617 = vpop.f32.mrb[0].mxu0
    %v1618 = vadd.f32 0.0, %v1617
    %v1619 = vpop.f32.mrb[0].mxu0
    %1620 = vdwg.mxu0
    %1621 = vmatprep.subr.bf16.mxu0 0
    %1622 = vmatpush1.bf16.msra.mxu0 %v656
    %1623 = vmatprep.subr.bf16.mxu0 0
    %1624 = vmatpush1.bf16.msra.mxu0 %v657
    %1625 = vmatprep.subr.bf16.mxu0 0
    %1626 = vmatpush1.bf16.msra.mxu0 0
    %1627 = vmatprep.subr.bf16.mxu0 0
    %1628 = vmatpush1.bf16.msra.mxu0 0
    %1629 = vmatprep.subr.bf16.mxu0 0
    %1630 = vmatpush1.bf16.msra.mxu0 0
    %1631 = vmatprep.subr.bf16.mxu0 0
    %1632 = vmatpush1.bf16.msra.mxu0 0
    %1633 = vmatprep.subr.bf16.mxu0 0
    %1634 = vmatpush1.bf16.msra.mxu0 0
    %1635 = vmatprep.subr.bf16.mxu0 0
    %1636 = vmatpush1.bf16.msra.mxu0 0
    %1637 = vmatprep.subr.bf16.mxu0 0
    %1638 = vmatpush1.bf16.msra.mxu0 0
    %1639 = vmatprep.subr.bf16.mxu0 0
    %1640 = vmatpush1.bf16.msra.mxu0 0
    %1641 = vmatprep.subr.bf16.mxu0 0
    %1642 = vmatpush1.bf16.msra.mxu0 0
    %1643 = vmatprep.subr.bf16.mxu0 0
    %1644 = vmatpush1.bf16.msra.mxu0 0
    %1645 = vmatprep.subr.bf16.mxu0 0
    %1646 = vmatpush1.bf16.msra.mxu0 0
    %1647 = vmatprep.subr.bf16.mxu0 0
    %1648 = vmatpush1.bf16.msra.mxu0 0
    %1649 = vmatprep.subr.bf16.mxu0 0
    %1650 = vmatpush1.bf16.msra.mxu0 0
    %1651 = vmatprep.subr.bf16.mxu0 0
    %1652 = vmatpush1.bf16.msra.mxu0 0
    %1653 = vmatprep.mubr.bf16.mxu0 0
    %1654 = vmatmul.mubr.bf16.gmra.mrb[0].mxu0 %v1551
    %v1655 = vpop.f32.mrb[0].mxu0
    %v1656 = vadd.f32 %v1591, %v1655
    %v1657 = vpop.f32.mrb[0].mxu0
    %v1658 = vpop.f32.mrb[0].mxu0
    %v1659 = vadd.f32 %v1594, %v1658
    %v1660 = vpop.f32.mrb[0].mxu0
    %1661 = vmatprep.mubr.bf16.mxu0 0
    %1662 = vmatmul.mubr.bf16.gmra.mrb[0].mxu0 %v1554
    %v1663 = vpop.f32.mrb[0].mxu0
    %v1664 = vadd.f32 %v1599, %v1663
    %v1665 = vpop.f32.mrb[0].mxu0
    %v1666 = vpop.f32.mrb[0].mxu0
    %v1667 = vadd.f32 %v1602, %v1666
    %v1668 = vpop.f32.mrb[0].mxu0
    %1669 = vmatprep.mubr.bf16.mxu0 0
    %1670 = vmatmul.mubr.bf16.gmra.mrb[0].mxu0 %v1545
    %v1671 = vpop.f32.mrb[0].mxu0
    %v1672 = vadd.f32 %v1607, %v1671
    %v1673 = vpop.f32.mrb[0].mxu0
    %v1674 = vpop.f32.mrb[0].mxu0
    %v1675 = vadd.f32 %v1610, %v1674
    %v1676 = vpop.f32.mrb[0].mxu0
    %1677 = vmatprep.mubr.bf16.mxu0 0
    %1678 = vmatmul.mubr.bf16.gmra.mrb[0].mxu0 %v1548
    %v1679 = vpop.f32.mrb[0].mxu0
    %v1680 = vadd.f32 %v1615, %v1679
    %v1681 = vpop.f32.mrb[0].mxu0
    %v1682 = vpop.f32.mrb[0].mxu0
    %v1683 = vadd.f32 %v1618, %v1682
    %v1684 = vpop.f32.mrb[0].mxu0
    %1685 = vdwg.mxu0
    %v1686 = vadd.f32 %v1656, %v366
    %v1687 = vadd.f32 %v1659, %v369
    %v1688 = vadd.f32 %v1664, %v374
    %v1689 = vadd.f32 %v1667, %v377
    %v1690 = vadd.f32 %v1672, %v382
    %v1691 = vadd.f32 %v1675, %v385
    %v1692 = vadd.f32 %v1680, %v390
    %v1693 = vadd.f32 %v1683, %v393
    %v1694 = vmax.f32 %v1686, 0.0
    %v1695 = vmax.f32 %v1687, 0.0
    %v1696 = vmax.f32 %v1688, 0.0
    %v1697 = vmax.f32 %v1689, 0.0
    %v1698 = vmax.f32 %v1690, 0.0
    %v1699 = vmax.f32 %v1691, 0.0
    %v1700 = vmax.f32 %v1692, 0.0
    %v1701 = vmax.f32 %v1693, 0.0
    %v1702 = vpack.c.bf16 %v1695, %v1694
    %v1703 = vpack.c.bf16 %v1697, %v1696
    %v1704 = vpack.c.bf16 %v1699, %v1698
    %v1705 = vpack.c.bf16 %v1701, %v1700
    %v1707 = vsel %vm775, %v1702, 0
    %v1710 = vsel %vm775, %v1703, 0
    %v1713 = vsel %vm775, %v1704, 0
    %v1716 = vsel %vm775, %v1705, 0
    %1718 = vmatprep.subr.bf16.mxu0 0
    %1719 = vmatpush1.bf16.msra.mxu0 %v767
    %1720 = vmatprep.subr.bf16.mxu0 0
    %1721 = vmatpush1.bf16.msra.mxu0 %v768
    %1722 = vmatprep.subr.bf16.mxu0 0
    %1723 = vmatpush1.bf16.msra.mxu0 %v769
    %1724 = vmatprep.subr.bf16.mxu0 0
    %1725 = vmatpush1.bf16.msra.mxu0 %v770
    %1726 = vmatprep.subr.bf16.mxu0 0
    %1727 = vmatpush1.bf16.msra.mxu0 0
    %1728 = vmatprep.subr.bf16.mxu0 0
    %1729 = vmatpush1.bf16.msra.mxu0 0
    %1730 = vmatprep.subr.bf16.mxu0 0
    %1731 = vmatpush1.bf16.msra.mxu0 0
    %1732 = vmatprep.subr.bf16.mxu0 0
    %1733 = vmatpush1.bf16.msra.mxu0 0
    %1734 = vmatprep.subr.bf16.mxu0 0
    %1735 = vmatpush1.bf16.msra.mxu0 0
    %1736 = vmatprep.subr.bf16.mxu0 0
    %1737 = vmatpush1.bf16.msra.mxu0 0
    %1738 = vmatprep.subr.bf16.mxu0 0
    %1739 = vmatpush1.bf16.msra.mxu0 0
    %1740 = vmatprep.subr.bf16.mxu0 0
    %1741 = vmatpush1.bf16.msra.mxu0 0
    %1742 = vmatprep.subr.bf16.mxu0 0
    %1743 = vmatpush1.bf16.msra.mxu0 0
    %1744 = vmatprep.subr.bf16.mxu0 0
    %1745 = vmatpush1.bf16.msra.mxu0 0
    %1746 = vmatprep.subr.bf16.mxu0 0
    %1747 = vmatpush1.bf16.msra.mxu0 0
    %1748 = vmatprep.subr.bf16.mxu0 0
    %1749 = vmatpush1.bf16.msra.mxu0 0
    %1750 = vmatprep.mubr.bf16.mxu0 0
    %1751 = vmatmul.mubr.bf16.gmra.mrb[0].mxu0 %v1707
    %v1752 = vpop.f32.mrb[0].mxu0
    %v1753 = vadd.f32 %v749, %v1752
    %v1754 = vpop.f32.mrb[0].mxu0
    %v1755 = vpop.f32.mrb[0].mxu0
    %v1756 = vadd.f32 %v749, %v1755
    %v1757 = vpop.f32.mrb[0].mxu0
    %1758 = vmatprep.mubr.bf16.mxu0 0
    %1759 = vmatmul.mubr.bf16.gmra.mrb[0].mxu0 %v1710
    %v1760 = vpop.f32.mrb[0].mxu0
    %v1761 = vadd.f32 %v749, %v1760
    %v1762 = vpop.f32.mrb[0].mxu0
    %v1763 = vpop.f32.mrb[0].mxu0
    %v1764 = vadd.f32 %v749, %v1763
    %v1765 = vpop.f32.mrb[0].mxu0
    %1766 = vmatprep.mubr.bf16.mxu0 0
    %1767 = vmatmul.mubr.bf16.gmra.mrb[0].mxu0 %v1713
    %v1768 = vpop.f32.mrb[0].mxu0
    %v1769 = vadd.f32 %v749, %v1768
    %v1770 = vpop.f32.mrb[0].mxu0
    %v1771 = vpop.f32.mrb[0].mxu0
    %v1772 = vadd.f32 %v749, %v1771
    %v1773 = vpop.f32.mrb[0].mxu0
    %1774 = vmatprep.mubr.bf16.mxu0 0
    %1775 = vmatmul.mubr.bf16.gmra.mrb[0].mxu0 %v1716
    %v1776 = vpop.f32.mrb[0].mxu0
    %v1777 = vadd.f32 %v749, %v1776
    %v1778 = vpop.f32.mrb[0].mxu0
    %v1779 = vpop.f32.mrb[0].mxu0
    %v1780 = vadd.f32 %v749, %v1779
    %v1781 = vpop.f32.mrb[0].mxu0
    %1782 = vdwg.mxu0
    %v1783 = vpack.c.bf16 %v1756, %v1753
    %v1784 = vpack.c.bf16 %v1764, %v1761
    %v1785 = vpack.c.bf16 %v1772, %v1769
    %v1786 = vpack.c.bf16 %v1780, %v1777
    %1787 = vmatprep.subr.bf16.mxu0 0
    %1788 = vmatpush1.bf16.msra.mxu0 %v1783
    %1789 = vmatprep.subr.bf16.mxu0 0
    %1790 = vmatpush1.bf16.msra.mxu0 %v1784
    %1791 = vmatprep.subr.bf16.mxu0 0
    %1792 = vmatpush1.bf16.msra.mxu0 %v1785
    %1793 = vmatprep.subr.bf16.mxu0 0
    %1794 = vmatpush1.bf16.msra.mxu0 %v1786
    %1795 = vmatprep.subr.bf16.mxu0 0
    %1796 = vmatpush1.bf16.msra.mxu0 0
    %1797 = vmatprep.subr.bf16.mxu0 0
    %1798 = vmatpush1.bf16.msra.mxu0 0
    %1799 = vmatprep.subr.bf16.mxu0 0
    %1800 = vmatpush1.bf16.msra.mxu0 0
    %1801 = vmatprep.subr.bf16.mxu0 0
    %1802 = vmatpush1.bf16.msra.mxu0 0
    %1803 = vmatprep.subr.bf16.mxu0 0
    %1804 = vmatpush1.bf16.msra.mxu0 0
    %1805 = vmatprep.subr.bf16.mxu0 0
    %1806 = vmatpush1.bf16.msra.mxu0 0
    %1807 = vmatprep.subr.bf16.mxu0 0
    %1808 = vmatpush1.bf16.msra.mxu0 0
    %1809 = vmatprep.subr.bf16.mxu0 0
    %1810 = vmatpush1.bf16.msra.mxu0 0
    %1811 = vmatprep.subr.bf16.mxu0 0
    %1812 = vmatpush1.bf16.msra.mxu0 0
    %1813 = vmatprep.subr.bf16.mxu0 0
    %1814 = vmatpush1.bf16.msra.mxu0 0
    %1815 = vmatprep.subr.bf16.mxu0 0
    %1816 = vmatpush1.bf16.msra.mxu0 0
    %1817 = vmatprep.subr.bf16.mxu0 0
    %1818 = vmatpush1.bf16.msra.mxu0 0
    %1819 = vmatprep.mubr.bf16.mxu0 0
    %1820 = vmatmul.mubr.bf16.gmra.mrb[0].mxu0 %v868
    %v1821 = vpop.f32.mrb[0].mxu0
    %v1822 = vadd.f32 0.0, %v1821
    %v1823 = vpop.f32.mrb[0].mxu0
    %v1824 = vpop.f32.mrb[0].mxu0
    %v1825 = vadd.f32 0.0, %v1824
    %v1826 = vpop.f32.mrb[0].mxu0
    %1827 = vmatprep.mubr.bf16.mxu0 0
    %1828 = vmatmul.mubr.bf16.gmra.mrb[0].mxu0 %v871
    %v1829 = vpop.f32.mrb[0].mxu0
    %v1830 = vadd.f32 0.0, %v1829
    %v1831 = vpop.f32.mrb[0].mxu0
    %v1832 = vpop.f32.mrb[0].mxu0
    %v1833 = vadd.f32 0.0, %v1832
    %v1834 = vpop.f32.mrb[0].mxu0
    %1835 = vdwg.mxu0
    %v1837 = vsel %vm477, %v1473, 0
    %1839 = vmatprep.subr.bf16.mxu0 0
    %1840 = vmatpush1.bf16.xpose.msra.mxu0 %v1837
    %1841 = vmatprep.subr.bf16.mxu0 0
    %1842 = vmatpush1.bf16.xpose.msra.mxu0 0
    %1843 = vmatprep.subr.bf16.mxu0 0
    %1844 = vmatpush1.bf16.xpose.msra.mxu0 0
    %1845 = vmatprep.subr.bf16.mxu0 0
    %1846 = vmatpush1.bf16.xpose.msra.mxu0 0
    %1847 = vmatprep.subr.bf16.mxu0 0
    %1848 = vmatpush1.bf16.xpose.msra.mxu0 0
    %1849 = vmatprep.subr.bf16.mxu0 0
    %1850 = vmatpush1.bf16.xpose.msra.mxu0 0
    %1851 = vmatprep.subr.bf16.mxu0 0
    %1852 = vmatpush1.bf16.xpose.msra.mxu0 0
    %1853 = vmatprep.subr.bf16.mxu0 0
    %1854 = vmatpush1.bf16.xpose.msra.mxu0 0
    %1855 = vmatprep.subr.bf16.mxu0 0
    %1856 = vmatpush1.bf16.xpose.msra.mxu0 0
    %1857 = vmatprep.subr.bf16.mxu0 0
    %1858 = vmatpush1.bf16.xpose.msra.mxu0 0
    %1859 = vmatprep.subr.bf16.mxu0 0
    %1860 = vmatpush1.bf16.xpose.msra.mxu0 0
    %1861 = vmatprep.subr.bf16.mxu0 0
    %1862 = vmatpush1.bf16.xpose.msra.mxu0 0
    %1863 = vmatprep.subr.bf16.mxu0 0
    %1864 = vmatpush1.bf16.xpose.msra.mxu0 0
    %1865 = vmatprep.subr.bf16.mxu0 0
    %1866 = vmatpush1.bf16.xpose.msra.mxu0 0
    %1867 = vmatprep.subr.bf16.mxu0 0
    %1868 = vmatpush1.bf16.xpose.msra.mxu0 0
    %1869 = vmatprep.subr.bf16.mxu0 0
    %1870 = vmatpush1.bf16.xpose.msra.mxu0 0
    %1871 = vmatprep.mubr.bf16.mxu0 0
    %1872 = vmatmul.mubr.bf16.gmra.mrb[0].mxu0 %v1837
    %v1873 = vpop.f32.mrb[0].mxu0
    %v1874 = vadd.f32 %v408, %v1873
    %v1875 = vpop.f32.mrb[0].mxu0
    %v1876 = vpop.f32.mrb[0].mxu0
    %v1877 = vadd.f32 %v409, %v1876
    %v1878 = vpop.f32.mrb[0].mxu0
    %1879 = vdwg.mxu0
    %v1881 = vsel %vm477, %v1474, 0
    %1883 = vmatprep.subr.bf16.mxu0 0
    %1884 = vmatpush1.bf16.xpose.msra.mxu0 %v1881
    %1885 = vmatprep.subr.bf16.mxu0 0
    %1886 = vmatpush1.bf16.xpose.msra.mxu0 0
    %1887 = vmatprep.subr.bf16.mxu0 0
    %1888 = vmatpush1.bf16.xpose.msra.mxu0 0
    %1889 = vmatprep.subr.bf16.mxu0 0
    %1890 = vmatpush1.bf16.xpose.msra.mxu0 0
    %1891 = vmatprep.subr.bf16.mxu0 0
    %1892 = vmatpush1.bf16.xpose.msra.mxu0 0
    %1893 = vmatprep.subr.bf16.mxu0 0
    %1894 = vmatpush1.bf16.xpose.msra.mxu0 0
    %1895 = vmatprep.subr.bf16.mxu0 0
    %1896 = vmatpush1.bf16.xpose.msra.mxu0 0
    %1897 = vmatprep.subr.bf16.mxu0 0
    %1898 = vmatpush1.bf16.xpose.msra.mxu0 0
    %1899 = vmatprep.subr.bf16.mxu0 0
    %1900 = vmatpush1.bf16.xpose.msra.mxu0 0
    %1901 = vmatprep.subr.bf16.mxu0 0
    %1902 = vmatpush1.bf16.xpose.msra.mxu0 0
    %1903 = vmatprep.subr.bf16.mxu0 0
    %1904 = vmatpush1.bf16.xpose.msra.mxu0 0
    %1905 = vmatprep.subr.bf16.mxu0 0
    %1906 = vmatpush1.bf16.xpose.msra.mxu0 0
    %1907 = vmatprep.subr.bf16.mxu0 0
    %1908 = vmatpush1.bf16.xpose.msra.mxu0 0
    %1909 = vmatprep.subr.bf16.mxu0 0
    %1910 = vmatpush1.bf16.xpose.msra.mxu0 0
    %1911 = vmatprep.subr.bf16.mxu0 0
    %1912 = vmatpush1.bf16.xpose.msra.mxu0 0
    %1913 = vmatprep.subr.bf16.mxu0 0
    %1914 = vmatpush1.bf16.xpose.msra.mxu0 0
    %1915 = vmatprep.mubr.bf16.mxu0 0
    %1916 = vmatmul.mubr.bf16.gmra.mrb[0].mxu0 %v1881
    %v1917 = vpop.f32.mrb[0].mxu0
    %v1918 = vadd.f32 %v410, %v1917
    %v1919 = vpop.f32.mrb[0].mxu0
    %v1920 = vpop.f32.mrb[0].mxu0
    %v1921 = vadd.f32 %v411, %v1920
    %v1922 = vpop.f32.mrb[0].mxu0
    %1923 = vdwg.mxu0
    %v1924 = vsel %vm1010, %v1874, -inf
    %1925 = vmax.xlane.f32.xlu0 %v1924
    %v1926 = vpop.xlane.xlu0 %1925
    %v1927 = vsel %vm1010, %v1877, -inf
    %1928 = vmax.xlane.f32.xlu0 %v1927
    %v1929 = vpop.xlane.xlu0 %1928
    %v1930 = vsel %vm1010, %v1918, -inf
    %1931 = vmax.xlane.f32.xlu0 %v1930
    %v1932 = vpop.xlane.xlu0 %1931
    %v1933 = vsel %vm1010, %v1921, -inf
    %1934 = vmax.xlane.f32.xlu0 %v1933
    %v1935 = vpop.xlane.xlu0 %1934
    %v1936 = vsub.f32 %v1874, %v1926
    %v1937 = vsub.f32 %v1877, %v1929
    %v1938 = vsub.f32 %v1918, %v1932
    %v1939 = vsub.f32 %v1921, %v1935
    %v1940 = vmul.f32 %v1936, 1.442695
    %v1941 = vpow.pop %v1940
    %v1942 = vmul.f32 %v1937, 1.442695
    %v1943 = vpow.pop %v1942
    %v1944 = vmul.f32 %v1938, 1.442695
    %v1945 = vpow.pop %v1944
    %v1946 = vmul.f32 %v1939, 1.442695
    %v1947 = vpow.pop %v1946
    %v1948 = vsel %vm1010, %v1941, 0.0
    %1949 = vadd.xlane.f32.xlu0 %v1948
    %v1950 = vpop.xlane.xlu0 %1949
    %v1951 = vsel %vm1010, %v1943, 0.0
    %1952 = vadd.xlane.f32.xlu0 %v1951
    %v1953 = vpop.xlane.xlu0 %1952
    %v1954 = vsel %vm1010, %v1945, 0.0
    %1955 = vadd.xlane.f32.xlu0 %v1954
    %v1956 = vpop.xlane.xlu0 %1955
    %v1957 = vsel %vm1010, %v1947, 0.0
    %1958 = vadd.xlane.f32.xlu0 %v1957
    %v1959 = vpop.xlane.xlu0 %1958
    %v1960 = vrcp.pop %v1950
    %v1961 = vrcp.pop %v1953
    %v1962 = vrcp.pop %v1956
    %v1963 = vrcp.pop %v1959
    %v1964 = vmul.f32 %v1941, %v1960
    %v1965 = vmul.f32 %v1943, %v1961
    %v1966 = vmul.f32 %v1945, %v1962
    %v1967 = vmul.f32 %v1947, %v1963
    %v1968 = vpack.c.bf16 %v1965, %v1964
    %v1969 = vpack.c.bf16 %v1967, %v1966
    %v1971 = vsel %vm1010, %v1968, 0
    %1973 = vmatprep.subr.bf16.mxu0 0
    %1974 = vmatpush1.bf16.msra.mxu0 %v1473
    %1975 = vmatprep.subr.bf16.mxu0 0
    %1976 = vmatpush1.bf16.msra.mxu0 0
    %1977 = vmatprep.subr.bf16.mxu0 0
    %1978 = vmatpush1.bf16.msra.mxu0 0
    %1979 = vmatprep.subr.bf16.mxu0 0
    %1980 = vmatpush1.bf16.msra.mxu0 0
    %1981 = vmatprep.subr.bf16.mxu0 0
    %1982 = vmatpush1.bf16.msra.mxu0 0
    %1983 = vmatprep.subr.bf16.mxu0 0
    %1984 = vmatpush1.bf16.msra.mxu0 0
    %1985 = vmatprep.subr.bf16.mxu0 0
    %1986 = vmatpush1.bf16.msra.mxu0 0
    %1987 = vmatprep.subr.bf16.mxu0 0
    %1988 = vmatpush1.bf16.msra.mxu0 0
    %1989 = vmatprep.subr.bf16.mxu0 0
    %1990 = vmatpush1.bf16.msra.mxu0 0
    %1991 = vmatprep.subr.bf16.mxu0 0
    %1992 = vmatpush1.bf16.msra.mxu0 0
    %1993 = vmatprep.subr.bf16.mxu0 0
    %1994 = vmatpush1.bf16.msra.mxu0 0
    %1995 = vmatprep.subr.bf16.mxu0 0
    %1996 = vmatpush1.bf16.msra.mxu0 0
    %1997 = vmatprep.subr.bf16.mxu0 0
    %1998 = vmatpush1.bf16.msra.mxu0 0
    %1999 = vmatprep.subr.bf16.mxu0 0
    %2000 = vmatpush1.bf16.msra.mxu0 0
    %2001 = vmatprep.subr.bf16.mxu0 0
    %2002 = vmatpush1.bf16.msra.mxu0 0
    %2003 = vmatprep.subr.bf16.mxu0 0
    %2004 = vmatpush1.bf16.msra.mxu0 0
    %2005 = vmatprep.mubr.bf16.mxu0 0
    %2006 = vmatmul.mubr.bf16.gmra.mrb[0].mxu0 %v1971
    %v2007 = vpop.f32.mrb[0].mxu0
    %v2008 = vadd.f32 0.0, %v2007
    %v2009 = vpop.f32.mrb[0].mxu0
    %v2010 = vpop.f32.mrb[0].mxu0
    %v2011 = vadd.f32 0.0, %v2010
    %v2012 = vpop.f32.mrb[0].mxu0
    %2013 = vdwg.mxu0
    %v2015 = vsel %vm1010, %v1969, 0
    %2017 = vmatprep.subr.bf16.mxu0 0
    %2018 = vmatpush1.bf16.msra.mxu0 %v1474
    %2019 = vmatprep.subr.bf16.mxu0 0
    %2020 = vmatpush1.bf16.msra.mxu0 0
    %2021 = vmatprep.subr.bf16.mxu0 0
    %2022 = vmatpush1.bf16.msra.mxu0 0
    %2023 = vmatprep.subr.bf16.mxu0 0
    %2024 = vmatpush1.bf16.msra.mxu0 0
    %2025 = vmatprep.subr.bf16.mxu0 0
    %2026 = vmatpush1.bf16.msra.mxu0 0
    %2027 = vmatprep.subr.bf16.mxu0 0
    %2028 = vmatpush1.bf16.msra.mxu0 0
    %2029 = vmatprep.subr.bf16.mxu0 0
    %2030 = vmatpush1.bf16.msra.mxu0 0
    %2031 = vmatprep.subr.bf16.mxu0 0
    %2032 = vmatpush1.bf16.msra.mxu0 0
    %2033 = vmatprep.subr.bf16.mxu0 0
    %2034 = vmatpush1.bf16.msra.mxu0 0
    %2035 = vmatprep.subr.bf16.mxu0 0
    %2036 = vmatpush1.bf16.msra.mxu0 0
    %2037 = vmatprep.subr.bf16.mxu0 0
    %2038 = vmatpush1.bf16.msra.mxu0 0
    %2039 = vmatprep.subr.bf16.mxu0 0
    %2040 = vmatpush1.bf16.msra.mxu0 0
    %2041 = vmatprep.subr.bf16.mxu0 0
    %2042 = vmatpush1.bf16.msra.mxu0 0
    %2043 = vmatprep.subr.bf16.mxu0 0
    %2044 = vmatpush1.bf16.msra.mxu0 0
    %2045 = vmatprep.subr.bf16.mxu0 0
    %2046 = vmatpush1.bf16.msra.mxu0 0
    %2047 = vmatprep.subr.bf16.mxu0 0
    %2048 = vmatpush1.bf16.msra.mxu0 0
    %2049 = vmatprep.mubr.bf16.mxu0 0
    %2050 = vmatmul.mubr.bf16.gmra.mrb[0].mxu0 %v2015
    %v2051 = vpop.f32.mrb[0].mxu0
    %v2052 = vadd.f32 0.0, %v2051
    %v2053 = vpop.f32.mrb[0].mxu0
    %v2054 = vpop.f32.mrb[0].mxu0
    %v2055 = vadd.f32 0.0, %v2054
    %v2056 = vpop.f32.mrb[0].mxu0
    %2057 = vdwg.mxu0
    %v2058 = vpack.c.bf16 %v1825, %v1822
    %v2059 = vpack.c.bf16 %v1833, %v1830
    %v2060 = vsub.f32 %v1469, %v2008
    %v2061 = vsub.f32 %v1470, %v2011
    %v2062 = vsub.f32 %v1471, %v2052
    %v2063 = vsub.f32 %v1472, %v2055
    %v2064 = vpack.c.bf16 %v2061, %v2060
    %v2065 = vpack.c.bf16 %v2063, %v2062
    %v2067 = vsel %vm477, %v2064, 0
    %v2070 = vsel %vm477, %v2065, 0
    %2072 = vmatprep.subr.bf16.mxu0 0
    %2073 = vmatpush1.bf16.msra.mxu0 %v1161
    %2074 = vmatprep.subr.bf16.mxu0 0
    %2075 = vmatpush1.bf16.msra.mxu0 %v1162
    %2076 = vmatprep.subr.bf16.mxu0 0
    %2077 = vmatpush1.bf16.msra.mxu0 0
    %2078 = vmatprep.subr.bf16.mxu0 0
    %2079 = vmatpush1.bf16.msra.mxu0 0
    %2080 = vmatprep.subr.bf16.mxu0 0
    %2081 = vmatpush1.bf16.msra.mxu0 0
    %2082 = vmatprep.subr.bf16.mxu0 0
    %2083 = vmatpush1.bf16.msra.mxu0 0
    %2084 = vmatprep.subr.bf16.mxu0 0
    %2085 = vmatpush1.bf16.msra.mxu0 0
    %2086 = vmatprep.subr.bf16.mxu0 0
    %2087 = vmatpush1.bf16.msra.mxu0 0
    %2088 = vmatprep.subr.bf16.mxu0 0
    %2089 = vmatpush1.bf16.msra.mxu0 0
    %2090 = vmatprep.subr.bf16.mxu0 0
    %2091 = vmatpush1.bf16.msra.mxu0 0
    %2092 = vmatprep.subr.bf16.mxu0 0
    %2093 = vmatpush1.bf16.msra.mxu0 0
    %2094 = vmatprep.subr.bf16.mxu0 0
    %2095 = vmatpush1.bf16.msra.mxu0 0
    %2096 = vmatprep.subr.bf16.mxu0 0
    %2097 = vmatpush1.bf16.msra.mxu0 0
    %2098 = vmatprep.subr.bf16.mxu0 0
    %2099 = vmatpush1.bf16.msra.mxu0 0
    %2100 = vmatprep.subr.bf16.mxu0 0
    %2101 = vmatpush1.bf16.msra.mxu0 0
    %2102 = vmatprep.subr.bf16.mxu0 0
    %2103 = vmatpush1.bf16.msra.mxu0 0
    %2104 = vmatprep.mubr.bf16.mxu0 0
    %2105 = vmatmul.mubr.bf16.gmra.mrb[0].mxu0 %v2067
    %v2106 = vpop.f32.mrb[0].mxu0
    %v2107 = vadd.f32 0.0, %v2106
    %v2108 = vpop.f32.mrb[0].mxu0
    %v2109 = vpop.f32.mrb[0].mxu0
    %v2110 = vadd.f32 0.0, %v2109
    %v2111 = vpop.f32.mrb[0].mxu0
    %2112 = vmatprep.mubr.bf16.mxu0 0
    %2113 = vmatmul.mubr.bf16.gmra.mrb[0].mxu0 %v2070
    %v2114 = vpop.f32.mrb[0].mxu0
    %v2115 = vadd.f32 0.0, %v2114
    %v2116 = vpop.f32.mrb[0].mxu0
    %v2117 = vpop.f32.mrb[0].mxu0
    %v2118 = vadd.f32 0.0, %v2117
    %v2119 = vpop.f32.mrb[0].mxu0
    %2120 = vdwg.mxu0
    %v2122 = vsel %vm775, %v2058, 0
    %v2125 = vsel %vm775, %v2059, 0
    %2127 = vmatprep.subr.bf16.mxu0 0
    %2128 = vmatpush1.bf16.msra.mxu0 %v1236
    %2129 = vmatprep.subr.bf16.mxu0 0
    %2130 = vmatpush1.bf16.msra.mxu0 %v1237
    %2131 = vmatprep.subr.bf16.mxu0 0
    %2132 = vmatpush1.bf16.msra.mxu0 %v1238
    %2133 = vmatprep.subr.bf16.mxu0 0
    %2134 = vmatpush1.bf16.msra.mxu0 %v1239
    %2135 = vmatprep.subr.bf16.mxu0 0
    %2136 = vmatpush1.bf16.msra.mxu0 0
    %2137 = vmatprep.subr.bf16.mxu0 0
    %2138 = vmatpush1.bf16.msra.mxu0 0
    %2139 = vmatprep.subr.bf16.mxu0 0
    %2140 = vmatpush1.bf16.msra.mxu0 0
    %2141 = vmatprep.subr.bf16.mxu0 0
    %2142 = vmatpush1.bf16.msra.mxu0 0
    %2143 = vmatprep.subr.bf16.mxu0 0
    %2144 = vmatpush1.bf16.msra.mxu0 0
    %2145 = vmatprep.subr.bf16.mxu0 0
    %2146 = vmatpush1.bf16.msra.mxu0 0
    %2147 = vmatprep.subr.bf16.mxu0 0
    %2148 = vmatpush1.bf16.msra.mxu0 0
    %2149 = vmatprep.subr.bf16.mxu0 0
    %2150 = vmatpush1.bf16.msra.mxu0 0
    %2151 = vmatprep.subr.bf16.mxu0 0
    %2152 = vmatpush1.bf16.msra.mxu0 0
    %2153 = vmatprep.subr.bf16.mxu0 0
    %2154 = vmatpush1.bf16.msra.mxu0 0
    %2155 = vmatprep.subr.bf16.mxu0 0
    %2156 = vmatpush1.bf16.msra.mxu0 0
    %2157 = vmatprep.subr.bf16.mxu0 0
    %2158 = vmatpush1.bf16.msra.mxu0 0
    %2159 = vmatprep.mubr.bf16.mxu0 0
    %2160 = vmatmul.mubr.bf16.gmra.mrb[0].mxu0 %v2122
    %v2161 = vpop.f32.mrb[0].mxu0
    %v2162 = vadd.f32 %v2107, %v2161
    %v2163 = vpop.f32.mrb[0].mxu0
    %v2164 = vpop.f32.mrb[0].mxu0
    %v2165 = vadd.f32 %v2110, %v2164
    %v2166 = vpop.f32.mrb[0].mxu0
    %2167 = vmatprep.mubr.bf16.mxu0 0
    %2168 = vmatmul.mubr.bf16.gmra.mrb[0].mxu0 %v2125
    %v2169 = vpop.f32.mrb[0].mxu0
    %v2170 = vadd.f32 %v2115, %v2169
    %v2171 = vpop.f32.mrb[0].mxu0
    %v2172 = vpop.f32.mrb[0].mxu0
    %v2173 = vadd.f32 %v2118, %v2172
    %v2174 = vpop.f32.mrb[0].mxu0
    %2175 = vdwg.mxu0
    %2176 = vmatprep.subr.bf16.mxu0 0
    %2177 = vmatpush1.bf16.msra.mxu0 %v1307
    %2178 = vmatprep.subr.bf16.mxu0 0
    %2179 = vmatpush1.bf16.msra.mxu0 %v1308
    %2180 = vmatprep.subr.bf16.mxu0 0
    %2181 = vmatpush1.bf16.msra.mxu0 0
    %2182 = vmatprep.subr.bf16.mxu0 0
    %2183 = vmatpush1.bf16.msra.mxu0 0
    %2184 = vmatprep.subr.bf16.mxu0 0
    %2185 = vmatpush1.bf16.msra.mxu0 0
    %2186 = vmatprep.subr.bf16.mxu0 0
    %2187 = vmatpush1.bf16.msra.mxu0 0
    %2188 = vmatprep.subr.bf16.mxu0 0
    %2189 = vmatpush1.bf16.msra.mxu0 0
    %2190 = vmatprep.subr.bf16.mxu0 0
    %2191 = vmatpush1.bf16.msra.mxu0 0
    %2192 = vmatprep.subr.bf16.mxu0 0
    %2193 = vmatpush1.bf16.msra.mxu0 0
    %2194 = vmatprep.subr.bf16.mxu0 0
    %2195 = vmatpush1.bf16.msra.mxu0 0
    %2196 = vmatprep.subr.bf16.mxu0 0
    %2197 = vmatpush1.bf16.msra.mxu0 0
    %2198 = vmatprep.subr.bf16.mxu0 0
    %2199 = vmatpush1.bf16.msra.mxu0 0
    %2200 = vmatprep.subr.bf16.mxu0 0
    %2201 = vmatpush1.bf16.msra.mxu0 0
    %2202 = vmatprep.subr.bf16.mxu0 0
    %2203 = vmatpush1.bf16.msra.mxu0 0
    %2204 = vmatprep.subr.bf16.mxu0 0
    %2205 = vmatpush1.bf16.msra.mxu0 0
    %2206 = vmatprep.subr.bf16.mxu0 0
    %2207 = vmatpush1.bf16.msra.mxu0 0
    %2208 = vmatprep.mubr.bf16.mxu0 0
    %2209 = vmatmul.mubr.bf16.gmra.mrb[0].mxu0 %v1837
    %v2210 = vpop.f32.mrb[0].mxu0
    %v2211 = vadd.f32 0.0, %v2210
    %v2212 = vpop.f32.mrb[0].mxu0
    %v2213 = vpop.f32.mrb[0].mxu0
    %v2214 = vadd.f32 0.0, %v2213
    %v2215 = vpop.f32.mrb[0].mxu0
    %2216 = vmatprep.mubr.bf16.mxu0 0
    %2217 = vmatmul.mubr.bf16.gmra.mrb[0].mxu0 %v1881
    %v2218 = vpop.f32.mrb[0].mxu0
    %v2219 = vadd.f32 0.0, %v2218
    %v2220 = vpop.f32.mrb[0].mxu0
    %v2221 = vpop.f32.mrb[0].mxu0
    %v2222 = vadd.f32 0.0, %v2221
    %v2223 = vpop.f32.mrb[0].mxu0
    %2224 = vdwg.mxu0
    %v2225 = vadd.f32 %v2162, %v2211
    %v2226 = vadd.f32 %v2165, %v2214
    %v2227 = vadd.f32 %v2170, %v2219
    %v2228 = vadd.f32 %v2173, %v2222
    %v2229 = vadd.f32 %v2225, %v1368
    %v2230 = vadd.f32 %v2226, %v1368
    %v2231 = vadd.f32 %v2227, %v1368
    %v2232 = vadd.f32 %v2228, %v1368
    %v2233 = vmax.f32 %v2229, 0.0
    %v2234 = vmax.f32 %v2230, 0.0
    %v2235 = vmax.f32 %v2231, 0.0
    %v2236 = vmax.f32 %v2232, 0.0
    %v2237 = vpack.c.bf16 %v2234, %v2233
    %v2238 = vpack.c.bf16 %v2236, %v2235
    %v2240 = vsel %vm775, %v2237, 0
    %v2243 = vsel %vm775, %v2238, 0
    %2245 = vmatprep.subr.bf16.mxu0 0
    %2246 = vmatpush1.bf16.msra.mxu0 %v1402
    %2247 = vmatprep.subr.bf16.mxu0 0
    %2248 = vmatpush1.bf16.msra.mxu0 %v1403
    %2249 = vmatprep.subr.bf16.mxu0 0
    %2250 = vmatpush1.bf16.msra.mxu0 %v1404
    %2251 = vmatprep.subr.bf16.mxu0 0
    %2252 = vmatpush1.bf16.msra.mxu0 %v1405
    %2253 = vmatprep.subr.bf16.mxu0 0
    %2254 = vmatpush1.bf16.msra.mxu0 0
    %2255 = vmatprep.subr.bf16.mxu0 0
    %2256 = vmatpush1.bf16.msra.mxu0 0
    %2257 = vmatprep.subr.bf16.mxu0 0
    %2258 = vmatpush1.bf16.msra.mxu0 0
    %2259 = vmatprep.subr.bf16.mxu0 0
    %2260 = vmatpush1.bf16.msra.mxu0 0
    %2261 = vmatprep.subr.bf16.mxu0 0
    %2262 = vmatpush1.bf16.msra.mxu0 0
    %2263 = vmatprep.subr.bf16.mxu0 0
    %2264 = vmatpush1.bf16.msra.mxu0 0
    %2265 = vmatprep.subr.bf16.mxu0 0
    %2266 = vmatpush1.bf16.msra.mxu0 0
    %2267 = vmatprep.subr.bf16.mxu0 0
    %2268 = vmatpush1.bf16.msra.mxu0 0
    %2269 = vmatprep.subr.bf16.mxu0 0
    %2270 = vmatpush1.bf16.msra.mxu0 0
    %2271 = vmatprep.subr.bf16.mxu0 0
    %2272 = vmatpush1.bf16.msra.mxu0 0
    %2273 = vmatprep.subr.bf16.mxu0 0
    %2274 = vmatpush1.bf16.msra.mxu0 0
    %2275 = vmatprep.subr.bf16.mxu0 0
    %2276 = vmatpush1.bf16.msra.mxu0 0
    %2277 = vmatprep.mubr.bf16.mxu0 0
    %2278 = vmatmul.mubr.bf16.gmra.mrb[0].mxu0 %v2240
    %v2279 = vpop.f32.mrb[0].mxu0
    %v2280 = vadd.f32 %v1384, %v2279
    %v2281 = vpop.f32.mrb[0].mxu0
    %v2282 = vpop.f32.mrb[0].mxu0
    %v2283 = vadd.f32 %v1384, %v2282
    %v2284 = vpop.f32.mrb[0].mxu0
    %2285 = vmatprep.mubr.bf16.mxu0 0
    %2286 = vmatmul.mubr.bf16.gmra.mrb[0].mxu0 %v2243
    %v2287 = vpop.f32.mrb[0].mxu0
    %v2288 = vadd.f32 %v1384, %v2287
    %v2289 = vpop.f32.mrb[0].mxu0
    %v2290 = vpop.f32.mrb[0].mxu0
    %v2291 = vadd.f32 %v1384, %v2290
    %v2292 = vpop.f32.mrb[0].mxu0
    %2293 = vdwg.mxu0
    %v2294 = vadd.f32 %v1469, %v2280
    %v2295 = vadd.f32 %v1470, %v2283
    %v2296 = vadd.f32 %v1471, %v2288
    %v2297 = vadd.f32 %v1472, %v2291
    %v2298 = vmul.f32 %v2294, %v175
    %v2299 = vmul.f32 %v2295, %v180
    %v2300 = vmul.f32 %v2296, %v185
    %v2301 = vmul.f32 %v2297, %v190
    %v2302 = vpack.c.bf16 %v2299, %v2298
    %v2303 = vpack.c.bf16 %v2301, %v2300
    %v2304 = vld [vmem:[%s21] sm:$0xf]
    %v2305 = vld [vmem:[%s21 + $0x4] sm:$0xf]
    %v2306 = vld [vmem:[%s21 + $0x8] sm:$0xf]
    %v2307 = vld [vmem:[%s21 + $0xc] sm:$0xf]
    %v2308 = vld [vmem:[%s23] sm:$0x1]
    %v2310 = vlaneseq
    %v2311 = vshrl.u32 %v2310, 7
    %v2312 = vsub.s32 0, %v2311
    %v2313 = vrot.slane %v2308, %v2312
    %v2319 = vunpack.c.l.b16 %v2304
    %v2320 = vunpack.c.l.b16 %v2305
    %v2321 = vunpack.c.l.b16 %v2306
    %v2322 = vunpack.c.l.b16 %v2307
    %v2323 = vpack.c.b16 %v2320, %v2319
    %v2324 = vpack.c.b16 %v2322, %v2321
    %v2328 = vsel %vm477, %v2302, 0
    %v2331 = vsel %vm477, %v2303, 0
    %2333 = vmatprep.subr.bf16.mxu0 0
    %2334 = vmatpush1.bf16.msra.mxu0 %v2323
    %2335 = vmatprep.subr.bf16.mxu0 0
    %2336 = vmatpush1.bf16.msra.mxu0 %v2324
    %2337 = vmatprep.subr.bf16.mxu0 0
    %2338 = vmatpush1.bf16.msra.mxu0 0
    %2339 = vmatprep.subr.bf16.mxu0 0
    %2340 = vmatpush1.bf16.msra.mxu0 0
    %2341 = vmatprep.subr.bf16.mxu0 0
    %2342 = vmatpush1.bf16.msra.mxu0 0
    %2343 = vmatprep.subr.bf16.mxu0 0
    %2344 = vmatpush1.bf16.msra.mxu0 0
    %2345 = vmatprep.subr.bf16.mxu0 0
    %2346 = vmatpush1.bf16.msra.mxu0 0
    %2347 = vmatprep.subr.bf16.mxu0 0
    %2348 = vmatpush1.bf16.msra.mxu0 0
    %2349 = vmatprep.subr.bf16.mxu0 0
    %2350 = vmatpush1.bf16.msra.mxu0 0
    %2351 = vmatprep.subr.bf16.mxu0 0
    %2352 = vmatpush1.bf16.msra.mxu0 0
    %2353 = vmatprep.subr.bf16.mxu0 0
    %2354 = vmatpush1.bf16.msra.mxu0 0
    %2355 = vmatprep.subr.bf16.mxu0 0
    %2356 = vmatpush1.bf16.msra.mxu0 0
    %2357 = vmatprep.subr.bf16.mxu0 0
    %2358 = vmatpush1.bf16.msra.mxu0 0
    %2359 = vmatprep.subr.bf16.mxu0 0
    %2360 = vmatpush1.bf16.msra.mxu0 0
    %2361 = vmatprep.subr.bf16.mxu0 0
    %2362 = vmatpush1.bf16.msra.mxu0 0
    %2363 = vmatprep.subr.bf16.mxu0 0
    %2364 = vmatpush1.bf16.msra.mxu0 0
    %2365 = vmatprep.mubr.bf16.mxu0 0
    %2366 = vmatmul.mubr.bf16.gmra.mrb[0].mxu0 %v2328
    %v2367 = vpop.f32.mrb[0].mxu0
    %v2368 = vadd.f32 %v2313, %v2367
    %v2369 = vpop.f32.mrb[0].mxu0
    %v2370 = vpop.f32.mrb[0].mxu0
    %v2371 = vadd.f32 %v2313, %v2370
    %v2372 = vpop.f32.mrb[0].mxu0
    %2373 = vmatprep.mubr.bf16.mxu0 0
    %2374 = vmatmul.mubr.bf16.gmra.mrb[0].mxu0 %v2331
    %v2375 = vpop.f32.mrb[0].mxu0
    %v2376 = vadd.f32 %v2313, %v2375
    %v2377 = vpop.f32.mrb[0].mxu0
    %v2378 = vpop.f32.mrb[0].mxu0
    %v2379 = vadd.f32 %v2313, %v2378
    %v2380 = vpop.f32.mrb[0].mxu0
    %2381 = vdwg.mxu0
    %v2382 = vxor.u32 %v2368, 2147483648
    %v2383 = vxor.u32 %v2371, 2147483648
    %v2384 = vxor.u32 %v2376, 2147483648
    %v2385 = vxor.u32 %v2379, 2147483648
    %v2386 = vmul.f32 %v2382, 1.442695
    %v2387 = vpow.pop %v2386
    %v2388 = vmul.f32 %v2383, 1.442695
    %v2389 = vpow.pop %v2388
    %v2390 = vmul.f32 %v2384, 1.442695
    %v2391 = vpow.pop %v2390
    %v2392 = vmul.f32 %v2385, 1.442695
    %v2393 = vpow.pop %v2392
    %v2394 = vadd.f32 %v2387, 1.0
    %v2395 = vadd.f32 %v2389, 1.0
    %v2396 = vadd.f32 %v2391, 1.0
    %v2397 = vadd.f32 %v2393, 1.0
    %v2398 = vrcp.pop %v2394
    %v2399 = vmul.f32 1.0, %v2398
    %v2400 = vrcp.pop %v2395
    %v2401 = vmul.f32 1.0, %v2400
    %v2402 = vrcp.pop %v2396
    %v2403 = vmul.f32 1.0, %v2402
    %v2404 = vrcp.pop %v2397
    %v2405 = vmul.f32 1.0, %v2404
    %v2406 = vld [vmem:[#allocation13] sm:$0xf]
    %v2407 = vld [vmem:[#allocation13 + $0x4] sm:$0xf]
    %v2408 = vld [vmem:[#allocation13 + $0x8] sm:$0xf]
    %v2409 = vld [vmem:[#allocation13 + $0xc] sm:$0xf]
    %v2410 = vld [vmem:[%s24] sm:$0x1]
    %v2412 = vlaneseq
    %v2413 = vshrl.u32 %v2412, 7
    %v2414 = vsub.s32 0, %v2413
    %v2415 = vrot.slane %v2410, %v2414
    %v2421 = vunpack.c.l.b16 %v2406
    %v2422 = vunpack.c.l.b16 %v2407
    %v2423 = vunpack.c.l.b16 %v2408
    %v2424 = vunpack.c.l.b16 %v2409
    %v2425 = vpack.c.b16 %v2422, %v2421
    %v2426 = vpack.c.b16 %v2424, %v2423
    %2429 = vmatprep.subr.bf16.mxu0 0
    %2430 = vmatpush1.bf16.msra.mxu0 %v2425
    %2431 = vmatprep.subr.bf16.mxu0 0
    %2432 = vmatpush1.bf16.msra.mxu0 %v2426
    %2433 = vmatprep.subr.bf16.mxu0 0
    %2434 = vmatpush1.bf16.msra.mxu0 0
    %2435 = vmatprep.subr.bf16.mxu0 0
    %2436 = vmatpush1.bf16.msra.mxu0 0
    %2437 = vmatprep.subr.bf16.mxu0 0
    %2438 = vmatpush1.bf16.msra.mxu0 0
    %2439 = vmatprep.subr.bf16.mxu0 0
    %2440 = vmatpush1.bf16.msra.mxu0 0
    %2441 = vmatprep.subr.bf16.mxu0 0
    %2442 = vmatpush1.bf16.msra.mxu0 0
    %2443 = vmatprep.subr.bf16.mxu0 0
    %2444 = vmatpush1.bf16.msra.mxu0 0
    %2445 = vmatprep.subr.bf16.mxu0 0
    %2446 = vmatpush1.bf16.msra.mxu0 0
    %2447 = vmatprep.subr.bf16.mxu0 0
    %2448 = vmatpush1.bf16.msra.mxu0 0
    %2449 = vmatprep.subr.bf16.mxu0 0
    %2450 = vmatpush1.bf16.msra.mxu0 0
    %2451 = vmatprep.subr.bf16.mxu0 0
    %2452 = vmatpush1.bf16.msra.mxu0 0
    %2453 = vmatprep.subr.bf16.mxu0 0
    %2454 = vmatpush1.bf16.msra.mxu0 0
    %2455 = vmatprep.subr.bf16.mxu0 0
    %2456 = vmatpush1.bf16.msra.mxu0 0
    %2457 = vmatprep.subr.bf16.mxu0 0
    %2458 = vmatpush1.bf16.msra.mxu0 0
    %2459 = vmatprep.subr.bf16.mxu0 0
    %2460 = vmatpush1.bf16.msra.mxu0 0
    %2461 = vmatprep.mubr.bf16.mxu0 0
    %2462 = vmatmul.mubr.bf16.gmra.mrb[0].mxu0 %v2328
    %v2463 = vpop.f32.mrb[0].mxu0
    %v2464 = vadd.f32 %v2415, %v2463
    %v2465 = vpop.f32.mrb[0].mxu0
    %v2466 = vpop.f32.mrb[0].mxu0
    %v2467 = vadd.f32 %v2415, %v2466
    %v2468 = vpop.f32.mrb[0].mxu0
    %2469 = vmatprep.mubr.bf16.mxu0 0
    %2470 = vmatmul.mubr.bf16.gmra.mrb[0].mxu0 %v2331
    %v2471 = vpop.f32.mrb[0].mxu0
    %v2472 = vadd.f32 %v2415, %v2471
    %v2473 = vpop.f32.mrb[0].mxu0
    %v2474 = vpop.f32.mrb[0].mxu0
    %v2475 = vadd.f32 %v2415, %v2474
    %v2476 = vpop.f32.mrb[0].mxu0
    %2477 = vdwg.mxu0
    %v2478 = vmul.f32 %v2399, %v2464
    %v2479 = vmul.f32 %v2401, %v2467
    %v2480 = vmul.f32 %v2403, %v2472
    %v2481 = vmul.f32 %v2405, %v2475
    %v2482 = vld [vmem:[#allocation2] sm:$0xf]
    %v2483 = vpack.c.bf16 %v2479, %v2478
    %v2484 = vpack.c.bf16 %v2481, %v2480
    %v2486 = vsel %vm477, %v2482, 0
    %2488 = vmatprep.subr.bf16.mxu0 0
    %2489 = vmatpush1.bf16.msra.mxu0 %v2483
    %2490 = vmatprep.subr.bf16.mxu0 0
    %2491 = vmatpush1.bf16.msra.mxu0 %v2484
    %2492 = vmatprep.subr.bf16.mxu0 0
    %2493 = vmatpush1.bf16.msra.mxu0 0
    %2494 = vmatprep.subr.bf16.mxu0 0
    %2495 = vmatpush1.bf16.msra.mxu0 0
    %2496 = vmatprep.subr.bf16.mxu0 0
    %2497 = vmatpush1.bf16.msra.mxu0 0
    %2498 = vmatprep.subr.bf16.mxu0 0
    %2499 = vmatpush1.bf16.msra.mxu0 0
    %2500 = vmatprep.subr.bf16.mxu0 0
    %2501 = vmatpush1.bf16.msra.mxu0 0
    %2502 = vmatprep.subr.bf16.mxu0 0
    %2503 = vmatpush1.bf16.msra.mxu0 0
    %2504 = vmatprep.subr.bf16.mxu0 0
    %2505 = vmatpush1.bf16.msra.mxu0 0
    %2506 = vmatprep.subr.bf16.mxu0 0
    %2507 = vmatpush1.bf16.msra.mxu0 0
    %2508 = vmatprep.subr.bf16.mxu0 0
    %2509 = vmatpush1.bf16.msra.mxu0 0
    %2510 = vmatprep.subr.bf16.mxu0 0
    %2511 = vmatpush1.bf16.msra.mxu0 0
    %2512 = vmatprep.subr.bf16.mxu0 0
    %2513 = vmatpush1.bf16.msra.mxu0 0
    %2514 = vmatprep.subr.bf16.mxu0 0
    %2515 = vmatpush1.bf16.msra.mxu0 0
    %2516 = vmatprep.subr.bf16.mxu0 0
    %2517 = vmatpush1.bf16.msra.mxu0 0
    %2518 = vmatprep.subr.bf16.mxu0 0
    %2519 = vmatpush1.bf16.msra.mxu0 0
    %2520 = vmatprep.mubr.bf16.mxu0 0
    %2521 = vmatmul.mubr.bf16.gmra.mrb[0].mxu0 %v2486
    %v2522 = vpop.f32.mrb[0].mxu0
    %v2523 = vadd.f32 0.0, %v2522
    %v2524 = vpop.f32.mrb[0].mxu0
    %v2525 = vpop.f32.mrb[0].mxu0
    %v2526 = vpop.f32.mrb[0].mxu0
    %2527 = vdwg.mxu0
    %v2528 = vpack.c.bf16 %v2523, %v2523
    %v2529 = vld [vmem:[%s25] sm:$0xf]
    %v2530 = vld [vmem:[%s25 + $0x4] sm:$0xf]
    %v2531 = vld [vmem:[%s25 + $0x8] sm:$0xf]
    %v2532 = vld [vmem:[%s25 + $0xc] sm:$0xf]
    %v2533 = vld [vmem:[%s25 + $0x10] sm:$0xf]
    %v2534 = vld [vmem:[%s25 + $0x14] sm:$0xf]
    %v2535 = vld [vmem:[%s25 + $0x18] sm:$0xf]
    %v2536 = vld [vmem:[%s25 + $0x1c] sm:$0xf]
    %v2545 = vunpack.c.l.b16 %v2529
    %v2546 = vunpack.c.l.b16 %v2530
    %v2547 = vunpack.c.l.b16 %v2531
    %v2548 = vunpack.c.l.b16 %v2532
    %v2549 = vunpack.c.l.b16 %v2533
    %v2550 = vunpack.c.l.b16 %v2534
    %v2551 = vunpack.c.l.b16 %v2535
    %v2552 = vunpack.c.l.b16 %v2536
    %v2553 = vpack.c.b16 %v2546, %v2545
    %v2554 = vpack.c.b16 %v2548, %v2547
    %v2555 = vpack.c.b16 %v2550, %v2549
    %v2556 = vpack.c.b16 %v2552, %v2551
    %v2562 = vsel %vm775, %v2528, 0
    %2564 = vmatprep.subr.bf16.mxu0 0
    %2565 = vmatpush1.bf16.msra.mxu0 %v2553
    %2566 = vmatprep.subr.bf16.mxu0 0
    %2567 = vmatpush1.bf16.msra.mxu0 %v2554
    %2568 = vmatprep.subr.bf16.mxu0 0
    %2569 = vmatpush1.bf16.msra.mxu0 %v2555
    %2570 = vmatprep.subr.bf16.mxu0 0
    %2571 = vmatpush1.bf16.msra.mxu0 %v2556
    %2572 = vmatprep.subr.bf16.mxu0 0
    %2573 = vmatpush1.bf16.msra.mxu0 0
    %2574 = vmatprep.subr.bf16.mxu0 0
    %2575 = vmatpush1.bf16.msra.mxu0 0
    %2576 = vmatprep.subr.bf16.mxu0 0
    %2577 = vmatpush1.bf16.msra.mxu0 0
    %2578 = vmatprep.subr.bf16.mxu0 0
    %2579 = vmatpush1.bf16.msra.mxu0 0
    %2580 = vmatprep.subr.bf16.mxu0 0
    %2581 = vmatpush1.bf16.msra.mxu0 0
    %2582 = vmatprep.subr.bf16.mxu0 0
    %2583 = vmatpush1.bf16.msra.mxu0 0
    %2584 = vmatprep.subr.bf16.mxu0 0
    %2585 = vmatpush1.bf16.msra.mxu0 0
    %2586 = vmatprep.subr.bf16.mxu0 0
    %2587 = vmatpush1.bf16.msra.mxu0 0
    %2588 = vmatprep.subr.bf16.mxu0 0
    %2589 = vmatpush1.bf16.msra.mxu0 0
    %2590 = vmatprep.subr.bf16.mxu0 0
    %2591 = vmatpush1.bf16.msra.mxu0 0
    %2592 = vmatprep.subr.bf16.mxu0 0
    %2593 = vmatpush1.bf16.msra.mxu0 0
    %2594 = vmatprep.subr.bf16.mxu0 0
    %2595 = vmatpush1.bf16.msra.mxu0 0
    %2596 = vmatprep.mubr.bf16.mxu0 0
    %2597 = vmatmul.mubr.bf16.gmra.mrb[0].mxu0 %v2562
    %v2598 = vpop.f32.mrb[0].mxu0
    %v2599 = vadd.f32 0.0, %v2598
    %v2600 = vpop.f32.mrb[0].mxu0
    %v2601 = vpop.f32.mrb[0].mxu0
    %v2602 = vpop.f32.mrb[0].mxu0
    %2603 = vdwg.mxu0
    %v2604 = vmax.f32 %v2599, 0.0
    %v2605 = vsub.f32 0.0, %v2599
    %v2606 = vmax.f32 %v2605, 0.0
    %v2607 = vmul.f32 %v2604, %v2604
    %v2608 = vsel %vm775, %v2607, 0.0
    %2609 = vadd.xlane.f32.xlu0 %v2608
    %v2610 = vpop.xlane.xlu0 %2609
    %v2611 = vrsqrt.pop %v2610
    %v2612 = vmul.f32 %v2610, %v2611
    %vm2613 = vcmp.eq.f32.partialorder %v2610, inf
    %v2614 = vsel %vm2613, %v2610, %v2612
    %vm2615 = vcmp.eq.f32.partialorder %v2610, 0.0
    %v2616 = vand.u32 %v2610, 2147483648
    %v2617 = vsel %vm2615, %v2616, %v2614
    %v2618 = vmul.f32 %v2606, %v2606
    %v2619 = vsel %vm775, %v2618, 0.0
    %2620 = vadd.xlane.f32.xlu0 %v2619
    %v2621 = vpop.xlane.xlu0 %2620
    %v2622 = vrsqrt.pop %v2621
    %v2623 = vmul.f32 %v2621, %v2622
    %vm2624 = vcmp.eq.f32.partialorder %v2621, inf
    %v2625 = vsel %vm2624, %v2621, %v2623
    %vm2626 = vcmp.eq.f32.partialorder %v2621, 0.0
    %v2627 = vand.u32 %v2621, 2147483648
    %v2628 = vsel %vm2626, %v2627, %v2625
    %v2629 = vadd.f32 %v2617, %v2628
    %2630 = vst [vmem:[#allocation14] sm:$0xff] %v2629
    // Predicated region
    $region134: #{tpu_custom_call.1} parent=1 // pred_check
      _
    $region135: #{tpu_custom_call.1} parent=1 // pred_check_branch
      %2632 = sbr.rel (0) target = $region137
    $region136: #{tpu_custom_call.1} parent=1 // pred_region
      %s2634 = ssub.s32 128, 128
      %2635 = vsyncadd [#allocation4], %s2634
      %s2637 = sshll.u32 [#allocation14], 4
      %s2638 = int_to_ptr.vmem [resolvable:$true] %s2637
      %2640 = dma.vmem_to_hbm [thread:$0]  %s2638, 128, %s26, [#allocation4]
    $region137: #{tpu_custom_call.1} parent=1 // pred_fallthru
      _
    // Predicated region
    $region138: #{tpu_custom_call.1} parent=1 // pred_check
      _
    $region139: #{tpu_custom_call.1} parent=1 // pred_check_branch
      %2642 = sbr.rel (0) target = $region141
    $region140: #{tpu_custom_call.1} parent=1 // pred_region
      %2643 = dma.done [#allocation4], 128
    $region141: #{tpu_custom_call.1} parent=1 // pred_fallthru
      _
    %2644 = vsyncpa [#allocation3], 1
    %2645 = vsyncpa [#allocation6], 1
    %2646 = vsyncpa [#allocation9], 1
    %2647 = vsyncpa [#allocation12], 1
    %2648 = vsyncpa [#allocation4], 1

</llo_original>
